<compile_context>
chip_gen: v7x
topology: tpu7x:2x2x1
jax: 0.10.0
libtpu: 0.0.40
codegen_flags: <defaults>
</compile_context>

<pallas_src>
import functools

import jax
import jax.numpy as jnp
from jax import lax
from jax.experimental import pallas as pl
from jax.experimental.pallas import tpu as pltpu

G = 8      # strip halo rows on each side (conv chain + gradient chain + gather support, +-7)
PADR = 8   # zero rows above/below the extended strip inside the y-conv / y-grad scratch


def _round_up(x, mult):
    return (x + mult - 1) // mult * mult


def _cdiv(a, b):
    return -(-a // b)


def _nms_kernel(x_hbm, out_ref, grad_ref, xbuf, dma_sem, pad_ref, es_ref,
                *, S, H, W, m, last_loc):
    f32 = jnp.float32
    Rext = S + 2 * G
    Wp = xbuf.shape[-1]

    i = pl.program_id(0)
    first = i == 0
    last = i == pl.num_programs(0) - 1

    # ---- fetch this strip's extended window straight from the padded HBM plane ----
    r0 = i * S
    cp = pltpu.make_async_copy(x_hbm.at[pl.ds(r0, Rext), :], xbuf, dma_sem)
    cp.start()
    cp.wait()

    def xs(v, dx):
        # value at column c + dx; wrapped lanes land in the >=4 zero padding columns
        if dx == 0:
            return v
        return pltpu.roll(v, shift=(-dx) % Wp, axis=1)

    def wr(val):
        pad_ref[PADR:PADR + Rext, :] = val

    def rd(dy):
        return pad_ref[PADR + dy:PADR + dy + Rext, :]

    # zero only the halo rows of the y-conv / y-grad scratch (interior always overwritten)
    zrows = jnp.zeros((PADR, Wp), f32)
    pad_ref[0:PADR, :] = zrows
    pad_ref[PADR + Rext:PADR + Rext + PADR, :] = zrows

    # filter taps (module defaults r_first=1, r_second=4); both palindromic so the
    # [::-1, ::-1] flip in the module is a no-op.
    w1 = (0.25, 0.5, 0.25)
    w2 = tuple(c / 25.0 for c in (1.0, 2.0, 3.0, 4.0, 5.0, 4.0, 3.0, 2.0, 1.0))

    x = xbuf[...]

    # conv_1_1 (1x3 along W) then conv_1_1_t (3x1 along H), 'same' zero padding
    t = w1[0] * xs(x, -1) + w1[1] * x + w1[2] * xs(x, 1)
    wr(t)
    edge_s = w1[0] * rd(-1) + w1[1] * t + w1[2] * rd(1)

    # re-impose the true-plane zero padding before the second conv pair (masks built
    # once) and stash the smoothed edge for the gather / output stage
    row0 = i * S - G                        # global row index of extended-strip row 0
    gr_ext = row0 + lax.broadcasted_iota(jnp.int32, (Rext, Wp), 0)
    ci_ext = lax.broadcasted_iota(jnp.int32, (Rext, Wp), 1)
    valid = jnp.logical_and(jnp.logical_and(gr_ext >= 0, gr_ext < H), ci_ext < W)
    edge_s = jnp.where(valid, edge_s, 0.0)
    es_ref[...] = edge_s

    # conv_2_1 (1x9) then conv_2_1_t (9x1) -> a
    t2 = w2[0] * xs(edge_s, -4)
    for k in range(-3, 5):
        t2 = t2 + w2[k + 4] * xs(edge_s, k)
    wr(t2)
    a = w2[0] * rd(-4)
    for k in range(-3, 5):
        a = a + w2[k + 4] * (t2 if k == 0 else rd(k))

    # torch.gradient along y: central differences everywhere; the one-sided rows at the
    # true plane border are produced by patching the single pad row next to the border
    # with a linear extrapolation (first / last strip only, static row index) instead of
    # full-plane selects.
    def grad_y(v):
        wr(v)

        @pl.when(first)
        def _():
            pad_ref[PADR + G - 1:PADR + G, :] = (
                2.0 * v[G:G + 1, :] - v[G + 1:G + 2, :])

        @pl.when(last)
        def _():
            pad_ref[PADR + last_loc + 1:PADR + last_loc + 2, :] = (
                2.0 * v[last_loc:last_loc + 1, :] - v[last_loc - 1:last_loc, :])

        return 0.5 * (rd(1) - rd(-1))

    oy = grad_y(a)                      # exact on rows [G-1, G+S+1), which is all we use
    oyy = grad_y(oy)[G:G + S, :]

    # torch.gradient along x: only interior rows are ever consumed -> compute on the
    # (S, Wp) interior slices; border-column masks hoisted and shared.
    ri = lax.broadcasted_iota(jnp.int32, (S, Wp), 0)
    ci = lax.broadcasted_iota(jnp.int32, (S, Wp), 1)
    c_first = ci == 0
    c_last = ci == W - 1

    def grad_x(v):
        vp, vm = xs(v, 1), xs(v, -1)
        g = 0.5 * (vp - vm)
        g = jnp.where(c_first, vp - v, g)
        g = jnp.where(c_last, v - vm, g)
        return g

    ox = grad_x(a[G:G + S, :])
    oxx = grad_x(ox)
    oxy = grad_x(oy[G:G + S, :])

    # ori = mod(arctan(n/d), pi) with n = oyy*sign(-oxy), d = oxx + 1e-5; only
    # cos(ori)/sin(ori) are consumed:
    #   cos(ori) = sign(n*d) * |d| / sqrt(d^2+n^2),  sin(ori) = |n| / sqrt(d^2+n^2)
    # (no divide / arctan / sin / cos; the rsqrt lands on the otherwise-idle EUP slot)
    sgn_noxy = jnp.where(oxy < 0.0, 1.0, jnp.where(oxy > 0.0, -1.0, 0.0))
    nn = oyy * sgn_noxy
    dd = oxx + 1e-05
    inv = lax.rsqrt(dd * dd + nn * nn + 1e-30)
    sgn_q = jnp.where(nn * dd < 0.0, -1.0, 1.0)
    cos_arr = sgn_q * jnp.abs(dd) * inv
    sin_arr = jnp.abs(nn) * inv

    g_row = i * S + ri                  # global row index of each interior pixel
    yg = g_row.astype(f32)
    xg = ci.astype(f32)
    xmax = float(W) - 1.001
    ymax = float(H) - 1.001

    # the 6 distinct row-shifted reads of the smoothed edge the gather can ever touch
    # (offy in [-2, 2], +1 for the y0+1 corner row); all lane-aligned, loaded once.
    esy = {dy: es_ref[G + dy:G + dy + S, :] for dy in range(-2, 4)}
    zero = jnp.zeros((S, Wp), f32)

    def interp(k, dylo, dyhi, dxlo, dxhi):
        # bilinear sample of the smoothed edge at (x + k*cos, y + k*sin):
        # separable two-stage select -- rows first (sublane-shifted reads), then
        # columns (XLU rolls of the two selected row planes).
        xq = jnp.clip(k * cos_arr + xg, 0.0, xmax)
        yq = jnp.clip(k * sin_arr + yg, 0.0, ymax)
        x0 = xq.astype(jnp.int32)       # coords >= 0, so trunc == floor
        y0 = yq.astype(jnp.int32)
        fx = xq - x0.astype(f32)
        fy = yq - y0.astype(f32)
        offx = x0 - ci
        offy = y0 - g_row
        rowa = zero                     # es[y0, c]
        rowb = zero                     # es[y0 + 1, c]
        for dy in range(dylo, dyhi + 1):
            sely = offy == dy
            rowa = jnp.where(sely, esy[dy], rowa)
            rowb = jnp.where(sely, esy[dy + 1], rowb)
        rolla = {dx: xs(rowa, dx) for dx in range(dxlo, dxhi + 2)}
        rollb = {dx: xs(rowb, dx) for dx in range(dxlo, dxhi + 2)}
        v00 = zero
        v01 = zero
        v10 = zero
        v11 = zero
        for dx in range(dxlo, dxhi + 1):
            selx = offx == dx
            v00 = jnp.where(selx, rolla[dx], v00)
            v01 = jnp.where(selx, rolla[dx + 1], v01)
            v10 = jnp.where(selx, rollb[dx], v10)
            v11 = jnp.where(selx, rollb[dx + 1], v11)
        fx1 = 1.0 - fx
        return (v00 * fx1 + v01 * fx) * (1.0 - fy) + (v10 * fx1 + v11 * fx) * fy

    edge_i = esy[0]
    e = edge_i * m
    # candidate (dy, dx) ranges specialized per sampling direction; the -1 / 0 endpoints
    # come from the 0 / W-1.001 / H-1.001 border clamps.
    sup = e < interp(2, -1, 2, -2, 2)
    sup = jnp.logical_or(sup, e < interp(1, -1, 1, -1, 1))
    sup = jnp.logical_or(sup, e < interp(-2, -2, 0, -2, 2))
    sup = jnp.logical_or(sup, e < interp(-1, -1, 0, -1, 1))

    out_ref[...] = jnp.where(sup, 0.0, edge_i)
    grad_ref[...] = jnp.where(sup, 0, 1).astype(jnp.int8)


def nms_forward(edge, m=1.01, max_strip=None):
    """edge: NCHW (1, 1, H, W) float32.  Returns (out, gradient) as in PyTorch.
    # TODO(synk): `gradient` is int32 (TPU native) instead of torch's int64."""
    n, c, H, W = edge.shape
    assert n == 1 and c == 1, "NMS.interp hardcodes batch=channel=1"
    plane = edge[0, 0].astype(jnp.float32)

    # lane dim: whole W rounded up to a lane multiple with >=4 zero columns so lane
    # rolls wrap into zeros (preserves 'same' conv semantics without masking)
    Wp = _round_up(W + 4, 128)
    if max_strip is None:
        # keep one (S, Wp) f32 plane <= 1 MiB so the ~36-plane live working set of the
        # gather stage stays inside a 64 MiB (v7x) VMEM budget with headroom
        max_strip = max(32, min(256, ((1 << 18) // Wp) // 32 * 32))
    S0 = _round_up(min(max_strip, max(H, 1)), 32)     # multiple of 32: int8 grad tiles
    nst = _cdiv(H, S0)
    S = _round_up(_cdiv(H, nst), 32)
    Hs = S * nst
    Rext = S + 2 * G
    # local extended-strip row of global row H-1 inside the LAST strip (static)
    last_loc = H - 1 - (nst - 1) * S + G

    # one zero-padded plane in HBM; each strip DMAs its own overlapping Rext-row window
    # out of it inside the kernel (no host-side strip stacking / halo duplication).
    padded = jnp.zeros((Hs + 2 * G, Wp), jnp.float32).at[G:G + H, :W].set(plane)

    kernel = functools.partial(_nms_kernel, S=S, H=H, W=W, m=float(m),
                               last_loc=last_loc)

    cost = pl.CostEstimate(
        flops=int(340 * nst * Rext * Wp),
        transcendentals=int(Hs * Wp),
        bytes_accessed=int(4 * Wp * (nst * Rext + Hs) + Hs * Wp + 4 * H * W),
    )
    plane_bytes = 4 * S * Wp
    vmem_bytes = int(min(48 * 1024 * 1024,
                         max(8 * 1024 * 1024,
                             40 * plane_bytes
                             + 4 * Wp * (3 * Rext + 2 * PADR)
                             + (2 << 20))))

    out, grad = pl.pallas_call(
        kernel,
        out_shape=(jax.ShapeDtypeStruct((Hs, Wp), jnp.float32),
                   jax.ShapeDtypeStruct((Hs, Wp), jnp.int8)),
        grid=(nst,),
        in_specs=[pl.BlockSpec(memory_space=pl.ANY)],
        out_specs=(pl.BlockSpec((S, Wp), lambda i: (i, 0)),
                   pl.BlockSpec((S, Wp), lambda i: (i, 0))),
        scratch_shapes=[pltpu.VMEM((Rext, Wp), jnp.float32),      # strip input buffer
                        pltpu.SemaphoreType.DMA,
                        pltpu.VMEM((Rext + 2 * PADR, Wp), jnp.float32),  # y-conv / y-grad
                        pltpu.VMEM((Rext, Wp), jnp.float32)],     # smoothed edge
        compiler_params=pltpu.CompilerParams(
            # TODO(synk): on v7x (2 TensorCores) switch this axis to pltpu.CORE_PARALLEL
            # once the target generation is known; "parallel" is correct everywhere.
            dimension_semantics=("parallel",),
            vmem_limit_bytes=vmem_bytes),
        cost_estimate=cost,
    )(padded)

    out = out[:H, :W].reshape(1, 1, H, W)
    grad = grad[:H, :W].astype(jnp.int32).reshape(1, 1, H, W)
    return out, grad


def _nms_reference(edge, m=1.01):
    """Pure-jnp re-implementation of the PyTorch forward (for validation only)."""
    x = edge[0, 0].astype(jnp.float32)
    H, W = x.shape
    w1 = jnp.array([0.25, 0.5, 0.25], jnp.float32)
    w2 = jnp.array([1, 2, 3, 4, 5, 4, 3, 2, 1], jnp.float32) / 25.0

    def conv_x(v, w):
        r = w.shape[0] // 2
        vp = jnp.pad(v, ((0, 0), (r, r)))
        return sum(w[j + r] * vp[:, j + r:j + r + W] for j in range(-r, r + 1))

    def conv_y(v, w):
        r = w.shape[0] // 2
        vp = jnp.pad(v, ((r, r), (0, 0)))
        return sum(w[j + r] * vp[j + r:j + r + H, :] for j in range(-r, r + 1))

    es = conv_y(conv_x(x, w1), w1)
    a = conv_y(conv_x(es, w2), w2)

    def grad_along(v, axis):
        g = 0.5 * (jnp.roll(v, -1, axis) - jnp.roll(v, 1, axis))
        if axis == 0:
            g = g.at[0, :].set(v[1, :] - v[0, :])
            g = g.at[-1, :].set(v[-1, :] - v[-2, :])
        else:
            g = g.at[:, 0].set(v[:, 1] - v[:, 0])
            g = g.at[:, -1].set(v[:, -1] - v[:, -2])
        return g

    oy, ox = grad_along(a, 0), grad_along(a, 1)
    oxx = grad_along(ox, 1)
    oyy, oxy = grad_along(oy, 0), grad_along(oy, 1)
    ori = jnp.remainder(jnp.arctan(oyy * jnp.sign(-oxy) / (oxx + 1e-05)), jnp.pi)
    cos_a, sin_a = jnp.cos(ori), jnp.sin(ori)
    yy, xx = jnp.meshgrid(jnp.arange(H, dtype=jnp.float32),
                          jnp.arange(W, dtype=jnp.float32), indexing="ij")

    def interp(xq, yq):
        x0 = xq.astype(jnp.int32)
        y0 = yq.astype(jnp.int32)
        dx0 = xq - x0.astype(jnp.float32)
        dy0 = yq - y0.astype(jnp.float32)
        dx1, dy1 = 1.0 - dx0, 1.0 - dy0
        v00 = es[y0, x0]
        v01 = es[y0, x0 + 1]
        v10 = es[y0 + 1, x0]
        v11 = es[y0 + 1, x0 + 1]
        return (v00 * dx1 + v01 * dx0) * dy1 + (v10 * dx1 + v11 * dx0) * dy0

    e = es * m
    sup = jnp.zeros((H, W), bool)
    for k in (2.0, 1.0, -2.0, -1.0):
        xq = jnp.clip(k * cos_a + xx, 0.0, W - 1.001)
        yq = jnp.clip(k * sin_a + yy, 0.0, H - 1.001)
        sup = jnp.logical_or(sup, e < interp(xq, yq))
    out = jnp.where(sup, 0.0, es)
    grad = jnp.where(sup, 0, 1).astype(jnp.int32)
    return out.reshape(1, 1, H, W), grad.reshape(1, 1, H, W)


if __name__ == "__main__":
    key = jax.random.PRNGKey(0)

    def check(H, W, max_strip):
        k = jax.random.fold_in(key, H * 1000 + W)
        edge = jax.random.uniform(k, (1, 1, H, W), dtype=jnp.float32)
        out, grad = nms_forward(edge, max_strip=max_strip)
        jax.block_until_ready((out, grad))
        assert out.shape == (1, 1, H, W) and out.dtype == jnp.float32
        assert grad.shape == (1, 1, H, W) and grad.dtype == jnp.int32
        assert bool(jnp.all(jnp.isfinite(out)))
        out_r, grad_r = _nms_reference(edge)
        mism = int(jnp.sum(grad != grad_r))
        # allow a tiny number of keep/suppress flips from float-threshold pixels
        assert mism <= max(3, (H * W) // 100), f"keep-mask mismatch: {mism}/{H * W}"
        agree = grad == grad_r
        err = float(jnp.max(jnp.where(agree, jnp.abs(out - out_r), 0.0)))
        assert err < 1e-3, f"out mismatch {err}"

    check(16, 16, None)   # single strip
    check(40, 20, 16)     # 2 overlapping strips: exercises halo windows + row/col padding
    print("KERNEL_OK")
</pallas_src>

<mosaic_0001>
module attributes {stable_mosaic.version = 11 : i64} {
  func.func @_nms_kernel(%arg0: i32, %arg1: memref<48x128xf32, #tpu.memory_space<any>>, %arg2: memref<32x128xf32, #tpu.memory_space<vmem>>, %arg3: memref<32x128xi8, #tpu.memory_space<vmem>>, %arg4: memref<48x128xf32, #tpu.memory_space<vmem>>, %arg5: memref<!tpu.dma_semaphore, #tpu.memory_space<semaphore_mem>>, %arg6: memref<64x128xf32, #tpu.memory_space<vmem>>, %arg7: memref<48x128xf32, #tpu.memory_space<vmem>>) attributes {dimension_semantics = [#tpu.dimension_semantics<parallel>], iteration_bounds = array<i64: 1>, scalar_prefetch = 0 : i64, scratch_operands = 4 : i64, tpu.core_type = #tpu.core_type<tc>, window_params = [{}, {transform_indices = @transform_1, window_bounds = array<i64: 32, 128>}, {transform_indices = @transform_2, window_bounds = array<i64: 32, 128>}]} {
    %c0_i32 = arith.constant 0 : i32
    %0 = arith.cmpi eq, %arg0, %c0_i32 : i32
    %c0_i32_0 = arith.constant 0 : i32
    %1 = arith.cmpi eq, %arg0, %c0_i32_0 : i32
    %c32_i32 = arith.constant 32 : i32
    %2 = arith.muli %arg0, %c32_i32 : i32
    %c0_i32_1 = arith.constant 0 : i32
    %3 = tpu.memref_slice %arg1[%2, %c0_i32_1] : memref<48x128xf32, #tpu.memory_space<any>> -> memref<48x128xf32, #tpu.memory_space<any>>
    tpu.enqueue_dma source(%3 : memref<48x128xf32, #tpu.memory_space<any>>) target(%arg4 : memref<48x128xf32, #tpu.memory_space<vmem>>) target_semaphore(%arg5 : memref<!tpu.dma_semaphore, #tpu.memory_space<semaphore_mem>>)
    %c0_i32_2 = arith.constant 0 : i32
    %4 = tpu.memref_slice %arg1[%2, %c0_i32_2] : memref<48x128xf32, #tpu.memory_space<any>> -> memref<48x128xf32, #tpu.memory_space<any>>
    tpu.wait_dma2 semaphore(%arg5 : memref<!tpu.dma_semaphore, #tpu.memory_space<semaphore_mem>>) src(%4 : memref<48x128xf32, #tpu.memory_space<any>>) dst(%arg4 : memref<48x128xf32, #tpu.memory_space<vmem>>)
    %cst = arith.constant 0.000000e+00 : f32
    %5 = vector.broadcast %cst : f32 to vector<8x128xf32>
    %c0 = arith.constant 0 : index
    %c0_3 = arith.constant 0 : index
    %6 = vector.load %arg6[%c0, %c0_3] : memref<64x128xf32, #tpu.memory_space<vmem>>, vector<8x128xf32>
    tpu.vector_store %arg6[%c0, %c0_3], %5 {strides = array<i32>} : memref<64x128xf32, #tpu.memory_space<vmem>>, vector<8x128xf32>,
    %c56 = arith.constant 56 : index
    %c0_4 = arith.constant 0 : index
    %7 = vector.load %arg6[%c56, %c0_4] : memref<64x128xf32, #tpu.memory_space<vmem>>, vector<8x128xf32>
    tpu.vector_store %arg6[%c56, %c0_4], %5 {strides = array<i32>} : memref<64x128xf32, #tpu.memory_space<vmem>>, vector<8x128xf32>,
    %c0_5 = arith.constant 0 : index
    %c0_6 = arith.constant 0 : index
    %8 = vector.load %arg4[%c0_5, %c0_6] : memref<48x128xf32, #tpu.memory_space<vmem>>, vector<48x128xf32>
    %c1_i32 = arith.constant 1 : i32
    %9 = tpu.dynamic_rotate %8 by %c1_i32 dim 1 : vector<48x128xf32>, i32 -> vector<48x128xf32>
    %cst_7 = arith.constant 2.500000e-01 : f32
    %10 = vector.broadcast %cst_7 : f32 to vector<48x128xf32>
    %11 = arith.mulf %10, %9 : vector<48x128xf32>
    %cst_8 = arith.constant 5.000000e-01 : f32
    %12 = vector.broadcast %cst_8 : f32 to vector<48x128xf32>
    %13 = arith.mulf %12, %8 : vector<48x128xf32>
    %14 = arith.addf %11, %13 : vector<48x128xf32>
    %c127_i32 = arith.constant 127 : i32
    %15 = tpu.dynamic_rotate %8 by %c127_i32 dim 1 : vector<48x128xf32>, i32 -> vector<48x128xf32>
    %cst_9 = arith.constant 2.500000e-01 : f32
    %16 = vector.broadcast %cst_9 : f32 to vector<48x128xf32>
    %17 = arith.mulf %16, %15 : vector<48x128xf32>
    %18 = arith.addf %14, %17 : vector<48x128xf32>
    %c8 = arith.constant 8 : index
    %c0_10 = arith.constant 0 : index
    %19 = vector.load %arg6[%c8, %c0_10] : memref<64x128xf32, #tpu.memory_space<vmem>>, vector<48x128xf32>
    tpu.vector_store %arg6[%c8, %c0_10], %18 {strides = array<i32>} : memref<64x128xf32, #tpu.memory_space<vmem>>, vector<48x128xf32>,
    %c7 = arith.constant 7 : index
    %c0_11 = arith.constant 0 : index
    %20 = vector.load %arg6[%c7, %c0_11] : memref<64x128xf32, #tpu.memory_space<vmem>>, vector<48x128xf32>
    %cst_12 = arith.constant 2.500000e-01 : f32
    %21 = vector.broadcast %cst_12 : f32 to vector<48x128xf32>
    %22 = arith.mulf %21, %20 : vector<48x128xf32>
    %cst_13 = arith.constant 5.000000e-01 : f32
    %23 = vector.broadcast %cst_13 : f32 to vector<48x128xf32>
    %24 = arith.mulf %23, %18 : vector<48x128xf32>
    %25 = arith.addf %22, %24 : vector<48x128xf32>
    %c9 = arith.constant 9 : index
    %c0_14 = arith.constant 0 : index
    %26 = vector.load %arg6[%c9, %c0_14] : memref<64x128xf32, #tpu.memory_space<vmem>>, vector<48x128xf32>
    %cst_15 = arith.constant 2.500000e-01 : f32
    %27 = vector.broadcast %cst_15 : f32 to vector<48x128xf32>
    %28 = arith.mulf %27, %26 : vector<48x128xf32>
    %29 = arith.addf %25, %28 : vector<48x128xf32>
    %c32_i32_16 = arith.constant 32 : i32
    %30 = arith.muli %arg0, %c32_i32_16 : i32
    %c8_i32 = arith.constant 8 : i32
    %31 = arith.subi %30, %c8_i32 : i32
    %32 = tpu.iota {dimensions = array<i32: 0>} : vector<48x128xi32>
    %33 = vector.broadcast %31 : i32 to vector<48x128xi32>
    %34 = arith.addi %33, %32 : vector<48x128xi32>
    %35 = tpu.iota {dimensions = array<i32: 1>} : vector<48x128xi32>
    %c0_i32_17 = arith.constant 0 : i32
    %36 = vector.broadcast %c0_i32_17 : i32 to vector<48x128xi32>
    %37 = arith.cmpi sge, %34, %36 : vector<48x128xi32>
    %c16_i32 = arith.constant 16 : i32
    %38 = vector.broadcast %c16_i32 : i32 to vector<48x128xi32>
    %39 = arith.cmpi slt, %34, %38 : vector<48x128xi32>
    %40 = arith.andi %37, %39 : vector<48x128xi1>
    %c16_i32_18 = arith.constant 16 : i32
    %41 = vector.broadcast %c16_i32_18 : i32 to vector<48x128xi32>
    %42 = arith.cmpi slt, %35, %41 : vector<48x128xi32>
    %43 = arith.andi %40, %42 : vector<48x128xi1>
    %cst_19 = arith.constant 0.000000e+00 : f32
    %44 = vector.broadcast %cst_19 : f32 to vector<48x128xf32>
    %45 = arith.select %43, %29, %44 : vector<48x128xi1>, vector<48x128xf32>
    %c0_20 = arith.constant 0 : index
    %c0_21 = arith.constant 0 : index
    %46 = vector.load %arg7[%c0_20, %c0_21] : memref<48x128xf32, #tpu.memory_space<vmem>>, vector<48x128xf32>
    tpu.vector_store %arg7[%c0_20, %c0_21], %45 {strides = array<i32>} : memref<48x128xf32, #tpu.memory_space<vmem>>, vector<48x128xf32>,
    %c4_i32 = arith.constant 4 : i32
    %47 = tpu.dynamic_rotate %45 by %c4_i32 dim 1 : vector<48x128xf32>, i32 -> vector<48x128xf32>
    %cst_22 = arith.constant 4.000000e-02 : f32
    %48 = vector.broadcast %cst_22 : f32 to vector<48x128xf32>
    %49 = arith.mulf %48, %47 : vector<48x128xf32>
    %c3_i32 = arith.constant 3 : i32
    %50 = tpu.dynamic_rotate %45 by %c3_i32 dim 1 : vector<48x128xf32>, i32 -> vector<48x128xf32>
    %cst_23 = arith.constant 8.000000e-02 : f32
    %51 = vector.broadcast %cst_23 : f32 to vector<48x128xf32>
    %52 = arith.mulf %51, %50 : vector<48x128xf32>
    %53 = arith.addf %49, %52 : vector<48x128xf32>
    %c2_i32 = arith.constant 2 : i32
    %54 = tpu.dynamic_rotate %45 by %c2_i32 dim 1 : vector<48x128xf32>, i32 -> vector<48x128xf32>
    %cst_24 = arith.constant 1.200000e-01 : f32
    %55 = vector.broadcast %cst_24 : f32 to vector<48x128xf32>
    %56 = arith.mulf %55, %54 : vector<48x128xf32>
    %57 = arith.addf %53, %56 : vector<48x128xf32>
    %c1_i32_25 = arith.constant 1 : i32
    %58 = tpu.dynamic_rotate %45 by %c1_i32_25 dim 1 : vector<48x128xf32>, i32 -> vector<48x128xf32>
    %cst_26 = arith.constant 1.600000e-01 : f32
    %59 = vector.broadcast %cst_26 : f32 to vector<48x128xf32>
    %60 = arith.mulf %59, %58 : vector<48x128xf32>
    %61 = arith.addf %57, %60 : vector<48x128xf32>
    %cst_27 = arith.constant 2.000000e-01 : f32
    %62 = vector.broadcast %cst_27 : f32 to vector<48x128xf32>
    %63 = arith.mulf %62, %45 : vector<48x128xf32>
    %64 = arith.addf %61, %63 : vector<48x128xf32>
    %c127_i32_28 = arith.constant 127 : i32
    %65 = tpu.dynamic_rotate %45 by %c127_i32_28 dim 1 : vector<48x128xf32>, i32 -> vector<48x128xf32>
    %cst_29 = arith.constant 1.600000e-01 : f32
    %66 = vector.broadcast %cst_29 : f32 to vector<48x128xf32>
    %67 = arith.mulf %66, %65 : vector<48x128xf32>
    %68 = arith.addf %64, %67 : vector<48x128xf32>
    %c126_i32 = arith.constant 126 : i32
    %69 = tpu.dynamic_rotate %45 by %c126_i32 dim 1 : vector<48x128xf32>, i32 -> vector<48x128xf32>
    %cst_30 = arith.constant 1.200000e-01 : f32
    %70 = vector.broadcast %cst_30 : f32 to vector<48x128xf32>
    %71 = arith.mulf %70, %69 : vector<48x128xf32>
    %72 = arith.addf %68, %71 : vector<48x128xf32>
    %c125_i32 = arith.constant 125 : i32
    %73 = tpu.dynamic_rotate %45 by %c125_i32 dim 1 : vector<48x128xf32>, i32 -> vector<48x128xf32>
    %cst_31 = arith.constant 8.000000e-02 : f32
    %74 = vector.broadcast %cst_31 : f32 to vector<48x128xf32>
    %75 = arith.mulf %74, %73 : vector<48x128xf32>
    %76 = arith.addf %72, %75 : vector<48x128xf32>
    %c124_i32 = arith.constant 124 : i32
    %77 = tpu.dynamic_rotate %45 by %c124_i32 dim 1 : vector<48x128xf32>, i32 -> vector<48x128xf32>
    %cst_32 = arith.constant 4.000000e-02 : f32
    %78 = vector.broadcast %cst_32 : f32 to vector<48x128xf32>
    %79 = arith.mulf %78, %77 : vector<48x128xf32>
    %80 = arith.addf %76, %79 : vector<48x128xf32>
    %c8_33 = arith.constant 8 : index
    %c0_34 = arith.constant 0 : index
    %81 = vector.load %arg6[%c8_33, %c0_34] : memref<64x128xf32, #tpu.memory_space<vmem>>, vector<48x128xf32>
    tpu.vector_store %arg6[%c8_33, %c0_34], %80 {strides = array<i32>} : memref<64x128xf32, #tpu.memory_space<vmem>>, vector<48x128xf32>,
    %c4 = arith.constant 4 : index
    %c0_35 = arith.constant 0 : index
    %82 = vector.load %arg6[%c4, %c0_35] : memref<64x128xf32, #tpu.memory_space<vmem>>, vector<48x128xf32>
    %cst_36 = arith.constant 4.000000e-02 : f32
    %83 = vector.broadcast %cst_36 : f32 to vector<48x128xf32>
    %84 = arith.mulf %83, %82 : vector<48x128xf32>
    %c5 = arith.constant 5 : index
    %c0_37 = arith.constant 0 : index
    %85 = vector.load %arg6[%c5, %c0_37] : memref<64x128xf32, #tpu.memory_space<vmem>>, vector<48x128xf32>
    %cst_38 = arith.constant 8.000000e-02 : f32
    %86 = vector.broadcast %cst_38 : f32 to vector<48x128xf32>
    %87 = arith.mulf %86, %85 : vector<48x128xf32>
    %88 = arith.addf %84, %87 : vector<48x128xf32>
    %c6 = arith.constant 6 : index
    %c0_39 = arith.constant 0 : index
    %89 = vector.load %arg6[%c6, %c0_39] : memref<64x128xf32, #tpu.memory_space<vmem>>, vector<48x128xf32>
    %cst_40 = arith.constant 1.200000e-01 : f32
    %90 = vector.broadcast %cst_40 : f32 to vector<48x128xf32>
    %91 = arith.mulf %90, %89 : vector<48x128xf32>
    %92 = arith.addf %88, %91 : vector<48x128xf32>
    %c7_41 = arith.constant 7 : index
    %c0_42 = arith.constant 0 : index
    %93 = vector.load %arg6[%c7_41, %c0_42] : memref<64x128xf32, #tpu.memory_space<vmem>>, vector<48x128xf32>
    %cst_43 = arith.constant 1.600000e-01 : f32
    %94 = vector.broadcast %cst_43 : f32 to vector<48x128xf32>
    %95 = arith.mulf %94, %93 : vector<48x128xf32>
    %96 = arith.addf %92, %95 : vector<48x128xf32>
    %cst_44 = arith.constant 2.000000e-01 : f32
    %97 = vector.broadcast %cst_44 : f32 to vector<48x128xf32>
    %98 = arith.mulf %97, %80 : vector<48x128xf32>
    %99 = arith.addf %96, %98 : vector<48x128xf32>
    %c9_45 = arith.constant 9 : index
    %c0_46 = arith.constant 0 : index
    %100 = vector.load %arg6[%c9_45, %c0_46] : memref<64x128xf32, #tpu.memory_space<vmem>>, vector<48x128xf32>
    %cst_47 = arith.constant 1.600000e-01 : f32
    %101 = vector.broadcast %cst_47 : f32 to vector<48x128xf32>
    %102 = arith.mulf %101, %100 : vector<48x128xf32>
    %103 = arith.addf %99, %102 : vector<48x128xf32>
    %c10 = arith.constant 10 : index
    %c0_48 = arith.constant 0 : index
    %104 = vector.load %arg6[%c10, %c0_48] : memref<64x128xf32, #tpu.memory_space<vmem>>, vector<48x128xf32>
    %cst_49 = arith.constant 1.200000e-01 : f32
    %105 = vector.broadcast %cst_49 : f32 to vector<48x128xf32>
    %106 = arith.mulf %105, %104 : vector<48x128xf32>
    %107 = arith.addf %103, %106 : vector<48x128xf32>
    %c11 = arith.constant 11 : index
    %c0_50 = arith.constant 0 : index
    %108 = vector.load %arg6[%c11, %c0_50] : memref<64x128xf32, #tpu.memory_space<vmem>>, vector<48x128xf32>
    %cst_51 = arith.constant 8.000000e-02 : f32
    %109 = vector.broadcast %cst_51 : f32 to vector<48x128xf32>
    %110 = arith.mulf %109, %108 : vector<48x128xf32>
    %111 = arith.addf %107, %110 : vector<48x128xf32>
    %c12 = arith.constant 12 : index
    %c0_52 = arith.constant 0 : index
    %112 = vector.load %arg6[%c12, %c0_52] : memref<64x128xf32, #tpu.memory_space<vmem>>, vector<48x128xf32>
    %cst_53 = arith.constant 4.000000e-02 : f32
    %113 = vector.broadcast %cst_53 : f32 to vector<48x128xf32>
    %114 = arith.mulf %113, %112 : vector<48x128xf32>
    %115 = arith.addf %111, %114 : vector<48x128xf32>
    %c8_54 = arith.constant 8 : index
    %c0_55 = arith.constant 0 : index
    %116 = vector.load %arg6[%c8_54, %c0_55] : memref<64x128xf32, #tpu.memory_space<vmem>>, vector<48x128xf32>
    tpu.vector_store %arg6[%c8_54, %c0_55], %115 {strides = array<i32>} : memref<64x128xf32, #tpu.memory_space<vmem>>, vector<48x128xf32>,
    %117 = arith.extui %0 : i1 to i32
    %c0_i32_56 = arith.constant 0 : i32
    %118 = arith.cmpi ne, %117, %c0_i32_56 : i32
    scf.if %118 {
      %546 = vector.extract_strided_slice %115 {offsets = [8, 0], sizes = [1, 128], strides = [1, 1]} : vector<48x128xf32> to vector<1x128xf32>
      %cst_204 = arith.constant 2.000000e+00 : f32
      %547 = vector.broadcast %cst_204 : f32 to vector<1x128xf32>
      %548 = arith.mulf %547, %546 : vector<1x128xf32>
      %549 = vector.extract_strided_slice %115 {offsets = [9, 0], sizes = [1, 128], strides = [1, 1]} : vector<48x128xf32> to vector<1x128xf32>
      %550 = arith.subf %548, %549 : vector<1x128xf32>
      %c15 = arith.constant 15 : index
      %c0_205 = arith.constant 0 : index
      %551 = vector.load %arg6[%c15, %c0_205] : memref<64x128xf32, #tpu.memory_space<vmem>>, vector<1x128xf32>
      tpu.vector_store %arg6[%c15, %c0_205], %550 {strides = array<i32>} : memref<64x128xf32, #tpu.memory_space<vmem>>, vector<1x128xf32>,
    } else {
    }
    %119 = arith.extui %1 : i1 to i32
    %c0_i32_57 = arith.constant 0 : i32
    %120 = arith.cmpi ne, %119, %c0_i32_57 : i32
    scf.if %120 {
      %546 = vector.extract_strided_slice %115 {offsets = [23, 0], sizes = [1, 128], strides = [1, 1]} : vector<48x128xf32> to vector<1x128xf32>
      %cst_204 = arith.constant 2.000000e+00 : f32
      %547 = vector.broadcast %cst_204 : f32 to vector<1x128xf32>
      %548 = arith.mulf %547, %546 : vector<1x128xf32>
      %549 = vector.extract_strided_slice %115 {offsets = [22, 0], sizes = [1, 128], strides = [1, 1]} : vector<48x128xf32> to vector<1x128xf32>
      %550 = arith.subf %548, %549 : vector<1x128xf32>
      %c32 = arith.constant 32 : index
      %c0_205 = arith.constant 0 : index
      %551 = vector.load %arg6[%c32, %c0_205] : memref<64x128xf32, #tpu.memory_space<vmem>>, vector<1x128xf32>
      tpu.vector_store %arg6[%c32, %c0_205], %550 {strides = array<i32>} : memref<64x128xf32, #tpu.memory_space<vmem>>, vector<1x128xf32>,
    } else {
    }
    %c9_58 = arith.constant 9 : index
    %c0_59 = arith.constant 0 : index
    %121 = vector.load %arg6[%c9_58, %c0_59] : memref<64x128xf32, #tpu.memory_space<vmem>>, vector<48x128xf32>
    %c7_60 = arith.constant 7 : index
    %c0_61 = arith.constant 0 : index
    %122 = vector.load %arg6[%c7_60, %c0_61] : memref<64x128xf32, #tpu.memory_space<vmem>>, vector<48x128xf32>
    %123 = arith.subf %121, %122 : vector<48x128xf32>
    %cst_62 = arith.constant 5.000000e-01 : f32
    %124 = vector.broadcast %cst_62 : f32 to vector<48x128xf32>
    %125 = arith.mulf %124, %123 : vector<48x128xf32>
    %c8_63 = arith.constant 8 : index
    %c0_64 = arith.constant 0 : index
    %126 = vector.load %arg6[%c8_63, %c0_64] : memref<64x128xf32, #tpu.memory_space<vmem>>, vector<48x128xf32>
    tpu.vector_store %arg6[%c8_63, %c0_64], %125 {strides = array<i32>} : memref<64x128xf32, #tpu.memory_space<vmem>>, vector<48x128xf32>,
    %127 = arith.extui %0 : i1 to i32
    %c0_i32_65 = arith.constant 0 : i32
    %128 = arith.cmpi ne, %127, %c0_i32_65 : i32
    scf.if %128 {
      %546 = vector.extract_strided_slice %125 {offsets = [8, 0], sizes = [1, 128], strides = [1, 1]} : vector<48x128xf32> to vector<1x128xf32>
      %cst_204 = arith.constant 2.000000e+00 : f32
      %547 = vector.broadcast %cst_204 : f32 to vector<1x128xf32>
      %548 = arith.mulf %547, %546 : vector<1x128xf32>
      %549 = vector.extract_strided_slice %125 {offsets = [9, 0], sizes = [1, 128], strides = [1, 1]} : vector<48x128xf32> to vector<1x128xf32>
      %550 = arith.subf %548, %549 : vector<1x128xf32>
      %c15 = arith.constant 15 : index
      %c0_205 = arith.constant 0 : index
      %551 = vector.load %arg6[%c15, %c0_205] : memref<64x128xf32, #tpu.memory_space<vmem>>, vector<1x128xf32>
      tpu.vector_store %arg6[%c15, %c0_205], %550 {strides = array<i32>} : memref<64x128xf32, #tpu.memory_space<vmem>>, vector<1x128xf32>,
    } else {
    }
    %129 = arith.extui %1 : i1 to i32
    %c0_i32_66 = arith.constant 0 : i32
    %130 = arith.cmpi ne, %129, %c0_i32_66 : i32
    scf.if %130 {
      %546 = vector.extract_strided_slice %125 {offsets = [23, 0], sizes = [1, 128], strides = [1, 1]} : vector<48x128xf32> to vector<1x128xf32>
      %cst_204 = arith.constant 2.000000e+00 : f32
      %547 = vector.broadcast %cst_204 : f32 to vector<1x128xf32>
      %548 = arith.mulf %547, %546 : vector<1x128xf32>
      %549 = vector.extract_strided_slice %125 {offsets = [22, 0], sizes = [1, 128], strides = [1, 1]} : vector<48x128xf32> to vector<1x128xf32>
      %550 = arith.subf %548, %549 : vector<1x128xf32>
      %c32 = arith.constant 32 : index
      %c0_205 = arith.constant 0 : index
      %551 = vector.load %arg6[%c32, %c0_205] : memref<64x128xf32, #tpu.memory_space<vmem>>, vector<1x128xf32>
      tpu.vector_store %arg6[%c32, %c0_205], %550 {strides = array<i32>} : memref<64x128xf32, #tpu.memory_space<vmem>>, vector<1x128xf32>,
    } else {
    }
    %c9_67 = arith.constant 9 : index
    %c0_68 = arith.constant 0 : index
    %131 = vector.load %arg6[%c9_67, %c0_68] : memref<64x128xf32, #tpu.memory_space<vmem>>, vector<48x128xf32>
    %c7_69 = arith.constant 7 : index
    %c0_70 = arith.constant 0 : index
    %132 = vector.load %arg6[%c7_69, %c0_70] : memref<64x128xf32, #tpu.memory_space<vmem>>, vector<48x128xf32>
    %133 = arith.subf %131, %132 : vector<48x128xf32>
    %cst_71 = arith.constant 5.000000e-01 : f32
    %134 = vector.broadcast %cst_71 : f32 to vector<48x128xf32>
    %135 = arith.mulf %134, %133 : vector<48x128xf32>
    %136 = vector.extract_strided_slice %135 {offsets = [8, 0], sizes = [32, 128], strides = [1, 1]} : vector<48x128xf32> to vector<32x128xf32>
    %137 = tpu.iota {dimensions = array<i32: 0>} : vector<32x128xi32>
    %138 = tpu.iota {dimensions = array<i32: 1>} : vector<32x128xi32>
    %c0_i32_72 = arith.constant 0 : i32
    %139 = vector.broadcast %c0_i32_72 : i32 to vector<32x128xi32>
    %140 = arith.cmpi eq, %138, %139 : vector<32x128xi32>
    %c15_i32 = arith.constant 15 : i32
    %141 = vector.broadcast %c15_i32 : i32 to vector<32x128xi32>
    %142 = arith.cmpi eq, %138, %141 : vector<32x128xi32>
    %143 = vector.extract_strided_slice %115 {offsets = [8, 0], sizes = [32, 128], strides = [1, 1]} : vector<48x128xf32> to vector<32x128xf32>
    %c127_i32_73 = arith.constant 127 : i32
    %144 = tpu.dynamic_rotate %143 by %c127_i32_73 dim 1 : vector<32x128xf32>, i32 -> vector<32x128xf32>
    %c1_i32_74 = arith.constant 1 : i32
    %145 = tpu.dynamic_rotate %143 by %c1_i32_74 dim 1 : vector<32x128xf32>, i32 -> vector<32x128xf32>
    %146 = arith.subf %144, %145 : vector<32x128xf32>
    %cst_75 = arith.constant 5.000000e-01 : f32
    %147 = vector.broadcast %cst_75 : f32 to vector<32x128xf32>
    %148 = arith.mulf %147, %146 : vector<32x128xf32>
    %149 = arith.subf %144, %143 : vector<32x128xf32>
    %150 = arith.select %140, %149, %148 : vector<32x128xi1>, vector<32x128xf32>
    %151 = arith.subf %143, %145 : vector<32x128xf32>
    %152 = arith.select %142, %151, %150 : vector<32x128xi1>, vector<32x128xf32>
    %c127_i32_76 = arith.constant 127 : i32
    %153 = tpu.dynamic_rotate %152 by %c127_i32_76 dim 1 : vector<32x128xf32>, i32 -> vector<32x128xf32>
    %c1_i32_77 = arith.constant 1 : i32
    %154 = tpu.dynamic_rotate %152 by %c1_i32_77 dim 1 : vector<32x128xf32>, i32 -> vector<32x128xf32>
    %155 = arith.subf %153, %154 : vector<32x128xf32>
    %cst_78 = arith.constant 5.000000e-01 : f32
    %156 = vector.broadcast %cst_78 : f32 to vector<32x128xf32>
    %157 = arith.mulf %156, %155 : vector<32x128xf32>
    %158 = arith.subf %153, %152 : vector<32x128xf32>
    %159 = arith.select %140, %158, %157 : vector<32x128xi1>, vector<32x128xf32>
    %160 = arith.subf %152, %154 : vector<32x128xf32>
    %161 = arith.select %142, %160, %159 : vector<32x128xi1>, vector<32x128xf32>
    %162 = vector.extract_strided_slice %125 {offsets = [8, 0], sizes = [32, 128], strides = [1, 1]} : vector<48x128xf32> to vector<32x128xf32>
    %c127_i32_79 = arith.constant 127 : i32
    %163 = tpu.dynamic_rotate %162 by %c127_i32_79 dim 1 : vector<32x128xf32>, i32 -> vector<32x128xf32>
    %c1_i32_80 = arith.constant 1 : i32
    %164 = tpu.dynamic_rotate %162 by %c1_i32_80 dim 1 : vector<32x128xf32>, i32 -> vector<32x128xf32>
    %165 = arith.subf %163, %164 : vector<32x128xf32>
    %cst_81 = arith.constant 5.000000e-01 : f32
    %166 = vector.broadcast %cst_81 : f32 to vector<32x128xf32>
    %167 = arith.mulf %166, %165 : vector<32x128xf32>
    %168 = arith.subf %163, %162 : vector<32x128xf32>
    %169 = arith.select %140, %168, %167 : vector<32x128xi1>, vector<32x128xf32>
    %170 = arith.subf %162, %164 : vector<32x128xf32>
    %171 = arith.select %142, %170, %169 : vector<32x128xi1>, vector<32x128xf32>
    %cst_82 = arith.constant 0.000000e+00 : f32
    %172 = vector.broadcast %cst_82 : f32 to vector<32x128xf32>
    %173 = arith.cmpf olt, %171, %172 : vector<32x128xf32>
    %cst_83 = arith.constant 0.000000e+00 : f32
    %174 = vector.broadcast %cst_83 : f32 to vector<32x128xf32>
    %175 = arith.cmpf ogt, %171, %174 : vector<32x128xf32>
    %cst_84 = arith.constant -1.000000e+00 : f32
    %cst_85 = arith.constant 0.000000e+00 : f32
    %176 = vector.broadcast %cst_84 : f32 to vector<32x128xf32>
    %177 = vector.broadcast %cst_85 : f32 to vector<32x128xf32>
    %178 = arith.select %175, %176, %177 : vector<32x128xi1>, vector<32x128xf32>
    %cst_86 = arith.constant 1.000000e+00 : f32
    %179 = vector.broadcast %cst_86 : f32 to vector<32x128xf32>
    %180 = arith.select %173, %179, %178 : vector<32x128xi1>, vector<32x128xf32>
    %181 = arith.mulf %136, %180 : vector<32x128xf32>
    %cst_87 = arith.constant 9.99999974E-6 : f32
    %182 = vector.broadcast %cst_87 : f32 to vector<32x128xf32>
    %183 = arith.addf %161, %182 : vector<32x128xf32>
    %184 = arith.mulf %183, %183 : vector<32x128xf32>
    %185 = arith.mulf %181, %181 : vector<32x128xf32>
    %186 = arith.addf %184, %185 : vector<32x128xf32>
    %cst_88 = arith.constant 1.000000e-30 : f32
    %187 = vector.broadcast %cst_88 : f32 to vector<32x128xf32>
    %188 = arith.addf %186, %187 : vector<32x128xf32>
    %189 = math.rsqrt %188 : vector<32x128xf32>
    %190 = arith.mulf %181, %183 : vector<32x128xf32>
    %cst_89 = arith.constant 0.000000e+00 : f32
    %191 = vector.broadcast %cst_89 : f32 to vector<32x128xf32>
    %192 = arith.cmpf olt, %190, %191 : vector<32x128xf32>
    %cst_90 = arith.constant -1.000000e+00 : f32
    %cst_91 = arith.constant 1.000000e+00 : f32
    %193 = vector.broadcast %cst_90 : f32 to vector<32x128xf32>
    %194 = vector.broadcast %cst_91 : f32 to vector<32x128xf32>
    %195 = arith.select %192, %193, %194 : vector<32x128xi1>, vector<32x128xf32>
    %196 = math.absf %183 : vector<32x128xf32>
    %197 = arith.mulf %195, %196 : vector<32x128xf32>
    %198 = arith.mulf %197, %189 : vector<32x128xf32>
    %199 = math.absf %181 : vector<32x128xf32>
    %200 = arith.mulf %199, %189 : vector<32x128xf32>
    %c32_i32_92 = arith.constant 32 : i32
    %201 = arith.muli %arg0, %c32_i32_92 : i32
    %202 = vector.broadcast %201 : i32 to vector<32x128xi32>
    %203 = arith.addi %202, %137 : vector<32x128xi32>
    %204 = arith.sitofp %203 : vector<32x128xi32> to vector<32x128xf32>
    %205 = arith.sitofp %138 : vector<32x128xi32> to vector<32x128xf32>
    %c6_93 = arith.constant 6 : index
    %c0_94 = arith.constant 0 : index
    %206 = vector.load %arg7[%c6_93, %c0_94] : memref<48x128xf32, #tpu.memory_space<vmem>>, vector<32x128xf32>
    %c7_95 = arith.constant 7 : index
    %c0_96 = arith.constant 0 : index
    %207 = vector.load %arg7[%c7_95, %c0_96] : memref<48x128xf32, #tpu.memory_space<vmem>>, vector<32x128xf32>
    %c8_97 = arith.constant 8 : index
    %c0_98 = arith.constant 0 : index
    %208 = vector.load %arg7[%c8_97, %c0_98] : memref<48x128xf32, #tpu.memory_space<vmem>>, vector<32x128xf32>
    %c9_99 = arith.constant 9 : index
    %c0_100 = arith.constant 0 : index
    %209 = vector.load %arg7[%c9_99, %c0_100] : memref<48x128xf32, #tpu.memory_space<vmem>>, vector<32x128xf32>
    %c10_101 = arith.constant 10 : index
    %c0_102 = arith.constant 0 : index
    %210 = vector.load %arg7[%c10_101, %c0_102] : memref<48x128xf32, #tpu.memory_space<vmem>>, vector<32x128xf32>
    %c11_103 = arith.constant 11 : index
    %c0_104 = arith.constant 0 : index
    %211 = vector.load %arg7[%c11_103, %c0_104] : memref<48x128xf32, #tpu.memory_space<vmem>>, vector<32x128xf32>
    %cst_105 = arith.constant 0.000000e+00 : f32
    %212 = vector.broadcast %cst_105 : f32 to vector<32x128xf32>
    %cst_106 = arith.constant 1.010000e+00 : f32
    %213 = vector.broadcast %cst_106 : f32 to vector<32x128xf32>
    %214 = arith.mulf %208, %213 : vector<32x128xf32>
    %cst_107 = arith.constant 2.000000e+00 : f32
    %215 = vector.broadcast %cst_107 : f32 to vector<32x128xf32>
    %216 = arith.mulf %215, %198 : vector<32x128xf32>
    %217 = arith.addf %216, %205 : vector<32x128xf32>
    %cst_108 = arith.constant 0.000000e+00 : f32
    %cst_109 = arith.constant 1.499900e+01 : f32
    %218 = vector.broadcast %cst_108 : f32 to vector<32x128xf32>
    %219 = arith.maximumf %218, %217 : vector<32x128xf32>
    %220 = vector.broadcast %cst_109 : f32 to vector<32x128xf32>
    %221 = arith.minimumf %220, %219 : vector<32x128xf32>
    %cst_110 = arith.constant 2.000000e+00 : f32
    %222 = vector.broadcast %cst_110 : f32 to vector<32x128xf32>
    %223 = arith.mulf %222, %200 : vector<32x128xf32>
    %224 = arith.addf %223, %204 : vector<32x128xf32>
    %cst_111 = arith.constant 0.000000e+00 : f32
    %cst_112 = arith.constant 1.499900e+01 : f32
    %225 = vector.broadcast %cst_111 : f32 to vector<32x128xf32>
    %226 = arith.maximumf %225, %224 : vector<32x128xf32>
    %227 = vector.broadcast %cst_112 : f32 to vector<32x128xf32>
    %228 = arith.minimumf %227, %226 : vector<32x128xf32>
    %229 = arith.fptosi %221 : vector<32x128xf32> to vector<32x128xi32>
    %230 = arith.fptosi %228 : vector<32x128xf32> to vector<32x128xi32>
    %231 = arith.sitofp %229 : vector<32x128xi32> to vector<32x128xf32>
    %232 = arith.subf %221, %231 : vector<32x128xf32>
    %233 = arith.sitofp %230 : vector<32x128xi32> to vector<32x128xf32>
    %234 = arith.subf %228, %233 : vector<32x128xf32>
    %235 = arith.subi %229, %138 : vector<32x128xi32>
    %236 = arith.subi %230, %203 : vector<32x128xi32>
    %c-1_i32 = arith.constant -1 : i32
    %237 = vector.broadcast %c-1_i32 : i32 to vector<32x128xi32>
    %238 = arith.cmpi eq, %236, %237 : vector<32x128xi32>
    %239 = arith.select %238, %207, %212 : vector<32x128xi1>, vector<32x128xf32>
    %240 = arith.select %238, %208, %212 : vector<32x128xi1>, vector<32x128xf32>
    %c0_i32_113 = arith.constant 0 : i32
    %241 = vector.broadcast %c0_i32_113 : i32 to vector<32x128xi32>
    %242 = arith.cmpi eq, %236, %241 : vector<32x128xi32>
    %243 = arith.select %242, %208, %239 : vector<32x128xi1>, vector<32x128xf32>
    %244 = arith.select %242, %209, %240 : vector<32x128xi1>, vector<32x128xf32>
    %c1_i32_114 = arith.constant 1 : i32
    %245 = vector.broadcast %c1_i32_114 : i32 to vector<32x128xi32>
    %246 = arith.cmpi eq, %236, %245 : vector<32x128xi32>
    %247 = arith.select %246, %209, %243 : vector<32x128xi1>, vector<32x128xf32>
    %248 = arith.select %246, %210, %244 : vector<32x128xi1>, vector<32x128xf32>
    %c2_i32_115 = arith.constant 2 : i32
    %249 = vector.broadcast %c2_i32_115 : i32 to vector<32x128xi32>
    %250 = arith.cmpi eq, %236, %249 : vector<32x128xi32>
    %251 = arith.select %250, %210, %247 : vector<32x128xi1>, vector<32x128xf32>
    %252 = arith.select %250, %211, %248 : vector<32x128xi1>, vector<32x128xf32>
    %c2_i32_116 = arith.constant 2 : i32
    %253 = tpu.dynamic_rotate %251 by %c2_i32_116 dim 1 : vector<32x128xf32>, i32 -> vector<32x128xf32>
    %c1_i32_117 = arith.constant 1 : i32
    %254 = tpu.dynamic_rotate %251 by %c1_i32_117 dim 1 : vector<32x128xf32>, i32 -> vector<32x128xf32>
    %c127_i32_118 = arith.constant 127 : i32
    %255 = tpu.dynamic_rotate %251 by %c127_i32_118 dim 1 : vector<32x128xf32>, i32 -> vector<32x128xf32>
    %c126_i32_119 = arith.constant 126 : i32
    %256 = tpu.dynamic_rotate %251 by %c126_i32_119 dim 1 : vector<32x128xf32>, i32 -> vector<32x128xf32>
    %c125_i32_120 = arith.constant 125 : i32
    %257 = tpu.dynamic_rotate %251 by %c125_i32_120 dim 1 : vector<32x128xf32>, i32 -> vector<32x128xf32>
    %c2_i32_121 = arith.constant 2 : i32
    %258 = tpu.dynamic_rotate %252 by %c2_i32_121 dim 1 : vector<32x128xf32>, i32 -> vector<32x128xf32>
    %c1_i32_122 = arith.constant 1 : i32
    %259 = tpu.dynamic_rotate %252 by %c1_i32_122 dim 1 : vector<32x128xf32>, i32 -> vector<32x128xf32>
    %c127_i32_123 = arith.constant 127 : i32
    %260 = tpu.dynamic_rotate %252 by %c127_i32_123 dim 1 : vector<32x128xf32>, i32 -> vector<32x128xf32>
    %c126_i32_124 = arith.constant 126 : i32
    %261 = tpu.dynamic_rotate %252 by %c126_i32_124 dim 1 : vector<32x128xf32>, i32 -> vector<32x128xf32>
    %c125_i32_125 = arith.constant 125 : i32
    %262 = tpu.dynamic_rotate %252 by %c125_i32_125 dim 1 : vector<32x128xf32>, i32 -> vector<32x128xf32>
    %c-2_i32 = arith.constant -2 : i32
    %263 = vector.broadcast %c-2_i32 : i32 to vector<32x128xi32>
    %264 = arith.cmpi eq, %235, %263 : vector<32x128xi32>
    %265 = arith.select %264, %253, %212 : vector<32x128xi1>, vector<32x128xf32>
    %266 = arith.select %264, %254, %212 : vector<32x128xi1>, vector<32x128xf32>
    %267 = arith.select %264, %258, %212 : vector<32x128xi1>, vector<32x128xf32>
    %268 = arith.select %264, %259, %212 : vector<32x128xi1>, vector<32x128xf32>
    %c-1_i32_126 = arith.constant -1 : i32
    %269 = vector.broadcast %c-1_i32_126 : i32 to vector<32x128xi32>
    %270 = arith.cmpi eq, %235, %269 : vector<32x128xi32>
    %271 = arith.select %270, %254, %265 : vector<32x128xi1>, vector<32x128xf32>
    %272 = arith.select %270, %251, %266 : vector<32x128xi1>, vector<32x128xf32>
    %273 = arith.select %270, %259, %267 : vector<32x128xi1>, vector<32x128xf32>
    %274 = arith.select %270, %252, %268 : vector<32x128xi1>, vector<32x128xf32>
    %c0_i32_127 = arith.constant 0 : i32
    %275 = vector.broadcast %c0_i32_127 : i32 to vector<32x128xi32>
    %276 = arith.cmpi eq, %235, %275 : vector<32x128xi32>
    %277 = arith.select %276, %251, %271 : vector<32x128xi1>, vector<32x128xf32>
    %278 = arith.select %276, %255, %272 : vector<32x128xi1>, vector<32x128xf32>
    %279 = arith.select %276, %252, %273 : vector<32x128xi1>, vector<32x128xf32>
    %280 = arith.select %276, %260, %274 : vector<32x128xi1>, vector<32x128xf32>
    %c1_i32_128 = arith.constant 1 : i32
    %281 = vector.broadcast %c1_i32_128 : i32 to vector<32x128xi32>
    %282 = arith.cmpi eq, %235, %281 : vector<32x128xi32>
    %283 = arith.select %282, %255, %277 : vector<32x128xi1>, vector<32x128xf32>
    %284 = arith.select %282, %256, %278 : vector<32x128xi1>, vector<32x128xf32>
    %285 = arith.select %282, %260, %279 : vector<32x128xi1>, vector<32x128xf32>
    %286 = arith.select %282, %261, %280 : vector<32x128xi1>, vector<32x128xf32>
    %c2_i32_129 = arith.constant 2 : i32
    %287 = vector.broadcast %c2_i32_129 : i32 to vector<32x128xi32>
    %288 = arith.cmpi eq, %235, %287 : vector<32x128xi32>
    %289 = arith.select %288, %256, %283 : vector<32x128xi1>, vector<32x128xf32>
    %290 = arith.select %288, %257, %284 : vector<32x128xi1>, vector<32x128xf32>
    %291 = arith.select %288, %261, %285 : vector<32x128xi1>, vector<32x128xf32>
    %292 = arith.select %288, %262, %286 : vector<32x128xi1>, vector<32x128xf32>
    %cst_130 = arith.constant 1.000000e+00 : f32
    %293 = vector.broadcast %cst_130 : f32 to vector<32x128xf32>
    %294 = arith.subf %293, %232 : vector<32x128xf32>
    %295 = arith.mulf %289, %294 : vector<32x128xf32>
    %296 = arith.mulf %290, %232 : vector<32x128xf32>
    %297 = arith.addf %295, %296 : vector<32x128xf32>
    %cst_131 = arith.constant 1.000000e+00 : f32
    %298 = vector.broadcast %cst_131 : f32 to vector<32x128xf32>
    %299 = arith.subf %298, %234 : vector<32x128xf32>
    %300 = arith.mulf %297, %299 : vector<32x128xf32>
    %301 = arith.mulf %291, %294 : vector<32x128xf32>
    %302 = arith.mulf %292, %232 : vector<32x128xf32>
    %303 = arith.addf %301, %302 : vector<32x128xf32>
    %304 = arith.mulf %303, %234 : vector<32x128xf32>
    %305 = arith.addf %300, %304 : vector<32x128xf32>
    %306 = arith.cmpf olt, %214, %305 : vector<32x128xf32>
    %cst_132 = arith.constant 1.000000e+00 : f32
    %307 = vector.broadcast %cst_132 : f32 to vector<32x128xf32>
    %308 = arith.mulf %307, %198 : vector<32x128xf32>
    %309 = arith.addf %308, %205 : vector<32x128xf32>
    %cst_133 = arith.constant 0.000000e+00 : f32
    %cst_134 = arith.constant 1.499900e+01 : f32
    %310 = vector.broadcast %cst_133 : f32 to vector<32x128xf32>
    %311 = arith.maximumf %310, %309 : vector<32x128xf32>
    %312 = vector.broadcast %cst_134 : f32 to vector<32x128xf32>
    %313 = arith.minimumf %312, %311 : vector<32x128xf32>
    %cst_135 = arith.constant 1.000000e+00 : f32
    %314 = vector.broadcast %cst_135 : f32 to vector<32x128xf32>
    %315 = arith.mulf %314, %200 : vector<32x128xf32>
    %316 = arith.addf %315, %204 : vector<32x128xf32>
    %cst_136 = arith.constant 0.000000e+00 : f32
    %cst_137 = arith.constant 1.499900e+01 : f32
    %317 = vector.broadcast %cst_136 : f32 to vector<32x128xf32>
    %318 = arith.maximumf %317, %316 : vector<32x128xf32>
    %319 = vector.broadcast %cst_137 : f32 to vector<32x128xf32>
    %320 = arith.minimumf %319, %318 : vector<32x128xf32>
    %321 = arith.fptosi %313 : vector<32x128xf32> to vector<32x128xi32>
    %322 = arith.fptosi %320 : vector<32x128xf32> to vector<32x128xi32>
    %323 = arith.sitofp %321 : vector<32x128xi32> to vector<32x128xf32>
    %324 = arith.subf %313, %323 : vector<32x128xf32>
    %325 = arith.sitofp %322 : vector<32x128xi32> to vector<32x128xf32>
    %326 = arith.subf %320, %325 : vector<32x128xf32>
    %327 = arith.subi %321, %138 : vector<32x128xi32>
    %328 = arith.subi %322, %203 : vector<32x128xi32>
    %c-1_i32_138 = arith.constant -1 : i32
    %329 = vector.broadcast %c-1_i32_138 : i32 to vector<32x128xi32>
    %330 = arith.cmpi eq, %328, %329 : vector<32x128xi32>
    %331 = arith.select %330, %207, %212 : vector<32x128xi1>, vector<32x128xf32>
    %332 = arith.select %330, %208, %212 : vector<32x128xi1>, vector<32x128xf32>
    %c0_i32_139 = arith.constant 0 : i32
    %333 = vector.broadcast %c0_i32_139 : i32 to vector<32x128xi32>
    %334 = arith.cmpi eq, %328, %333 : vector<32x128xi32>
    %335 = arith.select %334, %208, %331 : vector<32x128xi1>, vector<32x128xf32>
    %336 = arith.select %334, %209, %332 : vector<32x128xi1>, vector<32x128xf32>
    %c1_i32_140 = arith.constant 1 : i32
    %337 = vector.broadcast %c1_i32_140 : i32 to vector<32x128xi32>
    %338 = arith.cmpi eq, %328, %337 : vector<32x128xi32>
    %339 = arith.select %338, %209, %335 : vector<32x128xi1>, vector<32x128xf32>
    %340 = arith.select %338, %210, %336 : vector<32x128xi1>, vector<32x128xf32>
    %c1_i32_141 = arith.constant 1 : i32
    %341 = tpu.dynamic_rotate %339 by %c1_i32_141 dim 1 : vector<32x128xf32>, i32 -> vector<32x128xf32>
    %c127_i32_142 = arith.constant 127 : i32
    %342 = tpu.dynamic_rotate %339 by %c127_i32_142 dim 1 : vector<32x128xf32>, i32 -> vector<32x128xf32>
    %c126_i32_143 = arith.constant 126 : i32
    %343 = tpu.dynamic_rotate %339 by %c126_i32_143 dim 1 : vector<32x128xf32>, i32 -> vector<32x128xf32>
    %c1_i32_144 = arith.constant 1 : i32
    %344 = tpu.dynamic_rotate %340 by %c1_i32_144 dim 1 : vector<32x128xf32>, i32 -> vector<32x128xf32>
    %c127_i32_145 = arith.constant 127 : i32
    %345 = tpu.dynamic_rotate %340 by %c127_i32_145 dim 1 : vector<32x128xf32>, i32 -> vector<32x128xf32>
    %c126_i32_146 = arith.constant 126 : i32
    %346 = tpu.dynamic_rotate %340 by %c126_i32_146 dim 1 : vector<32x128xf32>, i32 -> vector<32x128xf32>
    %c-1_i32_147 = arith.constant -1 : i32
    %347 = vector.broadcast %c-1_i32_147 : i32 to vector<32x128xi32>
    %348 = arith.cmpi eq, %327, %347 : vector<32x128xi32>
    %349 = arith.select %348, %341, %212 : vector<32x128xi1>, vector<32x128xf32>
    %350 = arith.select %348, %339, %212 : vector<32x128xi1>, vector<32x128xf32>
    %351 = arith.select %348, %344, %212 : vector<32x128xi1>, vector<32x128xf32>
    %352 = arith.select %348, %340, %212 : vector<32x128xi1>, vector<32x128xf32>
    %c0_i32_148 = arith.constant 0 : i32
    %353 = vector.broadcast %c0_i32_148 : i32 to vector<32x128xi32>
    %354 = arith.cmpi eq, %327, %353 : vector<32x128xi32>
    %355 = arith.select %354, %339, %349 : vector<32x128xi1>, vector<32x128xf32>
    %356 = arith.select %354, %342, %350 : vector<32x128xi1>, vector<32x128xf32>
    %357 = arith.select %354, %340, %351 : vector<32x128xi1>, vector<32x128xf32>
    %358 = arith.select %354, %345, %352 : vector<32x128xi1>, vector<32x128xf32>
    %c1_i32_149 = arith.constant 1 : i32
    %359 = vector.broadcast %c1_i32_149 : i32 to vector<32x128xi32>
    %360 = arith.cmpi eq, %327, %359 : vector<32x128xi32>
    %361 = arith.select %360, %342, %355 : vector<32x128xi1>, vector<32x128xf32>
    %362 = arith.select %360, %343, %356 : vector<32x128xi1>, vector<32x128xf32>
    %363 = arith.select %360, %345, %357 : vector<32x128xi1>, vector<32x128xf32>
    %364 = arith.select %360, %346, %358 : vector<32x128xi1>, vector<32x128xf32>
    %cst_150 = arith.constant 1.000000e+00 : f32
    %365 = vector.broadcast %cst_150 : f32 to vector<32x128xf32>
    %366 = arith.subf %365, %324 : vector<32x128xf32>
    %367 = arith.mulf %361, %366 : vector<32x128xf32>
    %368 = arith.mulf %362, %324 : vector<32x128xf32>
    %369 = arith.addf %367, %368 : vector<32x128xf32>
    %cst_151 = arith.constant 1.000000e+00 : f32
    %370 = vector.broadcast %cst_151 : f32 to vector<32x128xf32>
    %371 = arith.subf %370, %326 : vector<32x128xf32>
    %372 = arith.mulf %369, %371 : vector<32x128xf32>
    %373 = arith.mulf %363, %366 : vector<32x128xf32>
    %374 = arith.mulf %364, %324 : vector<32x128xf32>
    %375 = arith.addf %373, %374 : vector<32x128xf32>
    %376 = arith.mulf %375, %326 : vector<32x128xf32>
    %377 = arith.addf %372, %376 : vector<32x128xf32>
    %378 = arith.cmpf olt, %214, %377 : vector<32x128xf32>
    %379 = arith.ori %306, %378 : vector<32x128xi1>
    %cst_152 = arith.constant -2.000000e+00 : f32
    %380 = vector.broadcast %cst_152 : f32 to vector<32x128xf32>
    %381 = arith.mulf %380, %198 : vector<32x128xf32>
    %382 = arith.addf %381, %205 : vector<32x128xf32>
    %cst_153 = arith.constant 0.000000e+00 : f32
    %cst_154 = arith.constant 1.499900e+01 : f32
    %383 = vector.broadcast %cst_153 : f32 to vector<32x128xf32>
    %384 = arith.maximumf %383, %382 : vector<32x128xf32>
    %385 = vector.broadcast %cst_154 : f32 to vector<32x128xf32>
    %386 = arith.minimumf %385, %384 : vector<32x128xf32>
    %cst_155 = arith.constant -2.000000e+00 : f32
    %387 = vector.broadcast %cst_155 : f32 to vector<32x128xf32>
    %388 = arith.mulf %387, %200 : vector<32x128xf32>
    %389 = arith.addf %388, %204 : vector<32x128xf32>
    %cst_156 = arith.constant 0.000000e+00 : f32
    %cst_157 = arith.constant 1.499900e+01 : f32
    %390 = vector.broadcast %cst_156 : f32 to vector<32x128xf32>
    %391 = arith.maximumf %390, %389 : vector<32x128xf32>
    %392 = vector.broadcast %cst_157 : f32 to vector<32x128xf32>
    %393 = arith.minimumf %392, %391 : vector<32x128xf32>
    %394 = arith.fptosi %386 : vector<32x128xf32> to vector<32x128xi32>
    %395 = arith.fptosi %393 : vector<32x128xf32> to vector<32x128xi32>
    %396 = arith.sitofp %394 : vector<32x128xi32> to vector<32x128xf32>
    %397 = arith.subf %386, %396 : vector<32x128xf32>
    %398 = arith.sitofp %395 : vector<32x128xi32> to vector<32x128xf32>
    %399 = arith.subf %393, %398 : vector<32x128xf32>
    %400 = arith.subi %394, %138 : vector<32x128xi32>
    %401 = arith.subi %395, %203 : vector<32x128xi32>
    %c-2_i32_158 = arith.constant -2 : i32
    %402 = vector.broadcast %c-2_i32_158 : i32 to vector<32x128xi32>
    %403 = arith.cmpi eq, %401, %402 : vector<32x128xi32>
    %404 = arith.select %403, %206, %212 : vector<32x128xi1>, vector<32x128xf32>
    %405 = arith.select %403, %207, %212 : vector<32x128xi1>, vector<32x128xf32>
    %c-1_i32_159 = arith.constant -1 : i32
    %406 = vector.broadcast %c-1_i32_159 : i32 to vector<32x128xi32>
    %407 = arith.cmpi eq, %401, %406 : vector<32x128xi32>
    %408 = arith.select %407, %207, %404 : vector<32x128xi1>, vector<32x128xf32>
    %409 = arith.select %407, %208, %405 : vector<32x128xi1>, vector<32x128xf32>
    %c0_i32_160 = arith.constant 0 : i32
    %410 = vector.broadcast %c0_i32_160 : i32 to vector<32x128xi32>
    %411 = arith.cmpi eq, %401, %410 : vector<32x128xi32>
    %412 = arith.select %411, %208, %408 : vector<32x128xi1>, vector<32x128xf32>
    %413 = arith.select %411, %209, %409 : vector<32x128xi1>, vector<32x128xf32>
    %c2_i32_161 = arith.constant 2 : i32
    %414 = tpu.dynamic_rotate %412 by %c2_i32_161 dim 1 : vector<32x128xf32>, i32 -> vector<32x128xf32>
    %c1_i32_162 = arith.constant 1 : i32
    %415 = tpu.dynamic_rotate %412 by %c1_i32_162 dim 1 : vector<32x128xf32>, i32 -> vector<32x128xf32>
    %c127_i32_163 = arith.constant 127 : i32
    %416 = tpu.dynamic_rotate %412 by %c127_i32_163 dim 1 : vector<32x128xf32>, i32 -> vector<32x128xf32>
    %c126_i32_164 = arith.constant 126 : i32
    %417 = tpu.dynamic_rotate %412 by %c126_i32_164 dim 1 : vector<32x128xf32>, i32 -> vector<32x128xf32>
    %c125_i32_165 = arith.constant 125 : i32
    %418 = tpu.dynamic_rotate %412 by %c125_i32_165 dim 1 : vector<32x128xf32>, i32 -> vector<32x128xf32>
    %c2_i32_166 = arith.constant 2 : i32
    %419 = tpu.dynamic_rotate %413 by %c2_i32_166 dim 1 : vector<32x128xf32>, i32 -> vector<32x128xf32>
    %c1_i32_167 = arith.constant 1 : i32
    %420 = tpu.dynamic_rotate %413 by %c1_i32_167 dim 1 : vector<32x128xf32>, i32 -> vector<32x128xf32>
    %c127_i32_168 = arith.constant 127 : i32
    %421 = tpu.dynamic_rotate %413 by %c127_i32_168 dim 1 : vector<32x128xf32>, i32 -> vector<32x128xf32>
    %c126_i32_169 = arith.constant 126 : i32
    %422 = tpu.dynamic_rotate %413 by %c126_i32_169 dim 1 : vector<32x128xf32>, i32 -> vector<32x128xf32>
    %c125_i32_170 = arith.constant 125 : i32
    %423 = tpu.dynamic_rotate %413 by %c125_i32_170 dim 1 : vector<32x128xf32>, i32 -> vector<32x128xf32>
    %c-2_i32_171 = arith.constant -2 : i32
    %424 = vector.broadcast %c-2_i32_171 : i32 to vector<32x128xi32>
    %425 = arith.cmpi eq, %400, %424 : vector<32x128xi32>
    %426 = arith.select %425, %414, %212 : vector<32x128xi1>, vector<32x128xf32>
    %427 = arith.select %425, %415, %212 : vector<32x128xi1>, vector<32x128xf32>
    %428 = arith.select %425, %419, %212 : vector<32x128xi1>, vector<32x128xf32>
    %429 = arith.select %425, %420, %212 : vector<32x128xi1>, vector<32x128xf32>
    %c-1_i32_172 = arith.constant -1 : i32
    %430 = vector.broadcast %c-1_i32_172 : i32 to vector<32x128xi32>
    %431 = arith.cmpi eq, %400, %430 : vector<32x128xi32>
    %432 = arith.select %431, %415, %426 : vector<32x128xi1>, vector<32x128xf32>
    %433 = arith.select %431, %412, %427 : vector<32x128xi1>, vector<32x128xf32>
    %434 = arith.select %431, %420, %428 : vector<32x128xi1>, vector<32x128xf32>
    %435 = arith.select %431, %413, %429 : vector<32x128xi1>, vector<32x128xf32>
    %c0_i32_173 = arith.constant 0 : i32
    %436 = vector.broadcast %c0_i32_173 : i32 to vector<32x128xi32>
    %437 = arith.cmpi eq, %400, %436 : vector<32x128xi32>
    %438 = arith.select %437, %412, %432 : vector<32x128xi1>, vector<32x128xf32>
    %439 = arith.select %437, %416, %433 : vector<32x128xi1>, vector<32x128xf32>
    %440 = arith.select %437, %413, %434 : vector<32x128xi1>, vector<32x128xf32>
    %441 = arith.select %437, %421, %435 : vector<32x128xi1>, vector<32x128xf32>
    %c1_i32_174 = arith.constant 1 : i32
    %442 = vector.broadcast %c1_i32_174 : i32 to vector<32x128xi32>
    %443 = arith.cmpi eq, %400, %442 : vector<32x128xi32>
    %444 = arith.select %443, %416, %438 : vector<32x128xi1>, vector<32x128xf32>
    %445 = arith.select %443, %417, %439 : vector<32x128xi1>, vector<32x128xf32>
    %446 = arith.select %443, %421, %440 : vector<32x128xi1>, vector<32x128xf32>
    %447 = arith.select %443, %422, %441 : vector<32x128xi1>, vector<32x128xf32>
    %c2_i32_175 = arith.constant 2 : i32
    %448 = vector.broadcast %c2_i32_175 : i32 to vector<32x128xi32>
    %449 = arith.cmpi eq, %400, %448 : vector<32x128xi32>
    %450 = arith.select %449, %417, %444 : vector<32x128xi1>, vector<32x128xf32>
    %451 = arith.select %449, %418, %445 : vector<32x128xi1>, vector<32x128xf32>
    %452 = arith.select %449, %422, %446 : vector<32x128xi1>, vector<32x128xf32>
    %453 = arith.select %449, %423, %447 : vector<32x128xi1>, vector<32x128xf32>
    %cst_176 = arith.constant 1.000000e+00 : f32
    %454 = vector.broadcast %cst_176 : f32 to vector<32x128xf32>
    %455 = arith.subf %454, %397 : vector<32x128xf32>
    %456 = arith.mulf %450, %455 : vector<32x128xf32>
    %457 = arith.mulf %451, %397 : vector<32x128xf32>
    %458 = arith.addf %456, %457 : vector<32x128xf32>
    %cst_177 = arith.constant 1.000000e+00 : f32
    %459 = vector.broadcast %cst_177 : f32 to vector<32x128xf32>
    %460 = arith.subf %459, %399 : vector<32x128xf32>
    %461 = arith.mulf %458, %460 : vector<32x128xf32>
    %462 = arith.mulf %452, %455 : vector<32x128xf32>
    %463 = arith.mulf %453, %397 : vector<32x128xf32>
    %464 = arith.addf %462, %463 : vector<32x128xf32>
    %465 = arith.mulf %464, %399 : vector<32x128xf32>
    %466 = arith.addf %461, %465 : vector<32x128xf32>
    %467 = arith.cmpf olt, %214, %466 : vector<32x128xf32>
    %468 = arith.ori %379, %467 : vector<32x128xi1>
    %cst_178 = arith.constant -1.000000e+00 : f32
    %469 = vector.broadcast %cst_178 : f32 to vector<32x128xf32>
    %470 = arith.mulf %469, %198 : vector<32x128xf32>
    %471 = arith.addf %470, %205 : vector<32x128xf32>
    %cst_179 = arith.constant 0.000000e+00 : f32
    %cst_180 = arith.constant 1.499900e+01 : f32
    %472 = vector.broadcast %cst_179 : f32 to vector<32x128xf32>
    %473 = arith.maximumf %472, %471 : vector<32x128xf32>
    %474 = vector.broadcast %cst_180 : f32 to vector<32x128xf32>
    %475 = arith.minimumf %474, %473 : vector<32x128xf32>
    %cst_181 = arith.constant -1.000000e+00 : f32
    %476 = vector.broadcast %cst_181 : f32 to vector<32x128xf32>
    %477 = arith.mulf %476, %200 : vector<32x128xf32>
    %478 = arith.addf %477, %204 : vector<32x128xf32>
    %cst_182 = arith.constant 0.000000e+00 : f32
    %cst_183 = arith.constant 1.499900e+01 : f32
    %479 = vector.broadcast %cst_182 : f32 to vector<32x128xf32>
    %480 = arith.maximumf %479, %478 : vector<32x128xf32>
    %481 = vector.broadcast %cst_183 : f32 to vector<32x128xf32>
    %482 = arith.minimumf %481, %480 : vector<32x128xf32>
    %483 = arith.fptosi %475 : vector<32x128xf32> to vector<32x128xi32>
    %484 = arith.fptosi %482 : vector<32x128xf32> to vector<32x128xi32>
    %485 = arith.sitofp %483 : vector<32x128xi32> to vector<32x128xf32>
    %486 = arith.subf %475, %485 : vector<32x128xf32>
    %487 = arith.sitofp %484 : vector<32x128xi32> to vector<32x128xf32>
    %488 = arith.subf %482, %487 : vector<32x128xf32>
    %489 = arith.subi %483, %138 : vector<32x128xi32>
    %490 = arith.subi %484, %203 : vector<32x128xi32>
    %c-1_i32_184 = arith.constant -1 : i32
    %491 = vector.broadcast %c-1_i32_184 : i32 to vector<32x128xi32>
    %492 = arith.cmpi eq, %490, %491 : vector<32x128xi32>
    %493 = arith.select %492, %207, %212 : vector<32x128xi1>, vector<32x128xf32>
    %494 = arith.select %492, %208, %212 : vector<32x128xi1>, vector<32x128xf32>
    %c0_i32_185 = arith.constant 0 : i32
    %495 = vector.broadcast %c0_i32_185 : i32 to vector<32x128xi32>
    %496 = arith.cmpi eq, %490, %495 : vector<32x128xi32>
    %497 = arith.select %496, %208, %493 : vector<32x128xi1>, vector<32x128xf32>
    %498 = arith.select %496, %209, %494 : vector<32x128xi1>, vector<32x128xf32>
    %c1_i32_186 = arith.constant 1 : i32
    %499 = tpu.dynamic_rotate %497 by %c1_i32_186 dim 1 : vector<32x128xf32>, i32 -> vector<32x128xf32>
    %c127_i32_187 = arith.constant 127 : i32
    %500 = tpu.dynamic_rotate %497 by %c127_i32_187 dim 1 : vector<32x128xf32>, i32 -> vector<32x128xf32>
    %c126_i32_188 = arith.constant 126 : i32
    %501 = tpu.dynamic_rotate %497 by %c126_i32_188 dim 1 : vector<32x128xf32>, i32 -> vector<32x128xf32>
    %c1_i32_189 = arith.constant 1 : i32
    %502 = tpu.dynamic_rotate %498 by %c1_i32_189 dim 1 : vector<32x128xf32>, i32 -> vector<32x128xf32>
    %c127_i32_190 = arith.constant 127 : i32
    %503 = tpu.dynamic_rotate %498 by %c127_i32_190 dim 1 : vector<32x128xf32>, i32 -> vector<32x128xf32>
    %c126_i32_191 = arith.constant 126 : i32
    %504 = tpu.dynamic_rotate %498 by %c126_i32_191 dim 1 : vector<32x128xf32>, i32 -> vector<32x128xf32>
    %c-1_i32_192 = arith.constant -1 : i32
    %505 = vector.broadcast %c-1_i32_192 : i32 to vector<32x128xi32>
    %506 = arith.cmpi eq, %489, %505 : vector<32x128xi32>
    %507 = arith.select %506, %499, %212 : vector<32x128xi1>, vector<32x128xf32>
    %508 = arith.select %506, %497, %212 : vector<32x128xi1>, vector<32x128xf32>
    %509 = arith.select %506, %502, %212 : vector<32x128xi1>, vector<32x128xf32>
    %510 = arith.select %506, %498, %212 : vector<32x128xi1>, vector<32x128xf32>
    %c0_i32_193 = arith.constant 0 : i32
    %511 = vector.broadcast %c0_i32_193 : i32 to vector<32x128xi32>
    %512 = arith.cmpi eq, %489, %511 : vector<32x128xi32>
    %513 = arith.select %512, %497, %507 : vector<32x128xi1>, vector<32x128xf32>
    %514 = arith.select %512, %500, %508 : vector<32x128xi1>, vector<32x128xf32>
    %515 = arith.select %512, %498, %509 : vector<32x128xi1>, vector<32x128xf32>
    %516 = arith.select %512, %503, %510 : vector<32x128xi1>, vector<32x128xf32>
    %c1_i32_194 = arith.constant 1 : i32
    %517 = vector.broadcast %c1_i32_194 : i32 to vector<32x128xi32>
    %518 = arith.cmpi eq, %489, %517 : vector<32x128xi32>
    %519 = arith.select %518, %500, %513 : vector<32x128xi1>, vector<32x128xf32>
    %520 = arith.select %518, %501, %514 : vector<32x128xi1>, vector<32x128xf32>
    %521 = arith.select %518, %503, %515 : vector<32x128xi1>, vector<32x128xf32>
    %522 = arith.select %518, %504, %516 : vector<32x128xi1>, vector<32x128xf32>
    %cst_195 = arith.constant 1.000000e+00 : f32
    %523 = vector.broadcast %cst_195 : f32 to vector<32x128xf32>
    %524 = arith.subf %523, %486 : vector<32x128xf32>
    %525 = arith.mulf %519, %524 : vector<32x128xf32>
    %526 = arith.mulf %520, %486 : vector<32x128xf32>
    %527 = arith.addf %525, %526 : vector<32x128xf32>
    %cst_196 = arith.constant 1.000000e+00 : f32
    %528 = vector.broadcast %cst_196 : f32 to vector<32x128xf32>
    %529 = arith.subf %528, %488 : vector<32x128xf32>
    %530 = arith.mulf %527, %529 : vector<32x128xf32>
    %531 = arith.mulf %521, %524 : vector<32x128xf32>
    %532 = arith.mulf %522, %486 : vector<32x128xf32>
    %533 = arith.addf %531, %532 : vector<32x128xf32>
    %534 = arith.mulf %533, %488 : vector<32x128xf32>
    %535 = arith.addf %530, %534 : vector<32x128xf32>
    %536 = arith.cmpf olt, %214, %535 : vector<32x128xf32>
    %537 = arith.ori %468, %536 : vector<32x128xi1>
    %cst_197 = arith.constant 0.000000e+00 : f32
    %538 = vector.broadcast %cst_197 : f32 to vector<32x128xf32>
    %539 = arith.select %537, %538, %208 : vector<32x128xi1>, vector<32x128xf32>
    %c0_198 = arith.constant 0 : index
    %c0_199 = arith.constant 0 : index
    %540 = vector.load %arg2[%c0_198, %c0_199] : memref<32x128xf32, #tpu.memory_space<vmem>>, vector<32x128xf32>
    tpu.vector_store %arg2[%c0_198, %c0_199], %539 {strides = array<i32>} : memref<32x128xf32, #tpu.memory_space<vmem>>, vector<32x128xf32>,
    %c0_i32_200 = arith.constant 0 : i32
    %c1_i32_201 = arith.constant 1 : i32
    %541 = vector.broadcast %c0_i32_200 : i32 to vector<32x128xi32>
    %542 = vector.broadcast %c1_i32_201 : i32 to vector<32x128xi32>
    %543 = arith.select %537, %541, %542 : vector<32x128xi1>, vector<32x128xi32>
    %544 = arith.trunci %543 : vector<32x128xi32> to vector<32x128xi8>
    %c0_202 = arith.constant 0 : index
    %c0_203 = arith.constant 0 : index
    %545 = vector.load %arg3[%c0_202, %c0_203] : memref<32x128xi8, #tpu.memory_space<vmem>>, vector<32x128xi8>
    tpu.vector_store %arg3[%c0_202, %c0_203], %544 {strides = array<i32>} : memref<32x128xi8, #tpu.memory_space<vmem>>, vector<32x128xi8>,
    return
  }
  func.func @transform_1(%arg0: i32) -> (i32, i32) {
    %c0_i32 = arith.constant 0 : i32
    %c0_i32_0 = arith.constant 0 : i32
    return %arg0, %c0_i32 : i32, i32
  }
  func.func @transform_2(%arg0: i32) -> (i32, i32) {
    %c0_i32 = arith.constant 0 : i32
    %c0_i32_0 = arith.constant 0 : i32
    return %arg0, %c0_i32 : i32, i32
  }
}

</mosaic_0001>

<llo_original>
// kernel: tpu_custom_call.1
$region0: #{tpu_custom_call.1}
  #allocation0 [shape = 'u32[]', space=smem, size = 0x4, offset = 0x4, fixed_abs, tag = 'smem constant byte address 0x4 - core index']
  #allocation1 [shape = 'u32[144,128]{1,0:T(1,128)}', space=vmem, size = 0x12000, scoped, tag = 'internal scratch']
  #allocation2 [shape = 'f32[48,128]{1,0:T(8,128)}', space=vmem, size = 0x6000, scoped, tag = 'scratch operand']
  #allocation3 [shape = 's32[1]{0}', space=sflag, size = 0x4, scoped, tag = 'scratch operand']
  #allocation4 [shape = 'f32[64,128]{1,0:T(8,128)}', space=vmem, size = 0x8000, scoped, tag = 'scratch operand']
  #allocation5 [shape = 'f32[48,128]{1,0:T(8,128)}', space=vmem, size = 0x6000, scoped, tag = 'scratch operand']
  #allocation10 [shape = 's32[]', space=sflag, size = 0x4, offset = 0, fixed_abs, tag = 'sflag constant byte address 0x0 - dummy sync flag']
  #allocation11 [shape = 's32[]', space=sflag, size = 0x4, offset = 0, fixed_abs, tag = 'sflag constant byte address 0x0 - dummy sync flag']
  #allocation12 [shape = 'u32[]', space=smem, size = 0x4, offset = 0x44, fixed_abs, tag = 'smem constant byte address 0x44 - assertion arg 0']
  #allocation13 [shape = 'u32[]', space=smem, size = 0x4, offset = 0x48, fixed_abs, tag = 'smem constant byte address 0x48 - assertion arg 1']
  %s0 = inlined_call_operand.hbm [shape: f32[48,128], index: 0, kind: input, shape index: {}]
  %s1 = inlined_call_operand.hbm [shape: f32[32,128], index: 1, kind: output, shape index: {0}]
  %s2 = inlined_call_operand.hbm [shape: s8[32,128], index: 2, kind: output, shape index: {1}]
  %3 = xla_tuple %s1, %s2
  %s4 = sld [smem:[#allocation0]]
  $region30: #{tpu_custom_call.1} parent=0
    _
  %s6 = ssub.s32 1, %s4
  %s7 = scalar_select 0, %s6, %s4
  $region1: #{tpu_custom_call.1} parent=0
    #allocation6 [shape = 'u8[16384]{0}', space=vmem, size = 0x4000, scoped, tag = 'output window, operand 0, single buffered']
    #allocation7 [shape = 's32[1]{0}', space=sflag, size = 0x4, scoped, tag = 'scoped memory for tpu_custom_call.1']
    #allocation8 [shape = 'u8[4096]{0}', space=vmem, size = 0x1000, scoped, tag = 'output window, operand 1, single buffered']
    #allocation9 [shape = 's32[1]{0}', space=sflag, size = 0x4, scoped, tag = 'scoped memory for tpu_custom_call.1']
    %8 = vsyncpa [#allocation7], 0
    %9 = vsyncpa [#allocation9], 0
    %p10 = scmp.eq.s32.totalorder 0, 0
    %s11 = smul.u32 0, 32
    %s12 = smul.addr %s11, 16
    %s13 = scalar_lea.hbm %s0, %s12
    // Predicated region
    $region2: #{tpu_custom_call.1} parent=1 // pred_check
      _
    $region3: #{tpu_custom_call.1} parent=1 // pred_check_branch
      %15 = sbr.rel target = $region5
    $region4: #{tpu_custom_call.1} parent=1 // pred_region
      %16 = sst [smem:[#allocation12]] [#allocation11]
      %17 = sst [smem:[#allocation13]] [#allocation10]
    $region5: #{tpu_custom_call.1} parent=1 // pred_fallthru
      _
    %19 = shalt.err (0)
    %s21 = sshll.u32 [#allocation2], 4
    %s22 = int_to_ptr.vmem [resolvable:$true] %s21
    %24 = dma.hbm_to_vmem [thread:$0]  %s13, 768, %s22, [#allocation3]
    %s25 = smul.u32 48, 1
    %s26 = sshll.u32 %s25, 4
    %27 = dma.done [#allocation3], %s26
    %28 = vst [vmem:[#allocation4] sm:$0xff] 0.0
    %29 = vst [vmem:[#allocation4 + $0x38] sm:$0xff] 0.0
    %v30 = vld [vmem:[#allocation2] sm:$0xff]
    %v31 = vld [vmem:[#allocation2 + $0x8] sm:$0xff]
    %v32 = vld [vmem:[#allocation2 + $0x10] sm:$0xff]
    %v33 = vld [vmem:[#allocation2 + $0x18] sm:$0xff]
    %v34 = vld [vmem:[#allocation2 + $0x20] sm:$0xff]
    %v35 = vld [vmem:[#allocation2 + $0x28] sm:$0xff]
    %36 = vrot.lane.b32.xlu0 %v30, 1
    %v37 = vpop.permute.xlu0 %36
    %38 = vrot.lane.b32.xlu0 %v31, 1
    %v39 = vpop.permute.xlu0 %38
    %40 = vrot.lane.b32.xlu0 %v32, 1
    %v41 = vpop.permute.xlu0 %40
    %42 = vrot.lane.b32.xlu0 %v33, 1
    %v43 = vpop.permute.xlu0 %42
    %44 = vrot.lane.b32.xlu0 %v34, 1
    %v45 = vpop.permute.xlu0 %44
    %46 = vrot.lane.b32.xlu0 %v35, 1
    %v47 = vpop.permute.xlu0 %46
    %v48 = vmul.f32 %v37, 0.25
    %v49 = vmul.f32 %v39, 0.25
    %v50 = vmul.f32 %v41, 0.25
    %v51 = vmul.f32 %v43, 0.25
    %v52 = vmul.f32 %v45, 0.25
    %v53 = vmul.f32 %v47, 0.25
    %v54 = vmul.f32 %v30, 0.5
    %v55 = vmul.f32 %v31, 0.5
    %v56 = vmul.f32 %v32, 0.5
    %v57 = vmul.f32 %v33, 0.5
    %v58 = vmul.f32 %v34, 0.5
    %v59 = vmul.f32 %v35, 0.5
    %v60 = vadd.f32 %v48, %v54
    %v61 = vadd.f32 %v49, %v55
    %v62 = vadd.f32 %v50, %v56
    %v63 = vadd.f32 %v51, %v57
    %v64 = vadd.f32 %v52, %v58
    %v65 = vadd.f32 %v53, %v59
    %66 = vrot.lane.b32.xlu0 %v30, 127
    %v67 = vpop.permute.xlu0 %66
    %68 = vrot.lane.b32.xlu0 %v31, 127
    %v69 = vpop.permute.xlu0 %68
    %70 = vrot.lane.b32.xlu0 %v32, 127
    %v71 = vpop.permute.xlu0 %70
    %72 = vrot.lane.b32.xlu0 %v33, 127
    %v73 = vpop.permute.xlu0 %72
    %74 = vrot.lane.b32.xlu0 %v34, 127
    %v75 = vpop.permute.xlu0 %74
    %76 = vrot.lane.b32.xlu0 %v35, 127
    %v77 = vpop.permute.xlu0 %76
    %v78 = vmul.f32 %v67, 0.25
    %v79 = vmul.f32 %v69, 0.25
    %v80 = vmul.f32 %v71, 0.25
    %v81 = vmul.f32 %v73, 0.25
    %v82 = vmul.f32 %v75, 0.25
    %v83 = vmul.f32 %v77, 0.25
    %v84 = vadd.f32 %v60, %v78
    %v85 = vadd.f32 %v61, %v79
    %v86 = vadd.f32 %v62, %v80
    %v87 = vadd.f32 %v63, %v81
    %v88 = vadd.f32 %v64, %v82
    %v89 = vadd.f32 %v65, %v83
    %90 = vst [vmem:[#allocation4 + $0x8] sm:$0xff] %v84
    %91 = vst [vmem:[#allocation4 + $0x10] sm:$0xff] %v85
    %92 = vst [vmem:[#allocation4 + $0x18] sm:$0xff] %v86
    %93 = vst [vmem:[#allocation4 + $0x20] sm:$0xff] %v87
    %94 = vst [vmem:[#allocation4 + $0x28] sm:$0xff] %v88
    %95 = vst [vmem:[#allocation4 + $0x30] sm:$0xff] %v89
    %v96 = vld [vmem:[#allocation4 + $0x7] sm:$0xff]
    %v97 = vld [vmem:[#allocation4 + $0xf] sm:$0xff]
    %v98 = vld [vmem:[#allocation4 + $0x17] sm:$0xff]
    %v99 = vld [vmem:[#allocation4 + $0x1f] sm:$0xff]
    %v100 = vld [vmem:[#allocation4 + $0x27] sm:$0xff]
    %v101 = vld [vmem:[#allocation4 + $0x2f] sm:$0xff]
    %v102 = vmul.f32 %v96, 0.25
    %v103 = vmul.f32 %v97, 0.25
    %v104 = vmul.f32 %v98, 0.25
    %v105 = vmul.f32 %v99, 0.25
    %v106 = vmul.f32 %v100, 0.25
    %v107 = vmul.f32 %v101, 0.25
    %v108 = vmul.f32 %v84, 0.5
    %v109 = vmul.f32 %v85, 0.5
    %v110 = vmul.f32 %v86, 0.5
    %v111 = vmul.f32 %v87, 0.5
    %v112 = vmul.f32 %v88, 0.5
    %v113 = vmul.f32 %v89, 0.5
    %v114 = vadd.f32 %v102, %v108
    %v115 = vadd.f32 %v103, %v109
    %v116 = vadd.f32 %v104, %v110
    %v117 = vadd.f32 %v105, %v111
    %v118 = vadd.f32 %v106, %v112
    %v119 = vadd.f32 %v107, %v113
    %v120 = vld [vmem:[#allocation4 + $0x9] sm:$0xff]
    %v121 = vld [vmem:[#allocation4 + $0x11] sm:$0xff]
    %v122 = vld [vmem:[#allocation4 + $0x19] sm:$0xff]
    %v123 = vld [vmem:[#allocation4 + $0x21] sm:$0xff]
    %v124 = vld [vmem:[#allocation4 + $0x29] sm:$0xff]
    %v125 = vld [vmem:[#allocation4 + $0x31] sm:$0xff]
    %v126 = vmul.f32 %v120, 0.25
    %v127 = vmul.f32 %v121, 0.25
    %v128 = vmul.f32 %v122, 0.25
    %v129 = vmul.f32 %v123, 0.25
    %v130 = vmul.f32 %v124, 0.25
    %v131 = vmul.f32 %v125, 0.25
    %v132 = vadd.f32 %v114, %v126
    %v133 = vadd.f32 %v115, %v127
    %v134 = vadd.f32 %v116, %v128
    %v135 = vadd.f32 %v117, %v129
    %v136 = vadd.f32 %v118, %v130
    %v137 = vadd.f32 %v119, %v131
    %s138 = ssub.s32 %s11, 8
    %v139 = vlaneseq
    %v140 = vshrl.u32 %v139, 7
    %v141 = vadd.s32 %v140, 8
    %v142 = vadd.s32 %v140, 16
    %v143 = vadd.s32 %v140, 24
    %v144 = vadd.s32 %v140, 32
    %v145 = vadd.s32 %v140, 40
    %v146 = vstv %s138
    %v147 = vadd.s32 %v146, %v140
    %v148 = vadd.s32 %v146, %v141
    %v149 = vadd.s32 %v146, %v142
    %v150 = vadd.s32 %v146, %v143
    %v151 = vadd.s32 %v146, %v144
    %v152 = vadd.s32 %v146, %v145
    %v153 = vlaneseq
    %v154 = vand.u32 %v153, 127
    %vm155 = vcmp.ge.s32.totalorder %v147, 0
    %vm156 = vcmp.ge.s32.totalorder %v148, 0
    %vm157 = vcmp.ge.s32.totalorder %v149, 0
    %vm158 = vcmp.ge.s32.totalorder %v150, 0
    %vm159 = vcmp.ge.s32.totalorder %v151, 0
    %vm160 = vcmp.ge.s32.totalorder %v152, 0
    %vm161 = vcmp.lt.s32.totalorder %v147, 16
    %vm162 = vcmp.lt.s32.totalorder %v148, 16
    %vm163 = vcmp.lt.s32.totalorder %v149, 16
    %vm164 = vcmp.lt.s32.totalorder %v150, 16
    %vm165 = vcmp.lt.s32.totalorder %v151, 16
    %vm166 = vcmp.lt.s32.totalorder %v152, 16
    %vm167 = vmand %vm155, %vm161
    %vm168 = vmand %vm156, %vm162
    %vm169 = vmand %vm157, %vm163
    %vm170 = vmand %vm158, %vm164
    %vm171 = vmand %vm159, %vm165
    %vm172 = vmand %vm160, %vm166
    %vm173 = vcmp.lt.s32.totalorder %v154, 16
    %vm174 = vmand %vm167, %vm173
    %vm175 = vmand %vm168, %vm173
    %vm176 = vmand %vm169, %vm173
    %vm177 = vmand %vm170, %vm173
    %vm178 = vmand %vm171, %vm173
    %vm179 = vmand %vm172, %vm173
    %v180 = vsel %vm174, %v132, 0.0
    %v181 = vsel %vm175, %v133, 0.0
    %v182 = vsel %vm176, %v134, 0.0
    %v183 = vsel %vm177, %v135, 0.0
    %v184 = vsel %vm178, %v136, 0.0
    %v185 = vsel %vm179, %v137, 0.0
    %186 = vst [vmem:[#allocation5] sm:$0xff] %v180
    %187 = vst [vmem:[#allocation5 + $0x8] sm:$0xff] %v181
    %188 = vst [vmem:[#allocation5 + $0x10] sm:$0xff] %v182
    %189 = vst [vmem:[#allocation5 + $0x18] sm:$0xff] %v183
    %190 = vst [vmem:[#allocation5 + $0x20] sm:$0xff] %v184
    %191 = vst [vmem:[#allocation5 + $0x28] sm:$0xff] %v185
    %192 = vrot.lane.b32.xlu0 %v180, 4
    %v193 = vpop.permute.xlu0 %192
    %194 = vrot.lane.b32.xlu0 %v181, 4
    %v195 = vpop.permute.xlu0 %194
    %196 = vrot.lane.b32.xlu0 %v182, 4
    %v197 = vpop.permute.xlu0 %196
    %198 = vrot.lane.b32.xlu0 %v183, 4
    %v199 = vpop.permute.xlu0 %198
    %200 = vrot.lane.b32.xlu0 %v184, 4
    %v201 = vpop.permute.xlu0 %200
    %202 = vrot.lane.b32.xlu0 %v185, 4
    %v203 = vpop.permute.xlu0 %202
    %v204 = vmul.f32 %v193, 0.04
    %v205 = vmul.f32 %v195, 0.04
    %v206 = vmul.f32 %v197, 0.04
    %v207 = vmul.f32 %v199, 0.04
    %v208 = vmul.f32 %v201, 0.04
    %v209 = vmul.f32 %v203, 0.04
    %210 = vrot.lane.b32.xlu0 %v180, 3
    %v211 = vpop.permute.xlu0 %210
    %212 = vrot.lane.b32.xlu0 %v181, 3
    %v213 = vpop.permute.xlu0 %212
    %214 = vrot.lane.b32.xlu0 %v182, 3
    %v215 = vpop.permute.xlu0 %214
    %216 = vrot.lane.b32.xlu0 %v183, 3
    %v217 = vpop.permute.xlu0 %216
    %218 = vrot.lane.b32.xlu0 %v184, 3
    %v219 = vpop.permute.xlu0 %218
    %220 = vrot.lane.b32.xlu0 %v185, 3
    %v221 = vpop.permute.xlu0 %220
    %v222 = vmul.f32 %v211, 0.08
    %v223 = vmul.f32 %v213, 0.08
    %v224 = vmul.f32 %v215, 0.08
    %v225 = vmul.f32 %v217, 0.08
    %v226 = vmul.f32 %v219, 0.08
    %v227 = vmul.f32 %v221, 0.08
    %v228 = vadd.f32 %v204, %v222
    %v229 = vadd.f32 %v205, %v223
    %v230 = vadd.f32 %v206, %v224
    %v231 = vadd.f32 %v207, %v225
    %v232 = vadd.f32 %v208, %v226
    %v233 = vadd.f32 %v209, %v227
    %234 = vrot.lane.b32.xlu0 %v180, 2
    %v235 = vpop.permute.xlu0 %234
    %236 = vrot.lane.b32.xlu0 %v181, 2
    %v237 = vpop.permute.xlu0 %236
    %238 = vrot.lane.b32.xlu0 %v182, 2
    %v239 = vpop.permute.xlu0 %238
    %240 = vrot.lane.b32.xlu0 %v183, 2
    %v241 = vpop.permute.xlu0 %240
    %242 = vrot.lane.b32.xlu0 %v184, 2
    %v243 = vpop.permute.xlu0 %242
    %244 = vrot.lane.b32.xlu0 %v185, 2
    %v245 = vpop.permute.xlu0 %244
    %v246 = vmul.f32 %v235, 0.12
    %v247 = vmul.f32 %v237, 0.12
    %v248 = vmul.f32 %v239, 0.12
    %v249 = vmul.f32 %v241, 0.12
    %v250 = vmul.f32 %v243, 0.12
    %v251 = vmul.f32 %v245, 0.12
    %v252 = vadd.f32 %v228, %v246
    %v253 = vadd.f32 %v229, %v247
    %v254 = vadd.f32 %v230, %v248
    %v255 = vadd.f32 %v231, %v249
    %v256 = vadd.f32 %v232, %v250
    %v257 = vadd.f32 %v233, %v251
    %258 = vrot.lane.b32.xlu0 %v180, 1
    %v259 = vpop.permute.xlu0 %258
    %260 = vrot.lane.b32.xlu0 %v181, 1
    %v261 = vpop.permute.xlu0 %260
    %262 = vrot.lane.b32.xlu0 %v182, 1
    %v263 = vpop.permute.xlu0 %262
    %264 = vrot.lane.b32.xlu0 %v183, 1
    %v265 = vpop.permute.xlu0 %264
    %266 = vrot.lane.b32.xlu0 %v184, 1
    %v267 = vpop.permute.xlu0 %266
    %268 = vrot.lane.b32.xlu0 %v185, 1
    %v269 = vpop.permute.xlu0 %268
    %v270 = vmul.f32 %v259, 0.16
    %v271 = vmul.f32 %v261, 0.16
    %v272 = vmul.f32 %v263, 0.16
    %v273 = vmul.f32 %v265, 0.16
    %v274 = vmul.f32 %v267, 0.16
    %v275 = vmul.f32 %v269, 0.16
    %v276 = vadd.f32 %v252, %v270
    %v277 = vadd.f32 %v253, %v271
    %v278 = vadd.f32 %v254, %v272
    %v279 = vadd.f32 %v255, %v273
    %v280 = vadd.f32 %v256, %v274
    %v281 = vadd.f32 %v257, %v275
    %v282 = vmul.f32 %v180, 0.2
    %v283 = vmul.f32 %v181, 0.2
    %v284 = vmul.f32 %v182, 0.2
    %v285 = vmul.f32 %v183, 0.2
    %v286 = vmul.f32 %v184, 0.2
    %v287 = vmul.f32 %v185, 0.2
    %v288 = vadd.f32 %v276, %v282
    %v289 = vadd.f32 %v277, %v283
    %v290 = vadd.f32 %v278, %v284
    %v291 = vadd.f32 %v279, %v285
    %v292 = vadd.f32 %v280, %v286
    %v293 = vadd.f32 %v281, %v287
    %294 = vrot.lane.b32.xlu0 %v180, 127
    %v295 = vpop.permute.xlu0 %294
    %296 = vrot.lane.b32.xlu0 %v181, 127
    %v297 = vpop.permute.xlu0 %296
    %298 = vrot.lane.b32.xlu0 %v182, 127
    %v299 = vpop.permute.xlu0 %298
    %300 = vrot.lane.b32.xlu0 %v183, 127
    %v301 = vpop.permute.xlu0 %300
    %302 = vrot.lane.b32.xlu0 %v184, 127
    %v303 = vpop.permute.xlu0 %302
    %304 = vrot.lane.b32.xlu0 %v185, 127
    %v305 = vpop.permute.xlu0 %304
    %v306 = vmul.f32 %v295, 0.16
    %v307 = vmul.f32 %v297, 0.16
    %v308 = vmul.f32 %v299, 0.16
    %v309 = vmul.f32 %v301, 0.16
    %v310 = vmul.f32 %v303, 0.16
    %v311 = vmul.f32 %v305, 0.16
    %v312 = vadd.f32 %v288, %v306
    %v313 = vadd.f32 %v289, %v307
    %v314 = vadd.f32 %v290, %v308
    %v315 = vadd.f32 %v291, %v309
    %v316 = vadd.f32 %v292, %v310
    %v317 = vadd.f32 %v293, %v311
    %318 = vrot.lane.b32.xlu0 %v180, 126
    %v319 = vpop.permute.xlu0 %318
    %320 = vrot.lane.b32.xlu0 %v181, 126
    %v321 = vpop.permute.xlu0 %320
    %322 = vrot.lane.b32.xlu0 %v182, 126
    %v323 = vpop.permute.xlu0 %322
    %324 = vrot.lane.b32.xlu0 %v183, 126
    %v325 = vpop.permute.xlu0 %324
    %326 = vrot.lane.b32.xlu0 %v184, 126
    %v327 = vpop.permute.xlu0 %326
    %328 = vrot.lane.b32.xlu0 %v185, 126
    %v329 = vpop.permute.xlu0 %328
    %v330 = vmul.f32 %v319, 0.12
    %v331 = vmul.f32 %v321, 0.12
    %v332 = vmul.f32 %v323, 0.12
    %v333 = vmul.f32 %v325, 0.12
    %v334 = vmul.f32 %v327, 0.12
    %v335 = vmul.f32 %v329, 0.12
    %v336 = vadd.f32 %v312, %v330
    %v337 = vadd.f32 %v313, %v331
    %v338 = vadd.f32 %v314, %v332
    %v339 = vadd.f32 %v315, %v333
    %v340 = vadd.f32 %v316, %v334
    %v341 = vadd.f32 %v317, %v335
    %342 = vrot.lane.b32.xlu0 %v180, 125
    %v343 = vpop.permute.xlu0 %342
    %344 = vrot.lane.b32.xlu0 %v181, 125
    %v345 = vpop.permute.xlu0 %344
    %346 = vrot.lane.b32.xlu0 %v182, 125
    %v347 = vpop.permute.xlu0 %346
    %348 = vrot.lane.b32.xlu0 %v183, 125
    %v349 = vpop.permute.xlu0 %348
    %350 = vrot.lane.b32.xlu0 %v184, 125
    %v351 = vpop.permute.xlu0 %350
    %352 = vrot.lane.b32.xlu0 %v185, 125
    %v353 = vpop.permute.xlu0 %352
    %v354 = vmul.f32 %v343, 0.08
    %v355 = vmul.f32 %v345, 0.08
    %v356 = vmul.f32 %v347, 0.08
    %v357 = vmul.f32 %v349, 0.08
    %v358 = vmul.f32 %v351, 0.08
    %v359 = vmul.f32 %v353, 0.08
    %v360 = vadd.f32 %v336, %v354
    %v361 = vadd.f32 %v337, %v355
    %v362 = vadd.f32 %v338, %v356
    %v363 = vadd.f32 %v339, %v357
    %v364 = vadd.f32 %v340, %v358
    %v365 = vadd.f32 %v341, %v359
    %366 = vrot.lane.b32.xlu0 %v180, 124
    %v367 = vpop.permute.xlu0 %366
    %368 = vrot.lane.b32.xlu0 %v181, 124
    %v369 = vpop.permute.xlu0 %368
    %370 = vrot.lane.b32.xlu0 %v182, 124
    %v371 = vpop.permute.xlu0 %370
    %372 = vrot.lane.b32.xlu0 %v183, 124
    %v373 = vpop.permute.xlu0 %372
    %374 = vrot.lane.b32.xlu0 %v184, 124
    %v375 = vpop.permute.xlu0 %374
    %376 = vrot.lane.b32.xlu0 %v185, 124
    %v377 = vpop.permute.xlu0 %376
    %v378 = vmul.f32 %v367, 0.04
    %v379 = vmul.f32 %v369, 0.04
    %v380 = vmul.f32 %v371, 0.04
    %v381 = vmul.f32 %v373, 0.04
    %v382 = vmul.f32 %v375, 0.04
    %v383 = vmul.f32 %v377, 0.04
    %v384 = vadd.f32 %v360, %v378
    %v385 = vadd.f32 %v361, %v379
    %v386 = vadd.f32 %v362, %v380
    %v387 = vadd.f32 %v363, %v381
    %v388 = vadd.f32 %v364, %v382
    %v389 = vadd.f32 %v365, %v383
    %390 = vst [vmem:[#allocation4 + $0x8] sm:$0xff] %v384
    %391 = vst [vmem:[#allocation4 + $0x10] sm:$0xff] %v385
    %392 = vst [vmem:[#allocation4 + $0x18] sm:$0xff] %v386
    %393 = vst [vmem:[#allocation4 + $0x20] sm:$0xff] %v387
    %394 = vst [vmem:[#allocation4 + $0x28] sm:$0xff] %v388
    %395 = vst [vmem:[#allocation4 + $0x30] sm:$0xff] %v389
    %v396 = vld [vmem:[#allocation4 + $0x4] sm:$0xff]
    %v397 = vld [vmem:[#allocation4 + $0xc] sm:$0xff]
    %v398 = vld [vmem:[#allocation4 + $0x14] sm:$0xff]
    %v399 = vld [vmem:[#allocation4 + $0x1c] sm:$0xff]
    %v400 = vld [vmem:[#allocation4 + $0x24] sm:$0xff]
    %v401 = vld [vmem:[#allocation4 + $0x2c] sm:$0xff]
    %v402 = vmul.f32 %v396, 0.04
    %v403 = vmul.f32 %v397, 0.04
    %v404 = vmul.f32 %v398, 0.04
    %v405 = vmul.f32 %v399, 0.04
    %v406 = vmul.f32 %v400, 0.04
    %v407 = vmul.f32 %v401, 0.04
    %v408 = vld [vmem:[#allocation4 + $0x5] sm:$0xff]
    %v409 = vld [vmem:[#allocation4 + $0xd] sm:$0xff]
    %v410 = vld [vmem:[#allocation4 + $0x15] sm:$0xff]
    %v411 = vld [vmem:[#allocation4 + $0x1d] sm:$0xff]
    %v412 = vld [vmem:[#allocation4 + $0x25] sm:$0xff]
    %v413 = vld [vmem:[#allocation4 + $0x2d] sm:$0xff]
    %v414 = vmul.f32 %v408, 0.08
    %v415 = vmul.f32 %v409, 0.08
    %v416 = vmul.f32 %v410, 0.08
    %v417 = vmul.f32 %v411, 0.08
    %v418 = vmul.f32 %v412, 0.08
    %v419 = vmul.f32 %v413, 0.08
    %v420 = vadd.f32 %v402, %v414
    %v421 = vadd.f32 %v403, %v415
    %v422 = vadd.f32 %v404, %v416
    %v423 = vadd.f32 %v405, %v417
    %v424 = vadd.f32 %v406, %v418
    %v425 = vadd.f32 %v407, %v419
    %v426 = vld [vmem:[#allocation4 + $0x6] sm:$0xff]
    %v427 = vld [vmem:[#allocation4 + $0xe] sm:$0xff]
    %v428 = vld [vmem:[#allocation4 + $0x16] sm:$0xff]
    %v429 = vld [vmem:[#allocation4 + $0x1e] sm:$0xff]
    %v430 = vld [vmem:[#allocation4 + $0x26] sm:$0xff]
    %v431 = vld [vmem:[#allocation4 + $0x2e] sm:$0xff]
    %v432 = vmul.f32 %v426, 0.12
    %v433 = vmul.f32 %v427, 0.12
    %v434 = vmul.f32 %v428, 0.12
    %v435 = vmul.f32 %v429, 0.12
    %v436 = vmul.f32 %v430, 0.12
    %v437 = vmul.f32 %v431, 0.12
    %v438 = vadd.f32 %v420, %v432
    %v439 = vadd.f32 %v421, %v433
    %v440 = vadd.f32 %v422, %v434
    %v441 = vadd.f32 %v423, %v435
    %v442 = vadd.f32 %v424, %v436
    %v443 = vadd.f32 %v425, %v437
    %v444 = vld [vmem:[#allocation4 + $0x7] sm:$0xff]
    %v445 = vld [vmem:[#allocation4 + $0xf] sm:$0xff]
    %v446 = vld [vmem:[#allocation4 + $0x17] sm:$0xff]
    %v447 = vld [vmem:[#allocation4 + $0x1f] sm:$0xff]
    %v448 = vld [vmem:[#allocation4 + $0x27] sm:$0xff]
    %v449 = vld [vmem:[#allocation4 + $0x2f] sm:$0xff]
    %v450 = vmul.f32 %v444, 0.16
    %v451 = vmul.f32 %v445, 0.16
    %v452 = vmul.f32 %v446, 0.16
    %v453 = vmul.f32 %v447, 0.16
    %v454 = vmul.f32 %v448, 0.16
    %v455 = vmul.f32 %v449, 0.16
    %v456 = vadd.f32 %v438, %v450
    %v457 = vadd.f32 %v439, %v451
    %v458 = vadd.f32 %v440, %v452
    %v459 = vadd.f32 %v441, %v453
    %v460 = vadd.f32 %v442, %v454
    %v461 = vadd.f32 %v443, %v455
    %v462 = vmul.f32 %v384, 0.2
    %v463 = vmul.f32 %v385, 0.2
    %v464 = vmul.f32 %v386, 0.2
    %v465 = vmul.f32 %v387, 0.2
    %v466 = vmul.f32 %v388, 0.2
    %v467 = vmul.f32 %v389, 0.2
    %v468 = vadd.f32 %v456, %v462
    %v469 = vadd.f32 %v457, %v463
    %v470 = vadd.f32 %v458, %v464
    %v471 = vadd.f32 %v459, %v465
    %v472 = vadd.f32 %v460, %v466
    %v473 = vadd.f32 %v461, %v467
    %v474 = vld [vmem:[#allocation4 + $0x9] sm:$0xff]
    %v475 = vld [vmem:[#allocation4 + $0x11] sm:$0xff]
    %v476 = vld [vmem:[#allocation4 + $0x19] sm:$0xff]
    %v477 = vld [vmem:[#allocation4 + $0x21] sm:$0xff]
    %v478 = vld [vmem:[#allocation4 + $0x29] sm:$0xff]
    %v479 = vld [vmem:[#allocation4 + $0x31] sm:$0xff]
    %v480 = vmul.f32 %v474, 0.16
    %v481 = vmul.f32 %v475, 0.16
    %v482 = vmul.f32 %v476, 0.16
    %v483 = vmul.f32 %v477, 0.16
    %v484 = vmul.f32 %v478, 0.16
    %v485 = vmul.f32 %v479, 0.16
    %v486 = vadd.f32 %v468, %v480
    %v487 = vadd.f32 %v469, %v481
    %v488 = vadd.f32 %v470, %v482
    %v489 = vadd.f32 %v471, %v483
    %v490 = vadd.f32 %v472, %v484
    %v491 = vadd.f32 %v473, %v485
    %v492 = vld [vmem:[#allocation4 + $0xa] sm:$0xff]
    %v493 = vld [vmem:[#allocation4 + $0x12] sm:$0xff]
    %v494 = vld [vmem:[#allocation4 + $0x1a] sm:$0xff]
    %v495 = vld [vmem:[#allocation4 + $0x22] sm:$0xff]
    %v496 = vld [vmem:[#allocation4 + $0x2a] sm:$0xff]
    %v497 = vld [vmem:[#allocation4 + $0x32] sm:$0xff]
    %v498 = vmul.f32 %v492, 0.12
    %v499 = vmul.f32 %v493, 0.12
    %v500 = vmul.f32 %v494, 0.12
    %v501 = vmul.f32 %v495, 0.12
    %v502 = vmul.f32 %v496, 0.12
    %v503 = vmul.f32 %v497, 0.12
    %v504 = vadd.f32 %v486, %v498
    %v505 = vadd.f32 %v487, %v499
    %v506 = vadd.f32 %v488, %v500
    %v507 = vadd.f32 %v489, %v501
    %v508 = vadd.f32 %v490, %v502
    %v509 = vadd.f32 %v491, %v503
    %v510 = vld [vmem:[#allocation4 + $0xb] sm:$0xff]
    %v511 = vld [vmem:[#allocation4 + $0x13] sm:$0xff]
    %v512 = vld [vmem:[#allocation4 + $0x1b] sm:$0xff]
    %v513 = vld [vmem:[#allocation4 + $0x23] sm:$0xff]
    %v514 = vld [vmem:[#allocation4 + $0x2b] sm:$0xff]
    %v515 = vld [vmem:[#allocation4 + $0x33] sm:$0xff]
    %v516 = vmul.f32 %v510, 0.08
    %v517 = vmul.f32 %v511, 0.08
    %v518 = vmul.f32 %v512, 0.08
    %v519 = vmul.f32 %v513, 0.08
    %v520 = vmul.f32 %v514, 0.08
    %v521 = vmul.f32 %v515, 0.08
    %v522 = vadd.f32 %v504, %v516
    %v523 = vadd.f32 %v505, %v517
    %v524 = vadd.f32 %v506, %v518
    %v525 = vadd.f32 %v507, %v519
    %v526 = vadd.f32 %v508, %v520
    %v527 = vadd.f32 %v509, %v521
    %v528 = vld [vmem:[#allocation4 + $0x34] sm:$0xff]
    %v529 = vmul.f32 %v528, 0.04
    %v530 = vadd.f32 %v522, %v403
    %v531 = vadd.f32 %v523, %v404
    %v532 = vadd.f32 %v524, %v405
    %v533 = vadd.f32 %v525, %v406
    %v534 = vadd.f32 %v526, %v407
    %v535 = vadd.f32 %v527, %v529
    %536 = vst [vmem:[#allocation4 + $0x8] sm:$0xff] %v530
    %537 = vst [vmem:[#allocation4 + $0x10] sm:$0xff] %v531
    %538 = vst [vmem:[#allocation4 + $0x18] sm:$0xff] %v532
    %539 = vst [vmem:[#allocation4 + $0x20] sm:$0xff] %v533
    %540 = vst [vmem:[#allocation4 + $0x28] sm:$0xff] %v534
    %541 = vst [vmem:[#allocation4 + $0x30] sm:$0xff] %v535
    // Predicated region
    $region6: #{tpu_custom_call.1} parent=1 // pred_check
      %p542 = pneg %p10
    $region7: #{tpu_custom_call.1} parent=1 // pred_check_branch
      %544 = sbr.rel (%p542) target = $region9
    $region8: #{tpu_custom_call.1} parent=1 // pred_region
      %v545 = vmul.f32 %v531, 2.0
      %v547 = vrot.slane %v531, 1
      %v549 = vsub.f32 %v545, %v547
      %550 = vst [vmem:[#allocation4 + $0xf] sm:$0x1] %v549
      %v551 = vmul.f32 %v532, 2.0
      %v553 = vrot.slane %v532, 7
      %v555 = vsub.f32 %v551, %v553
      %556 = vst [vmem:[#allocation4 + $0x19] sm:$0x80] %v555
    $region9: #{tpu_custom_call.1} parent=1 // pred_fallthru
      _
    %v557 = vld [vmem:[#allocation4 + $0x9] sm:$0xff]
    %v558 = vld [vmem:[#allocation4 + $0x11] sm:$0xff]
    %v559 = vld [vmem:[#allocation4 + $0x19] sm:$0xff]
    %v560 = vld [vmem:[#allocation4 + $0x21] sm:$0xff]
    %v561 = vld [vmem:[#allocation4 + $0x29] sm:$0xff]
    %v562 = vld [vmem:[#allocation4 + $0x31] sm:$0xff]
    %v563 = vld [vmem:[#allocation4 + $0x7] sm:$0xff]
    %v564 = vld [vmem:[#allocation4 + $0xf] sm:$0xff]
    %v565 = vld [vmem:[#allocation4 + $0x17] sm:$0xff]
    %v566 = vld [vmem:[#allocation4 + $0x1f] sm:$0xff]
    %v567 = vld [vmem:[#allocation4 + $0x27] sm:$0xff]
    %v568 = vld [vmem:[#allocation4 + $0x2f] sm:$0xff]
    %v569 = vsub.f32 %v557, %v563
    %v570 = vsub.f32 %v558, %v564
    %v571 = vsub.f32 %v559, %v565
    %v572 = vsub.f32 %v560, %v566
    %v573 = vsub.f32 %v561, %v567
    %v574 = vsub.f32 %v562, %v568
    %v575 = vmul.f32 %v569, 0.5
    %v576 = vmul.f32 %v570, 0.5
    %v577 = vmul.f32 %v571, 0.5
    %v578 = vmul.f32 %v572, 0.5
    %v579 = vmul.f32 %v573, 0.5
    %v580 = vmul.f32 %v574, 0.5
    %581 = vst [vmem:[#allocation4 + $0x8] sm:$0xff] %v575
    %582 = vst [vmem:[#allocation4 + $0x10] sm:$0xff] %v576
    %583 = vst [vmem:[#allocation4 + $0x18] sm:$0xff] %v577
    %584 = vst [vmem:[#allocation4 + $0x20] sm:$0xff] %v578
    %585 = vst [vmem:[#allocation4 + $0x28] sm:$0xff] %v579
    %586 = vst [vmem:[#allocation4 + $0x30] sm:$0xff] %v580
    // Predicated region
    $region10: #{tpu_custom_call.1} parent=1 // pred_check
      %p587 = pneg %p10
    $region11: #{tpu_custom_call.1} parent=1 // pred_check_branch
      %589 = sbr.rel (%p587) target = $region13
    $region12: #{tpu_custom_call.1} parent=1 // pred_region
      %v590 = vmul.f32 %v576, 2.0
      %v592 = vrot.slane %v576, 1
      %v594 = vsub.f32 %v590, %v592
      %595 = vst [vmem:[#allocation4 + $0xf] sm:$0x1] %v594
      %v596 = vmul.f32 %v577, 2.0
      %v598 = vrot.slane %v577, 7
      %v600 = vsub.f32 %v596, %v598
      %601 = vst [vmem:[#allocation4 + $0x19] sm:$0x80] %v600
    $region13: #{tpu_custom_call.1} parent=1 // pred_fallthru
      _
    %v602 = vld [vmem:[#allocation4 + $0x11] sm:$0xff]
    %v603 = vld [vmem:[#allocation4 + $0x19] sm:$0xff]
    %v604 = vld [vmem:[#allocation4 + $0x21] sm:$0xff]
    %v605 = vld [vmem:[#allocation4 + $0x29] sm:$0xff]
    %v606 = vld [vmem:[#allocation4 + $0xf] sm:$0xff]
    %v607 = vld [vmem:[#allocation4 + $0x17] sm:$0xff]
    %v608 = vld [vmem:[#allocation4 + $0x1f] sm:$0xff]
    %v609 = vld [vmem:[#allocation4 + $0x27] sm:$0xff]
    %v610 = vsub.f32 %v602, %v606
    %v611 = vsub.f32 %v603, %v607
    %v612 = vsub.f32 %v604, %v608
    %v613 = vsub.f32 %v605, %v609
    %v614 = vmul.f32 %v610, 0.5
    %v615 = vmul.f32 %v611, 0.5
    %v616 = vmul.f32 %v612, 0.5
    %v617 = vmul.f32 %v613, 0.5
    %vm618 = vcmp.eq.s32.totalorder %v154, 0
    %vm619 = vcmp.eq.s32.totalorder %v154, 15
    %620 = vrot.lane.b32.xlu0 %v531, 127
    %v621 = vpop.permute.xlu0 %620
    %622 = vrot.lane.b32.xlu0 %v532, 127
    %v623 = vpop.permute.xlu0 %622
    %624 = vrot.lane.b32.xlu0 %v533, 127
    %v625 = vpop.permute.xlu0 %624
    %626 = vrot.lane.b32.xlu0 %v534, 127
    %v627 = vpop.permute.xlu0 %626
    %628 = vrot.lane.b32.xlu0 %v531, 1
    %v629 = vpop.permute.xlu0 %628
    %630 = vrot.lane.b32.xlu0 %v532, 1
    %v631 = vpop.permute.xlu0 %630
    %632 = vrot.lane.b32.xlu0 %v533, 1
    %v633 = vpop.permute.xlu0 %632
    %634 = vrot.lane.b32.xlu0 %v534, 1
    %v635 = vpop.permute.xlu0 %634
    %v636 = vsub.f32 %v621, %v629
    %v637 = vsub.f32 %v623, %v631
    %v638 = vsub.f32 %v625, %v633
    %v639 = vsub.f32 %v627, %v635
    %v640 = vmul.f32 %v636, 0.5
    %v641 = vmul.f32 %v637, 0.5
    %v642 = vmul.f32 %v638, 0.5
    %v643 = vmul.f32 %v639, 0.5
    %v644 = vsub.f32 %v621, %v531
    %v645 = vsub.f32 %v623, %v532
    %v646 = vsub.f32 %v625, %v533
    %v647 = vsub.f32 %v627, %v534
    %v648 = vsel %vm618, %v644, %v640
    %v649 = vsel %vm618, %v645, %v641
    %v650 = vsel %vm618, %v646, %v642
    %v651 = vsel %vm618, %v647, %v643
    %v652 = vsub.f32 %v531, %v629
    %v653 = vsub.f32 %v532, %v631
    %v654 = vsub.f32 %v533, %v633
    %v655 = vsub.f32 %v534, %v635
    %v656 = vsel %vm619, %v652, %v648
    %v657 = vsel %vm619, %v653, %v649
    %v658 = vsel %vm619, %v654, %v650
    %v659 = vsel %vm619, %v655, %v651
    %660 = vrot.lane.b32.xlu0 %v656, 127
    %v661 = vpop.permute.xlu0 %660
    %662 = vrot.lane.b32.xlu0 %v657, 127
    %v663 = vpop.permute.xlu0 %662
    %664 = vrot.lane.b32.xlu0 %v658, 127
    %v665 = vpop.permute.xlu0 %664
    %666 = vrot.lane.b32.xlu0 %v659, 127
    %v667 = vpop.permute.xlu0 %666
    %668 = vrot.lane.b32.xlu0 %v656, 1
    %v669 = vpop.permute.xlu0 %668
    %670 = vrot.lane.b32.xlu0 %v657, 1
    %v671 = vpop.permute.xlu0 %670
    %672 = vrot.lane.b32.xlu0 %v658, 1
    %v673 = vpop.permute.xlu0 %672
    %674 = vrot.lane.b32.xlu0 %v659, 1
    %v675 = vpop.permute.xlu0 %674
    %v676 = vsub.f32 %v661, %v669
    %v677 = vsub.f32 %v663, %v671
    %v678 = vsub.f32 %v665, %v673
    %v679 = vsub.f32 %v667, %v675
    %v680 = vmul.f32 %v676, 0.5
    %v681 = vmul.f32 %v677, 0.5
    %v682 = vmul.f32 %v678, 0.5
    %v683 = vmul.f32 %v679, 0.5
    %v684 = vsub.f32 %v661, %v656
    %v685 = vsub.f32 %v663, %v657
    %v686 = vsub.f32 %v665, %v658
    %v687 = vsub.f32 %v667, %v659
    %v688 = vsel %vm618, %v684, %v680
    %v689 = vsel %vm618, %v685, %v681
    %v690 = vsel %vm618, %v686, %v682
    %v691 = vsel %vm618, %v687, %v683
    %v692 = vsub.f32 %v656, %v669
    %v693 = vsub.f32 %v657, %v671
    %v694 = vsub.f32 %v658, %v673
    %v695 = vsub.f32 %v659, %v675
    %v696 = vsel %vm619, %v692, %v688
    %v697 = vsel %vm619, %v693, %v689
    %v698 = vsel %vm619, %v694, %v690
    %v699 = vsel %vm619, %v695, %v691
    %700 = vrot.lane.b32.xlu0 %v576, 127
    %v701 = vpop.permute.xlu0 %700
    %702 = vrot.lane.b32.xlu0 %v577, 127
    %v703 = vpop.permute.xlu0 %702
    %704 = vrot.lane.b32.xlu0 %v578, 127
    %v705 = vpop.permute.xlu0 %704
    %706 = vrot.lane.b32.xlu0 %v579, 127
    %v707 = vpop.permute.xlu0 %706
    %708 = vrot.lane.b32.xlu0 %v576, 1
    %v709 = vpop.permute.xlu0 %708
    %710 = vrot.lane.b32.xlu0 %v577, 1
    %v711 = vpop.permute.xlu0 %710
    %712 = vrot.lane.b32.xlu0 %v578, 1
    %v713 = vpop.permute.xlu0 %712
    %714 = vrot.lane.b32.xlu0 %v579, 1
    %v715 = vpop.permute.xlu0 %714
    %v716 = vsub.f32 %v701, %v709
    %v717 = vsub.f32 %v703, %v711
    %v718 = vsub.f32 %v705, %v713
    %v719 = vsub.f32 %v707, %v715
    %v720 = vmul.f32 %v716, 0.5
    %v721 = vmul.f32 %v717, 0.5
    %v722 = vmul.f32 %v718, 0.5
    %v723 = vmul.f32 %v719, 0.5
    %v724 = vsub.f32 %v701, %v576
    %v725 = vsub.f32 %v703, %v577
    %v726 = vsub.f32 %v705, %v578
    %v727 = vsub.f32 %v707, %v579
    %v728 = vsel %vm618, %v724, %v720
    %v729 = vsel %vm618, %v725, %v721
    %v730 = vsel %vm618, %v726, %v722
    %v731 = vsel %vm618, %v727, %v723
    %v732 = vsub.f32 %v576, %v709
    %v733 = vsub.f32 %v577, %v711
    %v734 = vsub.f32 %v578, %v713
    %v735 = vsub.f32 %v579, %v715
    %v736 = vsel %vm619, %v732, %v728
    %v737 = vsel %vm619, %v733, %v729
    %v738 = vsel %vm619, %v734, %v730
    %v739 = vsel %vm619, %v735, %v731
    %vm740 = vcmp.lt.f32.partialorder %v736, 0.0
    %vm741 = vcmp.lt.f32.partialorder %v737, 0.0
    %vm742 = vcmp.lt.f32.partialorder %v738, 0.0
    %vm743 = vcmp.lt.f32.partialorder %v739, 0.0
    %vm744 = vcmp.gt.f32.partialorder %v736, 0.0
    %vm745 = vcmp.gt.f32.partialorder %v737, 0.0
    %vm746 = vcmp.gt.f32.partialorder %v738, 0.0
    %vm747 = vcmp.gt.f32.partialorder %v739, 0.0
    %v748 = vsel %vm744, -1.0, 0.0
    %v749 = vsel %vm745, -1.0, 0.0
    %v750 = vsel %vm746, -1.0, 0.0
    %v751 = vsel %vm747, -1.0, 0.0
    %v752 = vsel %vm740, 1.0, %v748
    %v753 = vsel %vm741, 1.0, %v749
    %v754 = vsel %vm742, 1.0, %v750
    %v755 = vsel %vm743, 1.0, %v751
    %v756 = vmul.f32 %v614, %v752
    %v757 = vmul.f32 %v615, %v753
    %v758 = vmul.f32 %v616, %v754
    %v759 = vmul.f32 %v617, %v755
    %v760 = vadd.f32 %v696, 1e-05
    %v761 = vadd.f32 %v697, 1e-05
    %v762 = vadd.f32 %v698, 1e-05
    %v763 = vadd.f32 %v699, 1e-05
    %v764 = vmul.f32 %v760, %v760
    %v765 = vmul.f32 %v761, %v761
    %v766 = vmul.f32 %v762, %v762
    %v767 = vmul.f32 %v763, %v763
    %v768 = vmul.f32 %v756, %v756
    %v769 = vmul.f32 %v757, %v757
    %v770 = vmul.f32 %v758, %v758
    %v771 = vmul.f32 %v759, %v759
    %v772 = vadd.f32 %v764, %v768
    %v773 = vadd.f32 %v765, %v769
    %v774 = vadd.f32 %v766, %v770
    %v775 = vadd.f32 %v767, %v771
    %v776 = vadd.f32 %v772, 1e-30
    %v777 = vadd.f32 %v773, 1e-30
    %v778 = vadd.f32 %v774, 1e-30
    %v779 = vadd.f32 %v775, 1e-30
    %v780 = vrsqrt.pop %v776
    %v781 = vrsqrt.pop %v777
    %v782 = vrsqrt.pop %v778
    %v783 = vrsqrt.pop %v779
    %v784 = vmul.f32 %v756, %v760
    %v785 = vmul.f32 %v757, %v761
    %v786 = vmul.f32 %v758, %v762
    %v787 = vmul.f32 %v759, %v763
    %vm788 = vcmp.lt.f32.partialorder %v784, 0.0
    %vm789 = vcmp.lt.f32.partialorder %v785, 0.0
    %vm790 = vcmp.lt.f32.partialorder %v786, 0.0
    %vm791 = vcmp.lt.f32.partialorder %v787, 0.0
    %v792 = vsel %vm788, -1.0, 1.0
    %v793 = vsel %vm789, -1.0, 1.0
    %v794 = vsel %vm790, -1.0, 1.0
    %v795 = vsel %vm791, -1.0, 1.0
    %v796 = vand.u32 2147483647, %v760
    %v797 = vand.u32 2147483647, %v761
    %v798 = vand.u32 2147483647, %v762
    %v799 = vand.u32 2147483647, %v763
    %v800 = vmul.f32 %v792, %v796
    %v801 = vmul.f32 %v793, %v797
    %v802 = vmul.f32 %v794, %v798
    %v803 = vmul.f32 %v795, %v799
    %v804 = vmul.f32 %v800, %v780
    %v805 = vmul.f32 %v801, %v781
    %v806 = vmul.f32 %v802, %v782
    %v807 = vmul.f32 %v803, %v783
    %v808 = vand.u32 2147483647, %v756
    %v809 = vand.u32 2147483647, %v757
    %v810 = vand.u32 2147483647, %v758
    %v811 = vand.u32 2147483647, %v759
    %v812 = vmul.f32 %v808, %v780
    %v813 = vmul.f32 %v809, %v781
    %v814 = vmul.f32 %v810, %v782
    %v815 = vmul.f32 %v811, %v783
    %v816 = vstv %s11
    %v817 = vadd.s32 %v816, %v140
    %v818 = vadd.s32 %v816, %v141
    %v819 = vadd.s32 %v816, %v142
    %v820 = vadd.s32 %v816, %v143
    %v821 = vcvt.s32.f32 %v817
    %v822 = vcvt.s32.f32 %v818
    %v823 = vcvt.s32.f32 %v819
    %v824 = vcvt.s32.f32 %v820
    %v825 = vcvt.s32.f32 %v154
    %v826 = vld [vmem:[#allocation5 + $0x6] sm:$0xff]
    %v827 = vld [vmem:[#allocation5 + $0xe] sm:$0xff]
    %v828 = vld [vmem:[#allocation5 + $0x16] sm:$0xff]
    %v829 = vld [vmem:[#allocation5 + $0x1e] sm:$0xff]
    %v830 = vld [vmem:[#allocation5 + $0x7] sm:$0xff]
    %v831 = vld [vmem:[#allocation5 + $0xf] sm:$0xff]
    %v832 = vld [vmem:[#allocation5 + $0x17] sm:$0xff]
    %v833 = vld [vmem:[#allocation5 + $0x1f] sm:$0xff]
    %v834 = vld [vmem:[#allocation5 + $0x8] sm:$0xff]
    %v835 = vld [vmem:[#allocation5 + $0x10] sm:$0xff]
    %v836 = vld [vmem:[#allocation5 + $0x18] sm:$0xff]
    %v837 = vld [vmem:[#allocation5 + $0x20] sm:$0xff]
    %v838 = vld [vmem:[#allocation5 + $0x9] sm:$0xff]
    %v839 = vld [vmem:[#allocation5 + $0x11] sm:$0xff]
    %v840 = vld [vmem:[#allocation5 + $0x19] sm:$0xff]
    %v841 = vld [vmem:[#allocation5 + $0x21] sm:$0xff]
    %v842 = vld [vmem:[#allocation5 + $0xa] sm:$0xff]
    %v843 = vld [vmem:[#allocation5 + $0x12] sm:$0xff]
    %v844 = vld [vmem:[#allocation5 + $0x1a] sm:$0xff]
    %v845 = vld [vmem:[#allocation5 + $0x22] sm:$0xff]
    %v846 = vld [vmem:[#allocation5 + $0xb] sm:$0xff]
    %v847 = vld [vmem:[#allocation5 + $0x13] sm:$0xff]
    %v848 = vld [vmem:[#allocation5 + $0x1b] sm:$0xff]
    %v849 = vld [vmem:[#allocation5 + $0x23] sm:$0xff]
    %v850 = vmul.f32 %v834, 1.01
    %v851 = vmul.f32 %v835, 1.01
    %v852 = vmul.f32 %v836, 1.01
    %v853 = vmul.f32 %v837, 1.01
    %v854 = vmul.f32 %v804, 2.0
    %v855 = vmul.f32 %v805, 2.0
    %v856 = vmul.f32 %v806, 2.0
    %v857 = vmul.f32 %v807, 2.0
    %v858 = vadd.f32 %v854, %v825
    %v859 = vadd.f32 %v855, %v825
    %v860 = vadd.f32 %v856, %v825
    %v861 = vadd.f32 %v857, %v825
    %v862 = vmax.f32 %v858, 0.0
    %v863 = vmax.f32 %v859, 0.0
    %v864 = vmax.f32 %v860, 0.0
    %v865 = vmax.f32 %v861, 0.0
    %v866 = vmin.f32 %v862, 14.999
    %v867 = vmin.f32 %v863, 14.999
    %v868 = vmin.f32 %v864, 14.999
    %v869 = vmin.f32 %v865, 14.999
    %v870 = vmul.f32 %v812, 2.0
    %v871 = vmul.f32 %v813, 2.0
    %v872 = vmul.f32 %v814, 2.0
    %v873 = vmul.f32 %v815, 2.0
    %v874 = vadd.f32 %v870, %v821
    %v875 = vadd.f32 %v871, %v822
    %v876 = vadd.f32 %v872, %v823
    %v877 = vadd.f32 %v873, %v824
    %v878 = vmax.f32 %v874, 0.0
    %v879 = vmax.f32 %v875, 0.0
    %v880 = vmax.f32 %v876, 0.0
    %v881 = vmax.f32 %v877, 0.0
    %v882 = vmin.f32 %v878, 14.999
    %v883 = vmin.f32 %v879, 14.999
    %v884 = vmin.f32 %v880, 14.999
    %v885 = vmin.f32 %v881, 14.999
    %v886 = vcvt.f32.s32.to.zero.pseudo %v866
    %v887 = vcvt.f32.s32.to.zero.pseudo %v867
    %v888 = vcvt.f32.s32.to.zero.pseudo %v868
    %v889 = vcvt.f32.s32.to.zero.pseudo %v869
    %v890 = vcvt.f32.s32.to.zero.pseudo %v882
    %v891 = vcvt.f32.s32.to.zero.pseudo %v883
    %v892 = vcvt.f32.s32.to.zero.pseudo %v884
    %v893 = vcvt.f32.s32.to.zero.pseudo %v885
    %v894 = vcvt.s32.f32 %v886
    %v895 = vcvt.s32.f32 %v887
    %v896 = vcvt.s32.f32 %v888
    %v897 = vcvt.s32.f32 %v889
    %v898 = vsub.f32 %v866, %v894
    %v899 = vsub.f32 %v867, %v895
    %v900 = vsub.f32 %v868, %v896
    %v901 = vsub.f32 %v869, %v897
    %v902 = vcvt.s32.f32 %v890
    %v903 = vcvt.s32.f32 %v891
    %v904 = vcvt.s32.f32 %v892
    %v905 = vcvt.s32.f32 %v893
    %v906 = vsub.f32 %v882, %v902
    %v907 = vsub.f32 %v883, %v903
    %v908 = vsub.f32 %v884, %v904
    %v909 = vsub.f32 %v885, %v905
    %v910 = vsub.s32 %v886, %v154
    %v911 = vsub.s32 %v887, %v154
    %v912 = vsub.s32 %v888, %v154
    %v913 = vsub.s32 %v889, %v154
    %v914 = vsub.s32 %v890, %v817
    %v915 = vsub.s32 %v891, %v818
    %v916 = vsub.s32 %v892, %v819
    %v917 = vsub.s32 %v893, %v820
    %vm918 = vcmp.eq.s32.totalorder %v914, 4294967295
    %vm919 = vcmp.eq.s32.totalorder %v915, 4294967295
    %vm920 = vcmp.eq.s32.totalorder %v916, 4294967295
    %vm921 = vcmp.eq.s32.totalorder %v917, 4294967295
    %v922 = vsel %vm918, %v830, 0.0
    %v923 = vsel %vm919, %v831, 0.0
    %v924 = vsel %vm920, %v832, 0.0
    %v925 = vsel %vm921, %v833, 0.0
    %v926 = vsel %vm918, %v834, 0.0
    %v927 = vsel %vm919, %v835, 0.0
    %v928 = vsel %vm920, %v836, 0.0
    %v929 = vsel %vm921, %v837, 0.0
    %vm930 = vcmp.eq.s32.totalorder %v914, 0
    %vm931 = vcmp.eq.s32.totalorder %v915, 0
    %vm932 = vcmp.eq.s32.totalorder %v916, 0
    %vm933 = vcmp.eq.s32.totalorder %v917, 0
    %v934 = vsel %vm930, %v834, %v922
    %v935 = vsel %vm931, %v835, %v923
    %v936 = vsel %vm932, %v836, %v924
    %v937 = vsel %vm933, %v837, %v925
    %v938 = vsel %vm930, %v838, %v926
    %v939 = vsel %vm931, %v839, %v927
    %v940 = vsel %vm932, %v840, %v928
    %v941 = vsel %vm933, %v841, %v929
    %vm942 = vcmp.eq.s32.totalorder %v914, 1
    %vm943 = vcmp.eq.s32.totalorder %v915, 1
    %vm944 = vcmp.eq.s32.totalorder %v916, 1
    %vm945 = vcmp.eq.s32.totalorder %v917, 1
    %v946 = vsel %vm942, %v838, %v934
    %v947 = vsel %vm943, %v839, %v935
    %v948 = vsel %vm944, %v840, %v936
    %v949 = vsel %vm945, %v841, %v937
    %v950 = vsel %vm942, %v842, %v938
    %v951 = vsel %vm943, %v843, %v939
    %v952 = vsel %vm944, %v844, %v940
    %v953 = vsel %vm945, %v845, %v941
    %vm954 = vcmp.eq.s32.totalorder %v914, 2
    %vm955 = vcmp.eq.s32.totalorder %v915, 2
    %vm956 = vcmp.eq.s32.totalorder %v916, 2
    %vm957 = vcmp.eq.s32.totalorder %v917, 2
    %v958 = vsel %vm954, %v842, %v946
    %v959 = vsel %vm955, %v843, %v947
    %v960 = vsel %vm956, %v844, %v948
    %v961 = vsel %vm957, %v845, %v949
    %v962 = vsel %vm954, %v846, %v950
    %v963 = vsel %vm955, %v847, %v951
    %v964 = vsel %vm956, %v848, %v952
    %v965 = vsel %vm957, %v849, %v953
    %966 = vrot.lane.b32.xlu0 %v958, 2
    %v967 = vpop.permute.xlu0 %966
    %968 = vrot.lane.b32.xlu0 %v959, 2
    %v969 = vpop.permute.xlu0 %968
    %970 = vrot.lane.b32.xlu0 %v960, 2
    %v971 = vpop.permute.xlu0 %970
    %972 = vrot.lane.b32.xlu0 %v961, 2
    %v973 = vpop.permute.xlu0 %972
    %974 = vrot.lane.b32.xlu0 %v958, 1
    %v975 = vpop.permute.xlu0 %974
    %976 = vrot.lane.b32.xlu0 %v959, 1
    %v977 = vpop.permute.xlu0 %976
    %978 = vrot.lane.b32.xlu0 %v960, 1
    %v979 = vpop.permute.xlu0 %978
    %980 = vrot.lane.b32.xlu0 %v961, 1
    %v981 = vpop.permute.xlu0 %980
    %982 = vrot.lane.b32.xlu0 %v958, 127
    %v983 = vpop.permute.xlu0 %982
    %984 = vrot.lane.b32.xlu0 %v959, 127
    %v985 = vpop.permute.xlu0 %984
    %986 = vrot.lane.b32.xlu0 %v960, 127
    %v987 = vpop.permute.xlu0 %986
    %988 = vrot.lane.b32.xlu0 %v961, 127
    %v989 = vpop.permute.xlu0 %988
    %990 = vrot.lane.b32.xlu0 %v958, 126
    %v991 = vpop.permute.xlu0 %990
    %992 = vrot.lane.b32.xlu0 %v959, 126
    %v993 = vpop.permute.xlu0 %992
    %994 = vrot.lane.b32.xlu0 %v960, 126
    %v995 = vpop.permute.xlu0 %994
    %996 = vrot.lane.b32.xlu0 %v961, 126
    %v997 = vpop.permute.xlu0 %996
    %998 = vrot.lane.b32.xlu0 %v958, 125
    %v999 = vpop.permute.xlu0 %998
    %1000 = vrot.lane.b32.xlu0 %v959, 125
    %v1001 = vpop.permute.xlu0 %1000
    %1002 = vrot.lane.b32.xlu0 %v960, 125
    %v1003 = vpop.permute.xlu0 %1002
    %1004 = vrot.lane.b32.xlu0 %v961, 125
    %v1005 = vpop.permute.xlu0 %1004
    %1006 = vrot.lane.b32.xlu0 %v962, 2
    %v1007 = vpop.permute.xlu0 %1006
    %1008 = vrot.lane.b32.xlu0 %v963, 2
    %v1009 = vpop.permute.xlu0 %1008
    %1010 = vrot.lane.b32.xlu0 %v964, 2
    %v1011 = vpop.permute.xlu0 %1010
    %1012 = vrot.lane.b32.xlu0 %v965, 2
    %v1013 = vpop.permute.xlu0 %1012
    %1014 = vrot.lane.b32.xlu0 %v962, 1
    %v1015 = vpop.permute.xlu0 %1014
    %1016 = vrot.lane.b32.xlu0 %v963, 1
    %v1017 = vpop.permute.xlu0 %1016
    %1018 = vrot.lane.b32.xlu0 %v964, 1
    %v1019 = vpop.permute.xlu0 %1018
    %1020 = vrot.lane.b32.xlu0 %v965, 1
    %v1021 = vpop.permute.xlu0 %1020
    %1022 = vrot.lane.b32.xlu0 %v962, 127
    %v1023 = vpop.permute.xlu0 %1022
    %1024 = vrot.lane.b32.xlu0 %v963, 127
    %v1025 = vpop.permute.xlu0 %1024
    %1026 = vrot.lane.b32.xlu0 %v964, 127
    %v1027 = vpop.permute.xlu0 %1026
    %1028 = vrot.lane.b32.xlu0 %v965, 127
    %v1029 = vpop.permute.xlu0 %1028
    %1030 = vrot.lane.b32.xlu0 %v962, 126
    %v1031 = vpop.permute.xlu0 %1030
    %1032 = vrot.lane.b32.xlu0 %v963, 126
    %v1033 = vpop.permute.xlu0 %1032
    %1034 = vrot.lane.b32.xlu0 %v964, 126
    %v1035 = vpop.permute.xlu0 %1034
    %1036 = vrot.lane.b32.xlu0 %v965, 126
    %v1037 = vpop.permute.xlu0 %1036
    %1038 = vrot.lane.b32.xlu0 %v962, 125
    %v1039 = vpop.permute.xlu0 %1038
    %1040 = vrot.lane.b32.xlu0 %v963, 125
    %v1041 = vpop.permute.xlu0 %1040
    %1042 = vrot.lane.b32.xlu0 %v964, 125
    %v1043 = vpop.permute.xlu0 %1042
    %1044 = vrot.lane.b32.xlu0 %v965, 125
    %v1045 = vpop.permute.xlu0 %1044
    %vm1046 = vcmp.eq.s32.totalorder %v910, 4294967294
    %vm1047 = vcmp.eq.s32.totalorder %v911, 4294967294
    %vm1048 = vcmp.eq.s32.totalorder %v912, 4294967294
    %vm1049 = vcmp.eq.s32.totalorder %v913, 4294967294
    %v1050 = vsel %vm1046, %v967, 0.0
    %v1051 = vsel %vm1047, %v969, 0.0
    %v1052 = vsel %vm1048, %v971, 0.0
    %v1053 = vsel %vm1049, %v973, 0.0
    %v1054 = vsel %vm1046, %v975, 0.0
    %v1055 = vsel %vm1047, %v977, 0.0
    %v1056 = vsel %vm1048, %v979, 0.0
    %v1057 = vsel %vm1049, %v981, 0.0
    %v1058 = vsel %vm1046, %v1007, 0.0
    %v1059 = vsel %vm1047, %v1009, 0.0
    %v1060 = vsel %vm1048, %v1011, 0.0
    %v1061 = vsel %vm1049, %v1013, 0.0
    %v1062 = vsel %vm1046, %v1015, 0.0
    %v1063 = vsel %vm1047, %v1017, 0.0
    %v1064 = vsel %vm1048, %v1019, 0.0
    %v1065 = vsel %vm1049, %v1021, 0.0
    %vm1066 = vcmp.eq.s32.totalorder %v910, 4294967295
    %vm1067 = vcmp.eq.s32.totalorder %v911, 4294967295
    %vm1068 = vcmp.eq.s32.totalorder %v912, 4294967295
    %vm1069 = vcmp.eq.s32.totalorder %v913, 4294967295
    %v1070 = vsel %vm1066, %v975, %v1050
    %v1071 = vsel %vm1067, %v977, %v1051
    %v1072 = vsel %vm1068, %v979, %v1052
    %v1073 = vsel %vm1069, %v981, %v1053
    %v1074 = vsel %vm1066, %v958, %v1054
    %v1075 = vsel %vm1067, %v959, %v1055
    %v1076 = vsel %vm1068, %v960, %v1056
    %v1077 = vsel %vm1069, %v961, %v1057
    %v1078 = vsel %vm1066, %v1015, %v1058
    %v1079 = vsel %vm1067, %v1017, %v1059
    %v1080 = vsel %vm1068, %v1019, %v1060
    %v1081 = vsel %vm1069, %v1021, %v1061
    %v1082 = vsel %vm1066, %v962, %v1062
    %v1083 = vsel %vm1067, %v963, %v1063
    %v1084 = vsel %vm1068, %v964, %v1064
    %v1085 = vsel %vm1069, %v965, %v1065
    %vm1086 = vcmp.eq.s32.totalorder %v910, 0
    %vm1087 = vcmp.eq.s32.totalorder %v911, 0
    %vm1088 = vcmp.eq.s32.totalorder %v912, 0
    %vm1089 = vcmp.eq.s32.totalorder %v913, 0
    %v1090 = vsel %vm1086, %v958, %v1070
    %v1091 = vsel %vm1087, %v959, %v1071
    %v1092 = vsel %vm1088, %v960, %v1072
    %v1093 = vsel %vm1089, %v961, %v1073
    %v1094 = vsel %vm1086, %v983, %v1074
    %v1095 = vsel %vm1087, %v985, %v1075
    %v1096 = vsel %vm1088, %v987, %v1076
    %v1097 = vsel %vm1089, %v989, %v1077
    %v1098 = vsel %vm1086, %v962, %v1078
    %v1099 = vsel %vm1087, %v963, %v1079
    %v1100 = vsel %vm1088, %v964, %v1080
    %v1101 = vsel %vm1089, %v965, %v1081
    %v1102 = vsel %vm1086, %v1023, %v1082
    %v1103 = vsel %vm1087, %v1025, %v1083
    %v1104 = vsel %vm1088, %v1027, %v1084
    %v1105 = vsel %vm1089, %v1029, %v1085
    %vm1106 = vcmp.eq.s32.totalorder %v910, 1
    %vm1107 = vcmp.eq.s32.totalorder %v911, 1
    %vm1108 = vcmp.eq.s32.totalorder %v912, 1
    %vm1109 = vcmp.eq.s32.totalorder %v913, 1
    %v1110 = vsel %vm1106, %v983, %v1090
    %v1111 = vsel %vm1107, %v985, %v1091
    %v1112 = vsel %vm1108, %v987, %v1092
    %v1113 = vsel %vm1109, %v989, %v1093
    %v1114 = vsel %vm1106, %v991, %v1094
    %v1115 = vsel %vm1107, %v993, %v1095
    %v1116 = vsel %vm1108, %v995, %v1096
    %v1117 = vsel %vm1109, %v997, %v1097
    %v1118 = vsel %vm1106, %v1023, %v1098
    %v1119 = vsel %vm1107, %v1025, %v1099
    %v1120 = vsel %vm1108, %v1027, %v1100
    %v1121 = vsel %vm1109, %v1029, %v1101
    %v1122 = vsel %vm1106, %v1031, %v1102
    %v1123 = vsel %vm1107, %v1033, %v1103
    %v1124 = vsel %vm1108, %v1035, %v1104
    %v1125 = vsel %vm1109, %v1037, %v1105
    %vm1126 = vcmp.eq.s32.totalorder %v910, 2
    %vm1127 = vcmp.eq.s32.totalorder %v911, 2
    %vm1128 = vcmp.eq.s32.totalorder %v912, 2
    %vm1129 = vcmp.eq.s32.totalorder %v913, 2
    %v1130 = vsel %vm1126, %v991, %v1110
    %v1131 = vsel %vm1127, %v993, %v1111
    %v1132 = vsel %vm1128, %v995, %v1112
    %v1133 = vsel %vm1129, %v997, %v1113
    %v1134 = vsel %vm1126, %v999, %v1114
    %v1135 = vsel %vm1127, %v1001, %v1115
    %v1136 = vsel %vm1128, %v1003, %v1116
    %v1137 = vsel %vm1129, %v1005, %v1117
    %v1138 = vsel %vm1126, %v1031, %v1118
    %v1139 = vsel %vm1127, %v1033, %v1119
    %v1140 = vsel %vm1128, %v1035, %v1120
    %v1141 = vsel %vm1129, %v1037, %v1121
    %v1142 = vsel %vm1126, %v1039, %v1122
    %v1143 = vsel %vm1127, %v1041, %v1123
    %v1144 = vsel %vm1128, %v1043, %v1124
    %v1145 = vsel %vm1129, %v1045, %v1125
    %v1146 = vsub.f32 1.0, %v898
    %v1147 = vsub.f32 1.0, %v899
    %v1148 = vsub.f32 1.0, %v900
    %v1149 = vsub.f32 1.0, %v901
    %v1150 = vmul.f32 %v1130, %v1146
    %v1151 = vmul.f32 %v1131, %v1147
    %v1152 = vmul.f32 %v1132, %v1148
    %v1153 = vmul.f32 %v1133, %v1149
    %v1154 = vmul.f32 %v1134, %v898
    %v1155 = vmul.f32 %v1135, %v899
    %v1156 = vmul.f32 %v1136, %v900
    %v1157 = vmul.f32 %v1137, %v901
    %v1158 = vadd.f32 %v1150, %v1154
    %v1159 = vadd.f32 %v1151, %v1155
    %v1160 = vadd.f32 %v1152, %v1156
    %v1161 = vadd.f32 %v1153, %v1157
    %v1162 = vsub.f32 1.0, %v906
    %v1163 = vsub.f32 1.0, %v907
    %v1164 = vsub.f32 1.0, %v908
    %v1165 = vsub.f32 1.0, %v909
    %v1166 = vmul.f32 %v1158, %v1162
    %v1167 = vmul.f32 %v1159, %v1163
    %v1168 = vmul.f32 %v1160, %v1164
    %v1169 = vmul.f32 %v1161, %v1165
    %v1170 = vmul.f32 %v1138, %v1146
    %v1171 = vmul.f32 %v1139, %v1147
    %v1172 = vmul.f32 %v1140, %v1148
    %v1173 = vmul.f32 %v1141, %v1149
    %v1174 = vmul.f32 %v1142, %v898
    %v1175 = vmul.f32 %v1143, %v899
    %v1176 = vmul.f32 %v1144, %v900
    %v1177 = vmul.f32 %v1145, %v901
    %v1178 = vadd.f32 %v1170, %v1174
    %v1179 = vadd.f32 %v1171, %v1175
    %v1180 = vadd.f32 %v1172, %v1176
    %v1181 = vadd.f32 %v1173, %v1177
    %v1182 = vmul.f32 %v1178, %v906
    %v1183 = vmul.f32 %v1179, %v907
    %v1184 = vmul.f32 %v1180, %v908
    %v1185 = vmul.f32 %v1181, %v909
    %v1186 = vadd.f32 %v1166, %v1182
    %v1187 = vadd.f32 %v1167, %v1183
    %v1188 = vadd.f32 %v1168, %v1184
    %v1189 = vadd.f32 %v1169, %v1185
    %vm1190 = vcmp.lt.f32.partialorder %v850, %v1186
    %vm1191 = vcmp.lt.f32.partialorder %v851, %v1187
    %vm1192 = vcmp.lt.f32.partialorder %v852, %v1188
    %vm1193 = vcmp.lt.f32.partialorder %v853, %v1189
    %v1194 = vadd.f32 %v804, %v825
    %v1195 = vadd.f32 %v805, %v825
    %v1196 = vadd.f32 %v806, %v825
    %v1197 = vadd.f32 %v807, %v825
    %v1198 = vmax.f32 %v1194, 0.0
    %v1199 = vmax.f32 %v1195, 0.0
    %v1200 = vmax.f32 %v1196, 0.0
    %v1201 = vmax.f32 %v1197, 0.0
    %v1202 = vmin.f32 %v1198, 14.999
    %v1203 = vmin.f32 %v1199, 14.999
    %v1204 = vmin.f32 %v1200, 14.999
    %v1205 = vmin.f32 %v1201, 14.999
    %v1206 = vadd.f32 %v812, %v821
    %v1207 = vadd.f32 %v813, %v822
    %v1208 = vadd.f32 %v814, %v823
    %v1209 = vadd.f32 %v815, %v824
    %v1210 = vmax.f32 %v1206, 0.0
    %v1211 = vmax.f32 %v1207, 0.0
    %v1212 = vmax.f32 %v1208, 0.0
    %v1213 = vmax.f32 %v1209, 0.0
    %v1214 = vmin.f32 %v1210, 14.999
    %v1215 = vmin.f32 %v1211, 14.999
    %v1216 = vmin.f32 %v1212, 14.999
    %v1217 = vmin.f32 %v1213, 14.999
    %v1218 = vcvt.f32.s32.to.zero.pseudo %v1202
    %v1219 = vcvt.f32.s32.to.zero.pseudo %v1203
    %v1220 = vcvt.f32.s32.to.zero.pseudo %v1204
    %v1221 = vcvt.f32.s32.to.zero.pseudo %v1205
    %v1222 = vcvt.f32.s32.to.zero.pseudo %v1214
    %v1223 = vcvt.f32.s32.to.zero.pseudo %v1215
    %v1224 = vcvt.f32.s32.to.zero.pseudo %v1216
    %v1225 = vcvt.f32.s32.to.zero.pseudo %v1217
    %v1226 = vcvt.s32.f32 %v1218
    %v1227 = vcvt.s32.f32 %v1219
    %v1228 = vcvt.s32.f32 %v1220
    %v1229 = vcvt.s32.f32 %v1221
    %v1230 = vsub.f32 %v1202, %v1226
    %v1231 = vsub.f32 %v1203, %v1227
    %v1232 = vsub.f32 %v1204, %v1228
    %v1233 = vsub.f32 %v1205, %v1229
    %v1234 = vcvt.s32.f32 %v1222
    %v1235 = vcvt.s32.f32 %v1223
    %v1236 = vcvt.s32.f32 %v1224
    %v1237 = vcvt.s32.f32 %v1225
    %v1238 = vsub.f32 %v1214, %v1234
    %v1239 = vsub.f32 %v1215, %v1235
    %v1240 = vsub.f32 %v1216, %v1236
    %v1241 = vsub.f32 %v1217, %v1237
    %v1242 = vsub.s32 %v1218, %v154
    %v1243 = vsub.s32 %v1219, %v154
    %v1244 = vsub.s32 %v1220, %v154
    %v1245 = vsub.s32 %v1221, %v154
    %v1246 = vsub.s32 %v1222, %v817
    %v1247 = vsub.s32 %v1223, %v818
    %v1248 = vsub.s32 %v1224, %v819
    %v1249 = vsub.s32 %v1225, %v820
    %vm1250 = vcmp.eq.s32.totalorder %v1246, 4294967295
    %vm1251 = vcmp.eq.s32.totalorder %v1247, 4294967295
    %vm1252 = vcmp.eq.s32.totalorder %v1248, 4294967295
    %vm1253 = vcmp.eq.s32.totalorder %v1249, 4294967295
    %v1254 = vsel %vm1250, %v830, 0.0
    %v1255 = vsel %vm1251, %v831, 0.0
    %v1256 = vsel %vm1252, %v832, 0.0
    %v1257 = vsel %vm1253, %v833, 0.0
    %v1258 = vsel %vm1250, %v834, 0.0
    %v1259 = vsel %vm1251, %v835, 0.0
    %v1260 = vsel %vm1252, %v836, 0.0
    %v1261 = vsel %vm1253, %v837, 0.0
    %vm1262 = vcmp.eq.s32.totalorder %v1246, 0
    %vm1263 = vcmp.eq.s32.totalorder %v1247, 0
    %vm1264 = vcmp.eq.s32.totalorder %v1248, 0
    %vm1265 = vcmp.eq.s32.totalorder %v1249, 0
    %v1266 = vsel %vm1262, %v834, %v1254
    %v1267 = vsel %vm1263, %v835, %v1255
    %v1268 = vsel %vm1264, %v836, %v1256
    %v1269 = vsel %vm1265, %v837, %v1257
    %v1270 = vsel %vm1262, %v838, %v1258
    %v1271 = vsel %vm1263, %v839, %v1259
    %v1272 = vsel %vm1264, %v840, %v1260
    %v1273 = vsel %vm1265, %v841, %v1261
    %vm1274 = vcmp.eq.s32.totalorder %v1246, 1
    %vm1275 = vcmp.eq.s32.totalorder %v1247, 1
    %vm1276 = vcmp.eq.s32.totalorder %v1248, 1
    %vm1277 = vcmp.eq.s32.totalorder %v1249, 1
    %v1278 = vsel %vm1274, %v838, %v1266
    %v1279 = vsel %vm1275, %v839, %v1267
    %v1280 = vsel %vm1276, %v840, %v1268
    %v1281 = vsel %vm1277, %v841, %v1269
    %v1282 = vsel %vm1274, %v842, %v1270
    %v1283 = vsel %vm1275, %v843, %v1271
    %v1284 = vsel %vm1276, %v844, %v1272
    %v1285 = vsel %vm1277, %v845, %v1273
    %1286 = vrot.lane.b32.xlu0 %v1278, 1
    %v1287 = vpop.permute.xlu0 %1286
    %1288 = vrot.lane.b32.xlu0 %v1279, 1
    %v1289 = vpop.permute.xlu0 %1288
    %1290 = vrot.lane.b32.xlu0 %v1280, 1
    %v1291 = vpop.permute.xlu0 %1290
    %1292 = vrot.lane.b32.xlu0 %v1281, 1
    %v1293 = vpop.permute.xlu0 %1292
    %1294 = vrot.lane.b32.xlu0 %v1278, 127
    %v1295 = vpop.permute.xlu0 %1294
    %1296 = vrot.lane.b32.xlu0 %v1279, 127
    %v1297 = vpop.permute.xlu0 %1296
    %1298 = vrot.lane.b32.xlu0 %v1280, 127
    %v1299 = vpop.permute.xlu0 %1298
    %1300 = vrot.lane.b32.xlu0 %v1281, 127
    %v1301 = vpop.permute.xlu0 %1300
    %1302 = vrot.lane.b32.xlu0 %v1278, 126
    %v1303 = vpop.permute.xlu0 %1302
    %1304 = vrot.lane.b32.xlu0 %v1279, 126
    %v1305 = vpop.permute.xlu0 %1304
    %1306 = vrot.lane.b32.xlu0 %v1280, 126
    %v1307 = vpop.permute.xlu0 %1306
    %1308 = vrot.lane.b32.xlu0 %v1281, 126
    %v1309 = vpop.permute.xlu0 %1308
    %1310 = vrot.lane.b32.xlu0 %v1282, 1
    %v1311 = vpop.permute.xlu0 %1310
    %1312 = vrot.lane.b32.xlu0 %v1283, 1
    %v1313 = vpop.permute.xlu0 %1312
    %1314 = vrot.lane.b32.xlu0 %v1284, 1
    %v1315 = vpop.permute.xlu0 %1314
    %1316 = vrot.lane.b32.xlu0 %v1285, 1
    %v1317 = vpop.permute.xlu0 %1316
    %1318 = vrot.lane.b32.xlu0 %v1282, 127
    %v1319 = vpop.permute.xlu0 %1318
    %1320 = vrot.lane.b32.xlu0 %v1283, 127
    %v1321 = vpop.permute.xlu0 %1320
    %1322 = vrot.lane.b32.xlu0 %v1284, 127
    %v1323 = vpop.permute.xlu0 %1322
    %1324 = vrot.lane.b32.xlu0 %v1285, 127
    %v1325 = vpop.permute.xlu0 %1324
    %1326 = vrot.lane.b32.xlu0 %v1282, 126
    %v1327 = vpop.permute.xlu0 %1326
    %1328 = vrot.lane.b32.xlu0 %v1283, 126
    %v1329 = vpop.permute.xlu0 %1328
    %1330 = vrot.lane.b32.xlu0 %v1284, 126
    %v1331 = vpop.permute.xlu0 %1330
    %1332 = vrot.lane.b32.xlu0 %v1285, 126
    %v1333 = vpop.permute.xlu0 %1332
    %vm1334 = vcmp.eq.s32.totalorder %v1242, 4294967295
    %vm1335 = vcmp.eq.s32.totalorder %v1243, 4294967295
    %vm1336 = vcmp.eq.s32.totalorder %v1244, 4294967295
    %vm1337 = vcmp.eq.s32.totalorder %v1245, 4294967295
    %v1338 = vsel %vm1334, %v1287, 0.0
    %v1339 = vsel %vm1335, %v1289, 0.0
    %v1340 = vsel %vm1336, %v1291, 0.0
    %v1341 = vsel %vm1337, %v1293, 0.0
    %v1342 = vsel %vm1334, %v1278, 0.0
    %v1343 = vsel %vm1335, %v1279, 0.0
    %v1344 = vsel %vm1336, %v1280, 0.0
    %v1345 = vsel %vm1337, %v1281, 0.0
    %v1346 = vsel %vm1334, %v1311, 0.0
    %v1347 = vsel %vm1335, %v1313, 0.0
    %v1348 = vsel %vm1336, %v1315, 0.0
    %v1349 = vsel %vm1337, %v1317, 0.0
    %v1350 = vsel %vm1334, %v1282, 0.0
    %v1351 = vsel %vm1335, %v1283, 0.0
    %v1352 = vsel %vm1336, %v1284, 0.0
    %v1353 = vsel %vm1337, %v1285, 0.0
    %vm1354 = vcmp.eq.s32.totalorder %v1242, 0
    %vm1355 = vcmp.eq.s32.totalorder %v1243, 0
    %vm1356 = vcmp.eq.s32.totalorder %v1244, 0
    %vm1357 = vcmp.eq.s32.totalorder %v1245, 0
    %v1358 = vsel %vm1354, %v1278, %v1338
    %v1359 = vsel %vm1355, %v1279, %v1339
    %v1360 = vsel %vm1356, %v1280, %v1340
    %v1361 = vsel %vm1357, %v1281, %v1341
    %v1362 = vsel %vm1354, %v1295, %v1342
    %v1363 = vsel %vm1355, %v1297, %v1343
    %v1364 = vsel %vm1356, %v1299, %v1344
    %v1365 = vsel %vm1357, %v1301, %v1345
    %v1366 = vsel %vm1354, %v1282, %v1346
    %v1367 = vsel %vm1355, %v1283, %v1347
    %v1368 = vsel %vm1356, %v1284, %v1348
    %v1369 = vsel %vm1357, %v1285, %v1349
    %v1370 = vsel %vm1354, %v1319, %v1350
    %v1371 = vsel %vm1355, %v1321, %v1351
    %v1372 = vsel %vm1356, %v1323, %v1352
    %v1373 = vsel %vm1357, %v1325, %v1353
    %vm1374 = vcmp.eq.s32.totalorder %v1242, 1
    %vm1375 = vcmp.eq.s32.totalorder %v1243, 1
    %vm1376 = vcmp.eq.s32.totalorder %v1244, 1
    %vm1377 = vcmp.eq.s32.totalorder %v1245, 1
    %v1378 = vsel %vm1374, %v1295, %v1358
    %v1379 = vsel %vm1375, %v1297, %v1359
    %v1380 = vsel %vm1376, %v1299, %v1360
    %v1381 = vsel %vm1377, %v1301, %v1361
    %v1382 = vsel %vm1374, %v1303, %v1362
    %v1383 = vsel %vm1375, %v1305, %v1363
    %v1384 = vsel %vm1376, %v1307, %v1364
    %v1385 = vsel %vm1377, %v1309, %v1365
    %v1386 = vsel %vm1374, %v1319, %v1366
    %v1387 = vsel %vm1375, %v1321, %v1367
    %v1388 = vsel %vm1376, %v1323, %v1368
    %v1389 = vsel %vm1377, %v1325, %v1369
    %v1390 = vsel %vm1374, %v1327, %v1370
    %v1391 = vsel %vm1375, %v1329, %v1371
    %v1392 = vsel %vm1376, %v1331, %v1372
    %v1393 = vsel %vm1377, %v1333, %v1373
    %v1394 = vsub.f32 1.0, %v1230
    %v1395 = vsub.f32 1.0, %v1231
    %v1396 = vsub.f32 1.0, %v1232
    %v1397 = vsub.f32 1.0, %v1233
    %v1398 = vmul.f32 %v1378, %v1394
    %v1399 = vmul.f32 %v1379, %v1395
    %v1400 = vmul.f32 %v1380, %v1396
    %v1401 = vmul.f32 %v1381, %v1397
    %v1402 = vmul.f32 %v1382, %v1230
    %v1403 = vmul.f32 %v1383, %v1231
    %v1404 = vmul.f32 %v1384, %v1232
    %v1405 = vmul.f32 %v1385, %v1233
    %v1406 = vadd.f32 %v1398, %v1402
    %v1407 = vadd.f32 %v1399, %v1403
    %v1408 = vadd.f32 %v1400, %v1404
    %v1409 = vadd.f32 %v1401, %v1405
    %v1410 = vsub.f32 1.0, %v1238
    %v1411 = vsub.f32 1.0, %v1239
    %v1412 = vsub.f32 1.0, %v1240
    %v1413 = vsub.f32 1.0, %v1241
    %v1414 = vmul.f32 %v1406, %v1410
    %v1415 = vmul.f32 %v1407, %v1411
    %v1416 = vmul.f32 %v1408, %v1412
    %v1417 = vmul.f32 %v1409, %v1413
    %v1418 = vmul.f32 %v1386, %v1394
    %v1419 = vmul.f32 %v1387, %v1395
    %v1420 = vmul.f32 %v1388, %v1396
    %v1421 = vmul.f32 %v1389, %v1397
    %v1422 = vmul.f32 %v1390, %v1230
    %v1423 = vmul.f32 %v1391, %v1231
    %v1424 = vmul.f32 %v1392, %v1232
    %v1425 = vmul.f32 %v1393, %v1233
    %v1426 = vadd.f32 %v1418, %v1422
    %v1427 = vadd.f32 %v1419, %v1423
    %v1428 = vadd.f32 %v1420, %v1424
    %v1429 = vadd.f32 %v1421, %v1425
    %v1430 = vmul.f32 %v1426, %v1238
    %v1431 = vmul.f32 %v1427, %v1239
    %v1432 = vmul.f32 %v1428, %v1240
    %v1433 = vmul.f32 %v1429, %v1241
    %v1434 = vadd.f32 %v1414, %v1430
    %v1435 = vadd.f32 %v1415, %v1431
    %v1436 = vadd.f32 %v1416, %v1432
    %v1437 = vadd.f32 %v1417, %v1433
    %vm1438 = vcmp.lt.f32.partialorder %v850, %v1434
    %vm1439 = vcmp.lt.f32.partialorder %v851, %v1435
    %vm1440 = vcmp.lt.f32.partialorder %v852, %v1436
    %vm1441 = vcmp.lt.f32.partialorder %v853, %v1437
    %vm1442 = vmor %vm1190, %vm1438
    %vm1443 = vmor %vm1191, %vm1439
    %vm1444 = vmor %vm1192, %vm1440
    %vm1445 = vmor %vm1193, %vm1441
    %v1446 = vmul.f32 %v804, -2.0
    %v1447 = vmul.f32 %v805, -2.0
    %v1448 = vmul.f32 %v806, -2.0
    %v1449 = vmul.f32 %v807, -2.0
    %v1450 = vadd.f32 %v1446, %v825
    %v1451 = vadd.f32 %v1447, %v825
    %v1452 = vadd.f32 %v1448, %v825
    %v1453 = vadd.f32 %v1449, %v825
    %v1454 = vmax.f32 %v1450, 0.0
    %v1455 = vmax.f32 %v1451, 0.0
    %v1456 = vmax.f32 %v1452, 0.0
    %v1457 = vmax.f32 %v1453, 0.0
    %v1458 = vmin.f32 %v1454, 14.999
    %v1459 = vmin.f32 %v1455, 14.999
    %v1460 = vmin.f32 %v1456, 14.999
    %v1461 = vmin.f32 %v1457, 14.999
    %v1462 = vmul.f32 %v812, -2.0
    %v1463 = vmul.f32 %v813, -2.0
    %v1464 = vmul.f32 %v814, -2.0
    %v1465 = vmul.f32 %v815, -2.0
    %v1466 = vadd.f32 %v1462, %v821
    %v1467 = vadd.f32 %v1463, %v822
    %v1468 = vadd.f32 %v1464, %v823
    %v1469 = vadd.f32 %v1465, %v824
    %v1470 = vmax.f32 %v1466, 0.0
    %v1471 = vmax.f32 %v1467, 0.0
    %v1472 = vmax.f32 %v1468, 0.0
    %v1473 = vmax.f32 %v1469, 0.0
    %v1474 = vmin.f32 %v1470, 14.999
    %v1475 = vmin.f32 %v1471, 14.999
    %v1476 = vmin.f32 %v1472, 14.999
    %v1477 = vmin.f32 %v1473, 14.999
    %v1478 = vcvt.f32.s32.to.zero.pseudo %v1458
    %v1479 = vcvt.f32.s32.to.zero.pseudo %v1459
    %v1480 = vcvt.f32.s32.to.zero.pseudo %v1460
    %v1481 = vcvt.f32.s32.to.zero.pseudo %v1461
    %v1482 = vcvt.f32.s32.to.zero.pseudo %v1474
    %v1483 = vcvt.f32.s32.to.zero.pseudo %v1475
    %v1484 = vcvt.f32.s32.to.zero.pseudo %v1476
    %v1485 = vcvt.f32.s32.to.zero.pseudo %v1477
    %v1486 = vcvt.s32.f32 %v1478
    %v1487 = vcvt.s32.f32 %v1479
    %v1488 = vcvt.s32.f32 %v1480
    %v1489 = vcvt.s32.f32 %v1481
    %v1490 = vsub.f32 %v1458, %v1486
    %v1491 = vsub.f32 %v1459, %v1487
    %v1492 = vsub.f32 %v1460, %v1488
    %v1493 = vsub.f32 %v1461, %v1489
    %v1494 = vcvt.s32.f32 %v1482
    %v1495 = vcvt.s32.f32 %v1483
    %v1496 = vcvt.s32.f32 %v1484
    %v1497 = vcvt.s32.f32 %v1485
    %v1498 = vsub.f32 %v1474, %v1494
    %v1499 = vsub.f32 %v1475, %v1495
    %v1500 = vsub.f32 %v1476, %v1496
    %v1501 = vsub.f32 %v1477, %v1497
    %v1502 = vsub.s32 %v1478, %v154
    %v1503 = vsub.s32 %v1479, %v154
    %v1504 = vsub.s32 %v1480, %v154
    %v1505 = vsub.s32 %v1481, %v154
    %v1506 = vsub.s32 %v1482, %v817
    %v1507 = vsub.s32 %v1483, %v818
    %v1508 = vsub.s32 %v1484, %v819
    %v1509 = vsub.s32 %v1485, %v820
    %vm1510 = vcmp.eq.s32.totalorder %v1506, 4294967294
    %vm1511 = vcmp.eq.s32.totalorder %v1507, 4294967294
    %vm1512 = vcmp.eq.s32.totalorder %v1508, 4294967294
    %vm1513 = vcmp.eq.s32.totalorder %v1509, 4294967294
    %v1514 = vsel %vm1510, %v826, 0.0
    %v1515 = vsel %vm1511, %v827, 0.0
    %v1516 = vsel %vm1512, %v828, 0.0
    %v1517 = vsel %vm1513, %v829, 0.0
    %v1518 = vsel %vm1510, %v830, 0.0
    %v1519 = vsel %vm1511, %v831, 0.0
    %v1520 = vsel %vm1512, %v832, 0.0
    %v1521 = vsel %vm1513, %v833, 0.0
    %vm1522 = vcmp.eq.s32.totalorder %v1506, 4294967295
    %vm1523 = vcmp.eq.s32.totalorder %v1507, 4294967295
    %vm1524 = vcmp.eq.s32.totalorder %v1508, 4294967295
    %vm1525 = vcmp.eq.s32.totalorder %v1509, 4294967295
    %v1526 = vsel %vm1522, %v830, %v1514
    %v1527 = vsel %vm1523, %v831, %v1515
    %v1528 = vsel %vm1524, %v832, %v1516
    %v1529 = vsel %vm1525, %v833, %v1517
    %v1530 = vsel %vm1522, %v834, %v1518
    %v1531 = vsel %vm1523, %v835, %v1519
    %v1532 = vsel %vm1524, %v836, %v1520
    %v1533 = vsel %vm1525, %v837, %v1521
    %vm1534 = vcmp.eq.s32.totalorder %v1506, 0
    %vm1535 = vcmp.eq.s32.totalorder %v1507, 0
    %vm1536 = vcmp.eq.s32.totalorder %v1508, 0
    %vm1537 = vcmp.eq.s32.totalorder %v1509, 0
    %v1538 = vsel %vm1534, %v834, %v1526
    %v1539 = vsel %vm1535, %v835, %v1527
    %v1540 = vsel %vm1536, %v836, %v1528
    %v1541 = vsel %vm1537, %v837, %v1529
    %v1542 = vsel %vm1534, %v838, %v1530
    %v1543 = vsel %vm1535, %v839, %v1531
    %v1544 = vsel %vm1536, %v840, %v1532
    %v1545 = vsel %vm1537, %v841, %v1533
    %1546 = vrot.lane.b32.xlu0 %v1538, 2
    %v1547 = vpop.permute.xlu0 %1546
    %1548 = vrot.lane.b32.xlu0 %v1539, 2
    %v1549 = vpop.permute.xlu0 %1548
    %1550 = vrot.lane.b32.xlu0 %v1540, 2
    %v1551 = vpop.permute.xlu0 %1550
    %1552 = vrot.lane.b32.xlu0 %v1541, 2
    %v1553 = vpop.permute.xlu0 %1552
    %1554 = vrot.lane.b32.xlu0 %v1538, 1
    %v1555 = vpop.permute.xlu0 %1554
    %1556 = vrot.lane.b32.xlu0 %v1539, 1
    %v1557 = vpop.permute.xlu0 %1556
    %1558 = vrot.lane.b32.xlu0 %v1540, 1
    %v1559 = vpop.permute.xlu0 %1558
    %1560 = vrot.lane.b32.xlu0 %v1541, 1
    %v1561 = vpop.permute.xlu0 %1560
    %1562 = vrot.lane.b32.xlu0 %v1538, 127
    %v1563 = vpop.permute.xlu0 %1562
    %1564 = vrot.lane.b32.xlu0 %v1539, 127
    %v1565 = vpop.permute.xlu0 %1564
    %1566 = vrot.lane.b32.xlu0 %v1540, 127
    %v1567 = vpop.permute.xlu0 %1566
    %1568 = vrot.lane.b32.xlu0 %v1541, 127
    %v1569 = vpop.permute.xlu0 %1568
    %1570 = vrot.lane.b32.xlu0 %v1538, 126
    %v1571 = vpop.permute.xlu0 %1570
    %1572 = vrot.lane.b32.xlu0 %v1539, 126
    %v1573 = vpop.permute.xlu0 %1572
    %1574 = vrot.lane.b32.xlu0 %v1540, 126
    %v1575 = vpop.permute.xlu0 %1574
    %1576 = vrot.lane.b32.xlu0 %v1541, 126
    %v1577 = vpop.permute.xlu0 %1576
    %1578 = vrot.lane.b32.xlu0 %v1538, 125
    %v1579 = vpop.permute.xlu0 %1578
    %1580 = vrot.lane.b32.xlu0 %v1539, 125
    %v1581 = vpop.permute.xlu0 %1580
    %1582 = vrot.lane.b32.xlu0 %v1540, 125
    %v1583 = vpop.permute.xlu0 %1582
    %1584 = vrot.lane.b32.xlu0 %v1541, 125
    %v1585 = vpop.permute.xlu0 %1584
    %1586 = vrot.lane.b32.xlu0 %v1542, 2
    %v1587 = vpop.permute.xlu0 %1586
    %1588 = vrot.lane.b32.xlu0 %v1543, 2
    %v1589 = vpop.permute.xlu0 %1588
    %1590 = vrot.lane.b32.xlu0 %v1544, 2
    %v1591 = vpop.permute.xlu0 %1590
    %1592 = vrot.lane.b32.xlu0 %v1545, 2
    %v1593 = vpop.permute.xlu0 %1592
    %1594 = vrot.lane.b32.xlu0 %v1542, 1
    %v1595 = vpop.permute.xlu0 %1594
    %1596 = vrot.lane.b32.xlu0 %v1543, 1
    %v1597 = vpop.permute.xlu0 %1596
    %1598 = vrot.lane.b32.xlu0 %v1544, 1
    %v1599 = vpop.permute.xlu0 %1598
    %1600 = vrot.lane.b32.xlu0 %v1545, 1
    %v1601 = vpop.permute.xlu0 %1600
    %1602 = vrot.lane.b32.xlu0 %v1542, 127
    %v1603 = vpop.permute.xlu0 %1602
    %1604 = vrot.lane.b32.xlu0 %v1543, 127
    %v1605 = vpop.permute.xlu0 %1604
    %1606 = vrot.lane.b32.xlu0 %v1544, 127
    %v1607 = vpop.permute.xlu0 %1606
    %1608 = vrot.lane.b32.xlu0 %v1545, 127
    %v1609 = vpop.permute.xlu0 %1608
    %1610 = vrot.lane.b32.xlu0 %v1542, 126
    %v1611 = vpop.permute.xlu0 %1610
    %1612 = vrot.lane.b32.xlu0 %v1543, 126
    %v1613 = vpop.permute.xlu0 %1612
    %1614 = vrot.lane.b32.xlu0 %v1544, 126
    %v1615 = vpop.permute.xlu0 %1614
    %1616 = vrot.lane.b32.xlu0 %v1545, 126
    %v1617 = vpop.permute.xlu0 %1616
    %1618 = vrot.lane.b32.xlu0 %v1542, 125
    %v1619 = vpop.permute.xlu0 %1618
    %1620 = vrot.lane.b32.xlu0 %v1543, 125
    %v1621 = vpop.permute.xlu0 %1620
    %1622 = vrot.lane.b32.xlu0 %v1544, 125
    %v1623 = vpop.permute.xlu0 %1622
    %1624 = vrot.lane.b32.xlu0 %v1545, 125
    %v1625 = vpop.permute.xlu0 %1624
    %vm1626 = vcmp.eq.s32.totalorder %v1502, 4294967294
    %vm1627 = vcmp.eq.s32.totalorder %v1503, 4294967294
    %vm1628 = vcmp.eq.s32.totalorder %v1504, 4294967294
    %vm1629 = vcmp.eq.s32.totalorder %v1505, 4294967294
    %v1630 = vsel %vm1626, %v1547, 0.0
    %v1631 = vsel %vm1627, %v1549, 0.0
    %v1632 = vsel %vm1628, %v1551, 0.0
    %v1633 = vsel %vm1629, %v1553, 0.0
    %v1634 = vsel %vm1626, %v1555, 0.0
    %v1635 = vsel %vm1627, %v1557, 0.0
    %v1636 = vsel %vm1628, %v1559, 0.0
    %v1637 = vsel %vm1629, %v1561, 0.0
    %v1638 = vsel %vm1626, %v1587, 0.0
    %v1639 = vsel %vm1627, %v1589, 0.0
    %v1640 = vsel %vm1628, %v1591, 0.0
    %v1641 = vsel %vm1629, %v1593, 0.0
    %v1642 = vsel %vm1626, %v1595, 0.0
    %v1643 = vsel %vm1627, %v1597, 0.0
    %v1644 = vsel %vm1628, %v1599, 0.0
    %v1645 = vsel %vm1629, %v1601, 0.0
    %vm1646 = vcmp.eq.s32.totalorder %v1502, 4294967295
    %vm1647 = vcmp.eq.s32.totalorder %v1503, 4294967295
    %vm1648 = vcmp.eq.s32.totalorder %v1504, 4294967295
    %vm1649 = vcmp.eq.s32.totalorder %v1505, 4294967295
    %v1650 = vsel %vm1646, %v1555, %v1630
    %v1651 = vsel %vm1647, %v1557, %v1631
    %v1652 = vsel %vm1648, %v1559, %v1632
    %v1653 = vsel %vm1649, %v1561, %v1633
    %v1654 = vsel %vm1646, %v1538, %v1634
    %v1655 = vsel %vm1647, %v1539, %v1635
    %v1656 = vsel %vm1648, %v1540, %v1636
    %v1657 = vsel %vm1649, %v1541, %v1637
    %v1658 = vsel %vm1646, %v1595, %v1638
    %v1659 = vsel %vm1647, %v1597, %v1639
    %v1660 = vsel %vm1648, %v1599, %v1640
    %v1661 = vsel %vm1649, %v1601, %v1641
    %v1662 = vsel %vm1646, %v1542, %v1642
    %v1663 = vsel %vm1647, %v1543, %v1643
    %v1664 = vsel %vm1648, %v1544, %v1644
    %v1665 = vsel %vm1649, %v1545, %v1645
    %vm1666 = vcmp.eq.s32.totalorder %v1502, 0
    %vm1667 = vcmp.eq.s32.totalorder %v1503, 0
    %vm1668 = vcmp.eq.s32.totalorder %v1504, 0
    %vm1669 = vcmp.eq.s32.totalorder %v1505, 0
    %v1670 = vsel %vm1666, %v1538, %v1650
    %v1671 = vsel %vm1667, %v1539, %v1651
    %v1672 = vsel %vm1668, %v1540, %v1652
    %v1673 = vsel %vm1669, %v1541, %v1653
    %v1674 = vsel %vm1666, %v1563, %v1654
    %v1675 = vsel %vm1667, %v1565, %v1655
    %v1676 = vsel %vm1668, %v1567, %v1656
    %v1677 = vsel %vm1669, %v1569, %v1657
    %v1678 = vsel %vm1666, %v1542, %v1658
    %v1679 = vsel %vm1667, %v1543, %v1659
    %v1680 = vsel %vm1668, %v1544, %v1660
    %v1681 = vsel %vm1669, %v1545, %v1661
    %v1682 = vsel %vm1666, %v1603, %v1662
    %v1683 = vsel %vm1667, %v1605, %v1663
    %v1684 = vsel %vm1668, %v1607, %v1664
    %v1685 = vsel %vm1669, %v1609, %v1665
    %vm1686 = vcmp.eq.s32.totalorder %v1502, 1
    %vm1687 = vcmp.eq.s32.totalorder %v1503, 1
    %vm1688 = vcmp.eq.s32.totalorder %v1504, 1
    %vm1689 = vcmp.eq.s32.totalorder %v1505, 1
    %v1690 = vsel %vm1686, %v1563, %v1670
    %v1691 = vsel %vm1687, %v1565, %v1671
    %v1692 = vsel %vm1688, %v1567, %v1672
    %v1693 = vsel %vm1689, %v1569, %v1673
    %v1694 = vsel %vm1686, %v1571, %v1674
    %v1695 = vsel %vm1687, %v1573, %v1675
    %v1696 = vsel %vm1688, %v1575, %v1676
    %v1697 = vsel %vm1689, %v1577, %v1677
    %v1698 = vsel %vm1686, %v1603, %v1678
    %v1699 = vsel %vm1687, %v1605, %v1679
    %v1700 = vsel %vm1688, %v1607, %v1680
    %v1701 = vsel %vm1689, %v1609, %v1681
    %v1702 = vsel %vm1686, %v1611, %v1682
    %v1703 = vsel %vm1687, %v1613, %v1683
    %v1704 = vsel %vm1688, %v1615, %v1684
    %v1705 = vsel %vm1689, %v1617, %v1685
    %vm1706 = vcmp.eq.s32.totalorder %v1502, 2
    %vm1707 = vcmp.eq.s32.totalorder %v1503, 2
    %vm1708 = vcmp.eq.s32.totalorder %v1504, 2
    %vm1709 = vcmp.eq.s32.totalorder %v1505, 2
    %v1710 = vsel %vm1706, %v1571, %v1690
    %v1711 = vsel %vm1707, %v1573, %v1691
    %v1712 = vsel %vm1708, %v1575, %v1692
    %v1713 = vsel %vm1709, %v1577, %v1693
    %v1714 = vsel %vm1706, %v1579, %v1694
    %v1715 = vsel %vm1707, %v1581, %v1695
    %v1716 = vsel %vm1708, %v1583, %v1696
    %v1717 = vsel %vm1709, %v1585, %v1697
    %v1718 = vsel %vm1706, %v1611, %v1698
    %v1719 = vsel %vm1707, %v1613, %v1699
    %v1720 = vsel %vm1708, %v1615, %v1700
    %v1721 = vsel %vm1709, %v1617, %v1701
    %v1722 = vsel %vm1706, %v1619, %v1702
    %v1723 = vsel %vm1707, %v1621, %v1703
    %v1724 = vsel %vm1708, %v1623, %v1704
    %v1725 = vsel %vm1709, %v1625, %v1705
    %v1726 = vsub.f32 1.0, %v1490
    %v1727 = vsub.f32 1.0, %v1491
    %v1728 = vsub.f32 1.0, %v1492
    %v1729 = vsub.f32 1.0, %v1493
    %v1730 = vmul.f32 %v1710, %v1726
    %v1731 = vmul.f32 %v1711, %v1727
    %v1732 = vmul.f32 %v1712, %v1728
    %v1733 = vmul.f32 %v1713, %v1729
    %v1734 = vmul.f32 %v1714, %v1490
    %v1735 = vmul.f32 %v1715, %v1491
    %v1736 = vmul.f32 %v1716, %v1492
    %v1737 = vmul.f32 %v1717, %v1493
    %v1738 = vadd.f32 %v1730, %v1734
    %v1739 = vadd.f32 %v1731, %v1735
    %v1740 = vadd.f32 %v1732, %v1736
    %v1741 = vadd.f32 %v1733, %v1737
    %v1742 = vsub.f32 1.0, %v1498
    %v1743 = vsub.f32 1.0, %v1499
    %v1744 = vsub.f32 1.0, %v1500
    %v1745 = vsub.f32 1.0, %v1501
    %v1746 = vmul.f32 %v1738, %v1742
    %v1747 = vmul.f32 %v1739, %v1743
    %v1748 = vmul.f32 %v1740, %v1744
    %v1749 = vmul.f32 %v1741, %v1745
    %v1750 = vmul.f32 %v1718, %v1726
    %v1751 = vmul.f32 %v1719, %v1727
    %v1752 = vmul.f32 %v1720, %v1728
    %v1753 = vmul.f32 %v1721, %v1729
    %v1754 = vmul.f32 %v1722, %v1490
    %v1755 = vmul.f32 %v1723, %v1491
    %v1756 = vmul.f32 %v1724, %v1492
    %v1757 = vmul.f32 %v1725, %v1493
    %v1758 = vadd.f32 %v1750, %v1754
    %v1759 = vadd.f32 %v1751, %v1755
    %v1760 = vadd.f32 %v1752, %v1756
    %v1761 = vadd.f32 %v1753, %v1757
    %v1762 = vmul.f32 %v1758, %v1498
    %v1763 = vmul.f32 %v1759, %v1499
    %v1764 = vmul.f32 %v1760, %v1500
    %v1765 = vmul.f32 %v1761, %v1501
    %v1766 = vadd.f32 %v1746, %v1762
    %v1767 = vadd.f32 %v1747, %v1763
    %v1768 = vadd.f32 %v1748, %v1764
    %v1769 = vadd.f32 %v1749, %v1765
    %vm1770 = vcmp.lt.f32.partialorder %v850, %v1766
    %vm1771 = vcmp.lt.f32.partialorder %v851, %v1767
    %vm1772 = vcmp.lt.f32.partialorder %v852, %v1768
    %vm1773 = vcmp.lt.f32.partialorder %v853, %v1769
    %vm1774 = vmor %vm1442, %vm1770
    %vm1775 = vmor %vm1443, %vm1771
    %vm1776 = vmor %vm1444, %vm1772
    %vm1777 = vmor %vm1445, %vm1773
    %v1778 = vmul.f32 %v804, -1.0
    %v1779 = vmul.f32 %v805, -1.0
    %v1780 = vmul.f32 %v806, -1.0
    %v1781 = vmul.f32 %v807, -1.0
    %v1782 = vadd.f32 %v1778, %v825
    %v1783 = vadd.f32 %v1779, %v825
    %v1784 = vadd.f32 %v1780, %v825
    %v1785 = vadd.f32 %v1781, %v825
    %v1786 = vmax.f32 %v1782, 0.0
    %v1787 = vmax.f32 %v1783, 0.0
    %v1788 = vmax.f32 %v1784, 0.0
    %v1789 = vmax.f32 %v1785, 0.0
    %v1790 = vmin.f32 %v1786, 14.999
    %v1791 = vmin.f32 %v1787, 14.999
    %v1792 = vmin.f32 %v1788, 14.999
    %v1793 = vmin.f32 %v1789, 14.999
    %v1794 = vmul.f32 %v812, -1.0
    %v1795 = vmul.f32 %v813, -1.0
    %v1796 = vmul.f32 %v814, -1.0
    %v1797 = vmul.f32 %v815, -1.0
    %v1798 = vadd.f32 %v1794, %v821
    %v1799 = vadd.f32 %v1795, %v822
    %v1800 = vadd.f32 %v1796, %v823
    %v1801 = vadd.f32 %v1797, %v824
    %v1802 = vmax.f32 %v1798, 0.0
    %v1803 = vmax.f32 %v1799, 0.0
    %v1804 = vmax.f32 %v1800, 0.0
    %v1805 = vmax.f32 %v1801, 0.0
    %v1806 = vmin.f32 %v1802, 14.999
    %v1807 = vmin.f32 %v1803, 14.999
    %v1808 = vmin.f32 %v1804, 14.999
    %v1809 = vmin.f32 %v1805, 14.999
    %v1810 = vcvt.f32.s32.to.zero.pseudo %v1790
    %v1811 = vcvt.f32.s32.to.zero.pseudo %v1791
    %v1812 = vcvt.f32.s32.to.zero.pseudo %v1792
    %v1813 = vcvt.f32.s32.to.zero.pseudo %v1793
    %v1814 = vcvt.f32.s32.to.zero.pseudo %v1806
    %v1815 = vcvt.f32.s32.to.zero.pseudo %v1807
    %v1816 = vcvt.f32.s32.to.zero.pseudo %v1808
    %v1817 = vcvt.f32.s32.to.zero.pseudo %v1809
    %v1818 = vcvt.s32.f32 %v1810
    %v1819 = vcvt.s32.f32 %v1811
    %v1820 = vcvt.s32.f32 %v1812
    %v1821 = vcvt.s32.f32 %v1813
    %v1822 = vsub.f32 %v1790, %v1818
    %v1823 = vsub.f32 %v1791, %v1819
    %v1824 = vsub.f32 %v1792, %v1820
    %v1825 = vsub.f32 %v1793, %v1821
    %v1826 = vcvt.s32.f32 %v1814
    %v1827 = vcvt.s32.f32 %v1815
    %v1828 = vcvt.s32.f32 %v1816
    %v1829 = vcvt.s32.f32 %v1817
    %v1830 = vsub.f32 %v1806, %v1826
    %v1831 = vsub.f32 %v1807, %v1827
    %v1832 = vsub.f32 %v1808, %v1828
    %v1833 = vsub.f32 %v1809, %v1829
    %v1834 = vsub.s32 %v1810, %v154
    %v1835 = vsub.s32 %v1811, %v154
    %v1836 = vsub.s32 %v1812, %v154
    %v1837 = vsub.s32 %v1813, %v154
    %v1838 = vsub.s32 %v1814, %v817
    %v1839 = vsub.s32 %v1815, %v818
    %v1840 = vsub.s32 %v1816, %v819
    %v1841 = vsub.s32 %v1817, %v820
    %vm1842 = vcmp.eq.s32.totalorder %v1838, 4294967295
    %vm1843 = vcmp.eq.s32.totalorder %v1839, 4294967295
    %vm1844 = vcmp.eq.s32.totalorder %v1840, 4294967295
    %vm1845 = vcmp.eq.s32.totalorder %v1841, 4294967295
    %v1846 = vsel %vm1842, %v830, 0.0
    %v1847 = vsel %vm1843, %v831, 0.0
    %v1848 = vsel %vm1844, %v832, 0.0
    %v1849 = vsel %vm1845, %v833, 0.0
    %v1850 = vsel %vm1842, %v834, 0.0
    %v1851 = vsel %vm1843, %v835, 0.0
    %v1852 = vsel %vm1844, %v836, 0.0
    %v1853 = vsel %vm1845, %v837, 0.0
    %vm1854 = vcmp.eq.s32.totalorder %v1838, 0
    %vm1855 = vcmp.eq.s32.totalorder %v1839, 0
    %vm1856 = vcmp.eq.s32.totalorder %v1840, 0
    %vm1857 = vcmp.eq.s32.totalorder %v1841, 0
    %v1858 = vsel %vm1854, %v834, %v1846
    %v1859 = vsel %vm1855, %v835, %v1847
    %v1860 = vsel %vm1856, %v836, %v1848
    %v1861 = vsel %vm1857, %v837, %v1849
    %v1862 = vsel %vm1854, %v838, %v1850
    %v1863 = vsel %vm1855, %v839, %v1851
    %v1864 = vsel %vm1856, %v840, %v1852
    %v1865 = vsel %vm1857, %v841, %v1853
    %1866 = vrot.lane.b32.xlu0 %v1858, 1
    %v1867 = vpop.permute.xlu0 %1866
    %1868 = vrot.lane.b32.xlu0 %v1859, 1
    %v1869 = vpop.permute.xlu0 %1868
    %1870 = vrot.lane.b32.xlu0 %v1860, 1
    %v1871 = vpop.permute.xlu0 %1870
    %1872 = vrot.lane.b32.xlu0 %v1861, 1
    %v1873 = vpop.permute.xlu0 %1872
    %1874 = vrot.lane.b32.xlu0 %v1858, 127
    %v1875 = vpop.permute.xlu0 %1874
    %1876 = vrot.lane.b32.xlu0 %v1859, 127
    %v1877 = vpop.permute.xlu0 %1876
    %1878 = vrot.lane.b32.xlu0 %v1860, 127
    %v1879 = vpop.permute.xlu0 %1878
    %1880 = vrot.lane.b32.xlu0 %v1861, 127
    %v1881 = vpop.permute.xlu0 %1880
    %1882 = vrot.lane.b32.xlu0 %v1858, 126
    %v1883 = vpop.permute.xlu0 %1882
    %1884 = vrot.lane.b32.xlu0 %v1859, 126
    %v1885 = vpop.permute.xlu0 %1884
    %1886 = vrot.lane.b32.xlu0 %v1860, 126
    %v1887 = vpop.permute.xlu0 %1886
    %1888 = vrot.lane.b32.xlu0 %v1861, 126
    %v1889 = vpop.permute.xlu0 %1888
    %1890 = vrot.lane.b32.xlu0 %v1862, 1
    %v1891 = vpop.permute.xlu0 %1890
    %1892 = vrot.lane.b32.xlu0 %v1863, 1
    %v1893 = vpop.permute.xlu0 %1892
    %1894 = vrot.lane.b32.xlu0 %v1864, 1
    %v1895 = vpop.permute.xlu0 %1894
    %1896 = vrot.lane.b32.xlu0 %v1865, 1
    %v1897 = vpop.permute.xlu0 %1896
    %1898 = vrot.lane.b32.xlu0 %v1862, 127
    %v1899 = vpop.permute.xlu0 %1898
    %1900 = vrot.lane.b32.xlu0 %v1863, 127
    %v1901 = vpop.permute.xlu0 %1900
    %1902 = vrot.lane.b32.xlu0 %v1864, 127
    %v1903 = vpop.permute.xlu0 %1902
    %1904 = vrot.lane.b32.xlu0 %v1865, 127
    %v1905 = vpop.permute.xlu0 %1904
    %1906 = vrot.lane.b32.xlu0 %v1862, 126
    %v1907 = vpop.permute.xlu0 %1906
    %1908 = vrot.lane.b32.xlu0 %v1863, 126
    %v1909 = vpop.permute.xlu0 %1908
    %1910 = vrot.lane.b32.xlu0 %v1864, 126
    %v1911 = vpop.permute.xlu0 %1910
    %1912 = vrot.lane.b32.xlu0 %v1865, 126
    %v1913 = vpop.permute.xlu0 %1912
    %vm1914 = vcmp.eq.s32.totalorder %v1834, 4294967295
    %vm1915 = vcmp.eq.s32.totalorder %v1835, 4294967295
    %vm1916 = vcmp.eq.s32.totalorder %v1836, 4294967295
    %vm1917 = vcmp.eq.s32.totalorder %v1837, 4294967295
    %v1918 = vsel %vm1914, %v1867, 0.0
    %v1919 = vsel %vm1915, %v1869, 0.0
    %v1920 = vsel %vm1916, %v1871, 0.0
    %v1921 = vsel %vm1917, %v1873, 0.0
    %v1922 = vsel %vm1914, %v1858, 0.0
    %v1923 = vsel %vm1915, %v1859, 0.0
    %v1924 = vsel %vm1916, %v1860, 0.0
    %v1925 = vsel %vm1917, %v1861, 0.0
    %v1926 = vsel %vm1914, %v1891, 0.0
    %v1927 = vsel %vm1915, %v1893, 0.0
    %v1928 = vsel %vm1916, %v1895, 0.0
    %v1929 = vsel %vm1917, %v1897, 0.0
    %v1930 = vsel %vm1914, %v1862, 0.0
    %v1931 = vsel %vm1915, %v1863, 0.0
    %v1932 = vsel %vm1916, %v1864, 0.0
    %v1933 = vsel %vm1917, %v1865, 0.0
    %vm1934 = vcmp.eq.s32.totalorder %v1834, 0
    %vm1935 = vcmp.eq.s32.totalorder %v1835, 0
    %vm1936 = vcmp.eq.s32.totalorder %v1836, 0
    %vm1937 = vcmp.eq.s32.totalorder %v1837, 0
    %v1938 = vsel %vm1934, %v1858, %v1918
    %v1939 = vsel %vm1935, %v1859, %v1919
    %v1940 = vsel %vm1936, %v1860, %v1920
    %v1941 = vsel %vm1937, %v1861, %v1921
    %v1942 = vsel %vm1934, %v1875, %v1922
    %v1943 = vsel %vm1935, %v1877, %v1923
    %v1944 = vsel %vm1936, %v1879, %v1924
    %v1945 = vsel %vm1937, %v1881, %v1925
    %v1946 = vsel %vm1934, %v1862, %v1926
    %v1947 = vsel %vm1935, %v1863, %v1927
    %v1948 = vsel %vm1936, %v1864, %v1928
    %v1949 = vsel %vm1937, %v1865, %v1929
    %v1950 = vsel %vm1934, %v1899, %v1930
    %v1951 = vsel %vm1935, %v1901, %v1931
    %v1952 = vsel %vm1936, %v1903, %v1932
    %v1953 = vsel %vm1937, %v1905, %v1933
    %vm1954 = vcmp.eq.s32.totalorder %v1834, 1
    %vm1955 = vcmp.eq.s32.totalorder %v1835, 1
    %vm1956 = vcmp.eq.s32.totalorder %v1836, 1
    %vm1957 = vcmp.eq.s32.totalorder %v1837, 1
    %v1958 = vsel %vm1954, %v1875, %v1938
    %v1959 = vsel %vm1955, %v1877, %v1939
    %v1960 = vsel %vm1956, %v1879, %v1940
    %v1961 = vsel %vm1957, %v1881, %v1941
    %v1962 = vsel %vm1954, %v1883, %v1942
    %v1963 = vsel %vm1955, %v1885, %v1943
    %v1964 = vsel %vm1956, %v1887, %v1944
    %v1965 = vsel %vm1957, %v1889, %v1945
    %v1966 = vsel %vm1954, %v1899, %v1946
    %v1967 = vsel %vm1955, %v1901, %v1947
    %v1968 = vsel %vm1956, %v1903, %v1948
    %v1969 = vsel %vm1957, %v1905, %v1949
    %v1970 = vsel %vm1954, %v1907, %v1950
    %v1971 = vsel %vm1955, %v1909, %v1951
    %v1972 = vsel %vm1956, %v1911, %v1952
    %v1973 = vsel %vm1957, %v1913, %v1953
    %v1974 = vsub.f32 1.0, %v1822
    %v1975 = vsub.f32 1.0, %v1823
    %v1976 = vsub.f32 1.0, %v1824
    %v1977 = vsub.f32 1.0, %v1825
    %v1978 = vmul.f32 %v1958, %v1974
    %v1979 = vmul.f32 %v1959, %v1975
    %v1980 = vmul.f32 %v1960, %v1976
    %v1981 = vmul.f32 %v1961, %v1977
    %v1982 = vmul.f32 %v1962, %v1822
    %v1983 = vmul.f32 %v1963, %v1823
    %v1984 = vmul.f32 %v1964, %v1824
    %v1985 = vmul.f32 %v1965, %v1825
    %v1986 = vadd.f32 %v1978, %v1982
    %v1987 = vadd.f32 %v1979, %v1983
    %v1988 = vadd.f32 %v1980, %v1984
    %v1989 = vadd.f32 %v1981, %v1985
    %v1990 = vsub.f32 1.0, %v1830
    %v1991 = vsub.f32 1.0, %v1831
    %v1992 = vsub.f32 1.0, %v1832
    %v1993 = vsub.f32 1.0, %v1833
    %v1994 = vmul.f32 %v1986, %v1990
    %v1995 = vmul.f32 %v1987, %v1991
    %v1996 = vmul.f32 %v1988, %v1992
    %v1997 = vmul.f32 %v1989, %v1993
    %v1998 = vmul.f32 %v1966, %v1974
    %v1999 = vmul.f32 %v1967, %v1975
    %v2000 = vmul.f32 %v1968, %v1976
    %v2001 = vmul.f32 %v1969, %v1977
    %v2002 = vmul.f32 %v1970, %v1822
    %v2003 = vmul.f32 %v1971, %v1823
    %v2004 = vmul.f32 %v1972, %v1824
    %v2005 = vmul.f32 %v1973, %v1825
    %v2006 = vadd.f32 %v1998, %v2002
    %v2007 = vadd.f32 %v1999, %v2003
    %v2008 = vadd.f32 %v2000, %v2004
    %v2009 = vadd.f32 %v2001, %v2005
    %v2010 = vmul.f32 %v2006, %v1830
    %v2011 = vmul.f32 %v2007, %v1831
    %v2012 = vmul.f32 %v2008, %v1832
    %v2013 = vmul.f32 %v2009, %v1833
    %v2014 = vadd.f32 %v1994, %v2010
    %v2015 = vadd.f32 %v1995, %v2011
    %v2016 = vadd.f32 %v1996, %v2012
    %v2017 = vadd.f32 %v1997, %v2013
    %vm2018 = vcmp.lt.f32.partialorder %v850, %v2014
    %vm2019 = vcmp.lt.f32.partialorder %v851, %v2015
    %vm2020 = vcmp.lt.f32.partialorder %v852, %v2016
    %vm2021 = vcmp.lt.f32.partialorder %v853, %v2017
    %vm2022 = vmor %vm1774, %vm2018
    %vm2023 = vmor %vm1775, %vm2019
    %vm2024 = vmor %vm1776, %vm2020
    %vm2025 = vmor %vm1777, %vm2021
    %v2026 = vsel %vm2022, 0.0, %v834
    %v2027 = vsel %vm2023, 0.0, %v835
    %v2028 = vsel %vm2024, 0.0, %v836
    %v2029 = vsel %vm2025, 0.0, %v837
    %2030 = vst [vmem:[#allocation6] sm:$0xff] %v2026
    %2031 = vst [vmem:[#allocation6 + $0x8] sm:$0xff] %v2027
    %2032 = vst [vmem:[#allocation6 + $0x10] sm:$0xff] %v2028
    %2033 = vst [vmem:[#allocation6 + $0x18] sm:$0xff] %v2029
    %v2034 = vsel %vm2022, 0, 1
    %v2035 = vsel %vm2023, 0, 1
    %v2036 = vsel %vm2024, 0, 1
    %v2037 = vsel %vm2025, 0, 1
    %v2038 = vpack.c.b16 %v2035, %v2034
    %v2039 = vpack.c.b16 %v2037, %v2036
    %v2040 = vpack.c.b8 %v2039, %v2038
    %2041 = vst [vmem:[#allocation8] sm:$0xff] %v2040
    // Predicated region
    $region14: #{tpu_custom_call.1} parent=1 // pred_check
      _
    $region15: #{tpu_custom_call.1} parent=1 // pred_check_branch
      %2043 = sbr.rel (0) target = $region17
    $region16: #{tpu_custom_call.1} parent=1 // pred_region
      %s2045 = ssub.s32 512, 512
      %2046 = vsyncadd [#allocation7], %s2045
      %s2047 = sshll.u32 [#allocation6], 4
      %s2048 = int_to_ptr.vmem [resolvable:$true] %s2047
      %2053 = dma.vmem_to_hbm [thread:$0]  %s2048, 512, %s1, [#allocation7], 128, 128, 8
    $region17: #{tpu_custom_call.1} parent=1 // pred_fallthru
      _
    // Predicated region
    $region18: #{tpu_custom_call.1} parent=1 // pred_check
      _
    $region19: #{tpu_custom_call.1} parent=1 // pred_check_branch
      %2055 = sbr.rel (0) target = $region21
    $region20: #{tpu_custom_call.1} parent=1 // pred_region
      %s2057 = ssub.s32 128, 128
      %2058 = vsyncadd [#allocation9], %s2057
      %s2060 = sshll.u32 [#allocation8], 4
      %s2061 = int_to_ptr.vmem [resolvable:$true] %s2060
      %2063 = dma.vmem_to_hbm [thread:$0]  %s2061, 128, %s2, [#allocation9]
    $region21: #{tpu_custom_call.1} parent=1 // pred_fallthru
      _
    // Predicated region
    $region22: #{tpu_custom_call.1} parent=1 // pred_check
      _
    $region23: #{tpu_custom_call.1} parent=1 // pred_check_branch
      %2065 = sbr.rel (0) target = $region25
    $region24: #{tpu_custom_call.1} parent=1 // pred_region
      %2066 = dma.done [#allocation7], 512
    $region25: #{tpu_custom_call.1} parent=1 // pred_fallthru
      _
    // Predicated region
    $region26: #{tpu_custom_call.1} parent=1 // pred_check
      _
    $region27: #{tpu_custom_call.1} parent=1 // pred_check_branch
      %2068 = sbr.rel (0) target = $region29
    $region28: #{tpu_custom_call.1} parent=1 // pred_region
      %2069 = dma.done [#allocation9], 128
    $region29: #{tpu_custom_call.1} parent=1 // pred_fallthru
      _
    %2070 = vsyncpa [#allocation7], 1
    %2071 = vsyncpa [#allocation9], 1
  %2072 = vsyncmov [#allocation3]
  %s2073 = vpop.sfrf %2072
  %p2074 = scmp.eq.s32.totalorder %s2073, 0
  %p2075 = pneg %p2074
  %2077 = shalt.err (%p2075)

</llo_original>
